<compile_context>
chip_gen: v7x
topology: tpu7x:2x2x1
jax: 0.10.0
libtpu: 0.0.40
codegen_flags: <defaults>
</compile_context>

<pallas_src>
import jax
import jax.numpy as jnp
from jax.experimental import pallas as pl
from jax.experimental.pallas import tpu as pltpu

LANE = 128


def _round_up(x, m):
    return ((x + m - 1) // m) * m


def _choose_tiling(n):
    """Pick the A-tile edge first (big tiles feed the MXU / amortize the
    ~0.35us per-step overhead), then pad the node count up to a multiple of it.
    Keep >=2 dst tiles so the 'parallel' axis can split across v7x's 2 TCs."""
    try:
        vmem_bytes = pltpu.get_tpu_info().vmem_capacity_bytes
    except Exception:  # conservative fallback if the query is unavailable
        vmem_bytes = 64 * 1024 * 1024
    target = 1024 if vmem_bytes >= (100 << 20) else 512   # v5e/v6e : v7x
    n_lane = _round_up(max(n, 1), LANE)
    tile = target
    while tile > 256 and _round_up(n_lane, tile) // tile < 2:
        tile //= 2
    if n_lane < tile:          # tiny graph: single tile covering everything
        tile = n_lane
    n_pad = _round_up(n_lane, tile)
    return tile, n_pad


def _vmem_limit_bytes(tile, n_pad, h_pad, c_pad, resident):
    """Actual footprint + generous headroom, capped well below v7x's 64 MiB."""
    a_buf = 2 * tile * tile                                   # int8, 2 buffers
    feat_w = max(h_pad, c_pad)
    src_buf = (2 * n_pad if resident else 2 * tile) * feat_w * 2   # bf16
    out_buf = 2 * tile * c_pad * 4                            # f32 worst case
    acc_buf = tile * h_pad * 4
    weights = h_pad * c_pad * 4 + 2 * c_pad * 4 + h_pad * 4
    est = a_buf + src_buf + out_buf + acc_buf + weights
    return int(min(max(2 * est, 16 << 20), 40 << 20))


def _src_block(src_ref, a_ref, k):
    """Per-source-tile chunk of a feature operand. Handles both layouts:
    VMEM-resident (full array in VMEM -> slice here) and streamed (block
    already is the k-th tile)."""
    tsrc = a_ref.shape[1]
    if src_ref.shape[0] == tsrc:
        return src_ref[...]
    start = pl.multiple_of(k * tsrc, tsrc)
    return src_ref[pl.ds(start, tsrc), :]


def _gcn_layer1_kernel(a_ref, xw1_ref, b1_ref, w2t_ref, z2_ref, acc_ref):
    k = pl.program_id(1)

    @pl.when(k == 0)
    def _():
        acc_ref[...] = jnp.zeros_like(acc_ref)

    # Sum over incoming edges, one source-node tile at a time:
    # acc += A[i, k] @ (X @ W1^T)[k]   (int8 A cast to bf16 is exact; f32 acc).
    a = a_ref[...].astype(jnp.bfloat16)
    acc_ref[...] += jnp.dot(a, _src_block(xw1_ref, a_ref, k),
                            preferred_element_type=jnp.float32)

    @pl.when(k == pl.num_programs(1) - 1)
    def _():
        # Bias + ReLU, then the layer-2 feature transform BEFORE the second
        # aggregation ((A@h1)@W2^T == A@(h1@W2^T)); bias b2 is added in call 2.
        h1 = jnp.maximum(acc_ref[...] + b1_ref[...], 0.0)
        z2_ref[...] = jnp.dot(h1, w2t_ref[...],
                              preferred_element_type=jnp.float32
                              ).astype(z2_ref.dtype)


def _gcn_layer2_kernel(a_ref, z2_ref, b2_ref, o_ref):
    k = pl.program_id(1)

    @pl.when(k == 0)
    def _():
        # Fold b2 into the accumulator init (saves a full RMW pass at the end).
        o_ref[...] = jnp.broadcast_to(b2_ref[...], o_ref.shape)

    # out[i] += A[i, k] @ z2[k]   (resident f32 output block).
    a = a_ref[...].astype(jnp.bfloat16)
    o_ref[...] += jnp.dot(a, _src_block(z2_ref, a_ref, k),
                          preferred_element_type=jnp.float32)


@jax.jit
def gcn_forward(adj, x, w1, b1, w2, b2):
    """adj: (N, N) with adj[dst, src] = 1 per edge. x: (N, in_feats).
    w1: (hidden, in_feats), b1: (hidden,), w2: (C, hidden), b2: (C,).
    Returns (N, C) float32 — same math as the PyTorch GCN forward."""
    n, _ = x.shape
    hidden = w1.shape[0]
    num_classes = w2.shape[0]

    tile, n_pad = _choose_tiling(n)
    h_pad = _round_up(hidden, LANE)
    c_pad = _round_up(num_classes, LANE)

    # --- glue (under jit, fuses with the pallas calls) ----------------------
    # A at 1 byte/element; cast BEFORE padding (no n_pad^2 f32 intermediate).
    a_i8 = jnp.pad(jnp.asarray(adj).astype(jnp.int8),
                   ((0, n_pad - n), (0, n_pad - n)))

    # Reassociated layer-1 feature transform (tiny matmul, left to XLA).
    xw1 = jnp.dot(jnp.asarray(x, jnp.float32), jnp.asarray(w1, jnp.float32).T,
                  precision=jax.lax.Precision.HIGHEST)
    xw1 = jnp.pad(xw1, ((0, n_pad - n), (0, h_pad - hidden))).astype(jnp.bfloat16)

    b1p = jnp.pad(jnp.asarray(b1, jnp.float32),
                  (0, h_pad - hidden)).reshape(1, h_pad)
    w2t = jnp.pad(jnp.asarray(w2, jnp.float32).T,
                  ((0, h_pad - hidden), (0, c_pad - num_classes)))   # (Hp, Cp)
    b2p = jnp.pad(jnp.asarray(b2, jnp.float32),
                  (0, c_pad - num_classes)).reshape(1, c_pad)

    n_tiles = n_pad // tile
    grid = (n_tiles, n_tiles)

    # Keep the narrow feature operands VMEM-resident when they fit, so only A
    # is streamed from HBM per grid step.
    resident = (2 * 2 * n_pad * max(h_pad, c_pad)) <= (12 << 20)

    cparams = pltpu.CompilerParams(
        dimension_semantics=("parallel", "arbitrary"),
        vmem_limit_bytes=_vmem_limit_bytes(tile, n_pad, h_pad, c_pad, resident),
    )

    a_kwargs = {}
    if tile <= 256:
        # Small tiles: deepen A buffering to hide per-block DMA startup.
        a_kwargs["pipeline_mode"] = pl.Buffered(3)
    a_spec = pl.BlockSpec((tile, tile), lambda i, k: (i, k), **a_kwargs)

    if resident:
        xw1_spec = pl.BlockSpec((n_pad, h_pad), lambda i, k: (0, 0))
        z2_spec = pl.BlockSpec((n_pad, c_pad), lambda i, k: (0, 0))
    else:
        xw1_spec = pl.BlockSpec((tile, h_pad), lambda i, k: (k, 0))
        z2_spec = pl.BlockSpec((tile, c_pad), lambda i, k: (k, 0))

    # --- call 1: z2 = relu(A @ (X@W1^T) + b1) @ W2^T  (no bias) -------------
    z2 = pl.pallas_call(
        _gcn_layer1_kernel,
        out_shape=jax.ShapeDtypeStruct((n_pad, c_pad), jnp.bfloat16),
        grid_spec=pltpu.PrefetchScalarGridSpec(
            num_scalar_prefetch=0,
            grid=grid,
            in_specs=[
                a_spec,                                          # A (int8)
                xw1_spec,                                        # X@W1^T (bf16)
                pl.BlockSpec((1, h_pad), lambda i, k: (0, 0)),   # b1
                pl.BlockSpec((h_pad, c_pad), lambda i, k: (0, 0)),  # W2^T
            ],
            out_specs=pl.BlockSpec((tile, c_pad), lambda i, k: (i, 0)),
            scratch_shapes=[pltpu.VMEM((tile, h_pad), jnp.float32)],
        ),
        compiler_params=cparams,
    )(a_i8, xw1, b1p, w2t)

    # --- call 2: out = A @ z2 + b2 -------------------------------------------
    out = pl.pallas_call(
        _gcn_layer2_kernel,
        out_shape=jax.ShapeDtypeStruct((n_pad, c_pad), jnp.float32),
        grid_spec=pltpu.PrefetchScalarGridSpec(
            num_scalar_prefetch=0,
            grid=grid,
            in_specs=[
                a_spec,                                          # A (int8)
                z2_spec,                                         # z2 (bf16)
                pl.BlockSpec((1, c_pad), lambda i, k: (0, 0)),   # b2
            ],
            out_specs=pl.BlockSpec((tile, c_pad), lambda i, k: (i, 0)),
        ),
        compiler_params=cparams,
    )(a_i8, z2, b2p)

    return out[:n, :num_classes]


def _init_linear(key, out_feats, in_feats):
    # Deterministic init mimicking nn.Linear: U(-1/sqrt(in), 1/sqrt(in))
    kw, kb = jax.random.split(key)
    bound = 1.0 / jnp.sqrt(jnp.float32(in_feats))
    w = jax.random.uniform(kw, (out_feats, in_feats), jnp.float32, -bound, bound)
    b = jax.random.uniform(kb, (out_feats,), jnp.float32, -bound, bound)
    return w, b


if __name__ == "__main__":
    key = jax.random.PRNGKey(0)
    k_x, k_l1, k_l2 = jax.random.split(key, 3)

    # Small but non-trivial: 600 nodes (pads to 1024 -> 2x2 grid at tile=512,
    # exercising the k-accumulation, padding and megacore-split paths),
    # 50 input feats (PPI-like), 32 hidden, 16 classes.
    num_nodes, in_feats, hidden_size, num_classes = 600, 50, 32, 16

    # Graph: ring (each node receives from its predecessor) + self loops, so
    # every node has incoming edges (matches DGL recv-on-all-nodes usage).
    src = jnp.arange(num_nodes)
    dst = (src + 1) % num_nodes
    adj = jnp.zeros((num_nodes, num_nodes), jnp.float32)
    adj = adj.at[dst, src].set(1.0)        # edges src -> dst
    adj = adj.at[src, src].set(1.0)        # self loops

    x = jax.random.normal(k_x, (num_nodes, in_feats), jnp.float32)
    w1, b1 = _init_linear(k_l1, hidden_size, in_feats)
    w2, b2 = _init_linear(k_l2, num_classes, hidden_size)

    out = jax.block_until_ready(gcn_forward(adj, x, w1, b1, w2, b2))

    # Pure-JAX f32 reference (same semantics as the PyTorch module). The
    # kernel feeds the aggregation matmuls bf16 operands (A is exact, features
    # are rounded), so compare at bf16-level tolerance.
    hi = jax.lax.Precision.HIGHEST
    h_ref = jnp.maximum(
        jnp.dot(jnp.dot(adj, x, precision=hi), w1.T, precision=hi) + b1, 0.0)
    ref = jnp.dot(jnp.dot(adj, h_ref, precision=hi), w2.T, precision=hi) + b2

    assert out.shape == (num_nodes, num_classes)
    assert bool(jnp.allclose(out, ref, atol=2e-2, rtol=2e-2)), float(
        jnp.max(jnp.abs(out - ref)))

    print("KERNEL_OK")
</pallas_src>

<mosaic_0001>
module attributes {stable_mosaic.version = 11 : i64} {
  func.func @_gcn_layer1_kernel(%arg0: i32, %arg1: i32, %arg2: memref<512x512xi8, #tpu.memory_space<vmem>>, %arg3: memref<1024x128xbf16, #tpu.memory_space<vmem>>, %arg4: memref<1x128xf32, #tpu.memory_space<vmem>>, %arg5: memref<128x128xf32, #tpu.memory_space<vmem>>, %arg6: memref<512x128xbf16, #tpu.memory_space<vmem>>, %arg7: memref<512x128xf32, #tpu.memory_space<vmem>>) attributes {dimension_semantics = [#tpu.dimension_semantics<parallel>, #tpu.dimension_semantics<arbitrary>], iteration_bounds = array<i64: 2, 2>, scalar_prefetch = 0 : i64, scratch_operands = 1 : i64, tpu.core_type = #tpu.core_type<tc>, window_params = [{transform_indices = @transform_0, window_bounds = array<i64: 512, 512>}, {pipeline_mode = #tpu.pipeline_mode<synchronous>, transform_indices = @transform_1, window_bounds = array<i64: 1024, 128>}, {pipeline_mode = #tpu.pipeline_mode<synchronous>, transform_indices = @transform_2, window_bounds = array<i64: 1, 128>}, {pipeline_mode = #tpu.pipeline_mode<synchronous>, transform_indices = @transform_3, window_bounds = array<i64: 128, 128>}, {transform_indices = @transform_4, window_bounds = array<i64: 512, 128>}]} {
    %c0_i32 = arith.constant 0 : i32
    %0 = arith.cmpi eq, %arg1, %c0_i32 : i32
    %1 = arith.extui %0 : i1 to i32
    %c0_i32_0 = arith.constant 0 : i32
    %2 = arith.cmpi ne, %1, %c0_i32_0 : i32
    scf.if %2 {
      %cst_8 = arith.constant 0.000000e+00 : f32
      %16 = vector.broadcast %cst_8 : f32 to vector<512x128xf32>
      %c0_9 = arith.constant 0 : index
      %c0_10 = arith.constant 0 : index
      %17 = vector.load %arg7[%c0_9, %c0_10] : memref<512x128xf32, #tpu.memory_space<vmem>>, vector<512x128xf32>
      tpu.vector_store %arg7[%c0_9, %c0_10], %16 {strides = array<i32>} : memref<512x128xf32, #tpu.memory_space<vmem>>, vector<512x128xf32>,
    } else {
    }
    %c0 = arith.constant 0 : index
    %c0_1 = arith.constant 0 : index
    %3 = vector.load %arg2[%c0, %c0_1] : memref<512x512xi8, #tpu.memory_space<vmem>>, vector<512x512xi8>
    %4 = arith.sitofp %3 : vector<512x512xi8> to vector<512x512xbf16>
    %c0_2 = arith.constant 0 : index
    %c0_3 = arith.constant 0 : index
    %5 = vector.load %arg7[%c0_2, %c0_3] : memref<512x128xf32, #tpu.memory_space<vmem>>, vector<512x128xf32>
    %c512_i32 = arith.constant 512 : i32
    %6 = arith.muli %arg1, %c512_i32 : i32
    %7 = tpu.assume_multiple %6, 512 : i32
    %8 = arith.index_cast %7 : i32 to index
    %c0_4 = arith.constant 0 : index
    %9 = vector.load %arg3[%8, %c0_4] : memref<1024x128xbf16, #tpu.memory_space<vmem>>, vector<512x128xbf16>
    %cst = arith.constant dense<0.000000e+00> : vector<512x128xf32>
    %10 = tpu.matmul %4, %9, %cst {dimension_numbers = #tpu.dot_dimension_numbers<[1], [0], [0], [1], [0, 0, 1, 1], [], []>} : vector<512x512xbf16>, vector<512x128xbf16>, vector<512x128xf32> -> vector<512x128xf32>
    %11 = arith.addf %5, %10 : vector<512x128xf32>
    %c0_5 = arith.constant 0 : index
    %c0_6 = arith.constant 0 : index
    %12 = vector.load %arg7[%c0_5, %c0_6] : memref<512x128xf32, #tpu.memory_space<vmem>>, vector<512x128xf32>
    tpu.vector_store %arg7[%c0_5, %c0_6], %11 {strides = array<i32>} : memref<512x128xf32, #tpu.memory_space<vmem>>, vector<512x128xf32>,
    %c1_i32 = arith.constant 1 : i32
    %13 = arith.cmpi eq, %arg1, %c1_i32 : i32
    %14 = arith.extui %13 : i1 to i32
    %c0_i32_7 = arith.constant 0 : i32
    %15 = arith.cmpi ne, %14, %c0_i32_7 : i32
    scf.if %15 {
      %c0_8 = arith.constant 0 : index
      %c0_9 = arith.constant 0 : index
      %16 = vector.load %arg7[%c0_8, %c0_9] : memref<512x128xf32, #tpu.memory_space<vmem>>, vector<512x128xf32>
      %c0_10 = arith.constant 0 : index
      %c0_11 = arith.constant 0 : index
      %17 = vector.load %arg4[%c0_10, %c0_11] : memref<1x128xf32, #tpu.memory_space<vmem>>, vector<1x128xf32>
      %18 = vector.broadcast %17 : vector<1x128xf32> to vector<512x128xf32>
      %19 = arith.addf %16, %18 : vector<512x128xf32>
      %cst_12 = arith.constant 0.000000e+00 : f32
      %20 = vector.broadcast %cst_12 : f32 to vector<512x128xf32>
      %21 = arith.maximumf %19, %20 : vector<512x128xf32>
      %c0_13 = arith.constant 0 : index
      %c0_14 = arith.constant 0 : index
      %22 = vector.load %arg5[%c0_13, %c0_14] : memref<128x128xf32, #tpu.memory_space<vmem>>, vector<128x128xf32>
      %cst_15 = arith.constant dense<0.000000e+00> : vector<512x128xf32>
      %23 = tpu.matmul %21, %22, %cst_15 {dimension_numbers = #tpu.dot_dimension_numbers<[1], [0], [0], [1], [0, 0, 1, 1], [], []>} : vector<512x128xf32>, vector<128x128xf32>, vector<512x128xf32> -> vector<512x128xf32>
      %24 = arith.truncf %23 : vector<512x128xf32> to vector<512x128xbf16>
      %c0_16 = arith.constant 0 : index
      %c0_17 = arith.constant 0 : index
      %25 = vector.load %arg6[%c0_16, %c0_17] : memref<512x128xbf16, #tpu.memory_space<vmem>>, vector<512x128xbf16>
      tpu.vector_store %arg6[%c0_16, %c0_17], %24 {strides = array<i32>} : memref<512x128xbf16, #tpu.memory_space<vmem>>, vector<512x128xbf16>,
    } else {
    }
    return
  }
  func.func @transform_0(%arg0: i32, %arg1: i32) -> (i32, i32) {
    %c0_i32 = arith.constant 0 : i32
    return %arg0, %arg1 : i32, i32
  }
  func.func @transform_1(%arg0: i32, %arg1: i32) -> (i32, i32) {
    %c0_i32 = arith.constant 0 : i32
    %c0_i32_0 = arith.constant 0 : i32
    %c0_i32_1 = arith.constant 0 : i32
    return %c0_i32, %c0_i32_0 : i32, i32
  }
  func.func @transform_2(%arg0: i32, %arg1: i32) -> (i32, i32) {
    %c0_i32 = arith.constant 0 : i32
    %c0_i32_0 = arith.constant 0 : i32
    %c0_i32_1 = arith.constant 0 : i32
    return %c0_i32, %c0_i32_0 : i32, i32
  }
  func.func @transform_3(%arg0: i32, %arg1: i32) -> (i32, i32) {
    %c0_i32 = arith.constant 0 : i32
    %c0_i32_0 = arith.constant 0 : i32
    %c0_i32_1 = arith.constant 0 : i32
    return %c0_i32, %c0_i32_0 : i32, i32
  }
  func.func @transform_4(%arg0: i32, %arg1: i32) -> (i32, i32) {
    %c0_i32 = arith.constant 0 : i32
    %c0_i32_0 = arith.constant 0 : i32
    return %arg0, %c0_i32 : i32, i32
  }
}

module attributes {stable_mosaic.version = 11 : i64} {
  func.func @_gcn_layer2_kernel(%arg0: i32, %arg1: i32, %arg2: memref<512x512xi8, #tpu.memory_space<vmem>>, %arg3: memref<1024x128xbf16, #tpu.memory_space<vmem>>, %arg4: memref<1x128xf32, #tpu.memory_space<vmem>>, %arg5: memref<512x128xf32, #tpu.memory_space<vmem>>) attributes {dimension_semantics = [#tpu.dimension_semantics<parallel>, #tpu.dimension_semantics<arbitrary>], iteration_bounds = array<i64: 2, 2>, scalar_prefetch = 0 : i64, scratch_operands = 0 : i64, tpu.core_type = #tpu.core_type<tc>, window_params = [{transform_indices = @transform_0, window_bounds = array<i64: 512, 512>}, {pipeline_mode = #tpu.pipeline_mode<synchronous>, transform_indices = @transform_1, window_bounds = array<i64: 1024, 128>}, {pipeline_mode = #tpu.pipeline_mode<synchronous>, transform_indices = @transform_2, window_bounds = array<i64: 1, 128>}, {transform_indices = @transform_3, window_bounds = array<i64: 512, 128>}]} {
    %c0_i32 = arith.constant 0 : i32
    %0 = arith.cmpi eq, %arg1, %c0_i32 : i32
    %1 = arith.extui %0 : i1 to i32
    %c0_i32_0 = arith.constant 0 : i32
    %2 = arith.cmpi ne, %1, %c0_i32_0 : i32
    scf.if %2 {
      %c0_7 = arith.constant 0 : index
      %c0_8 = arith.constant 0 : index
      %13 = vector.load %arg4[%c0_7, %c0_8] : memref<1x128xf32, #tpu.memory_space<vmem>>, vector<1x128xf32>
      %14 = vector.shape_cast %13 : vector<1x128xf32> to vector<1x128xf32>
      %15 = vector.broadcast %14 : vector<1x128xf32> to vector<512x128xf32>
      %c0_9 = arith.constant 0 : index
      %c0_10 = arith.constant 0 : index
      %16 = vector.load %arg5[%c0_9, %c0_10] : memref<512x128xf32, #tpu.memory_space<vmem>>, vector<512x128xf32>
      tpu.vector_store %arg5[%c0_9, %c0_10], %15 {strides = array<i32>} : memref<512x128xf32, #tpu.memory_space<vmem>>, vector<512x128xf32>,
    } else {
    }
    %c0 = arith.constant 0 : index
    %c0_1 = arith.constant 0 : index
    %3 = vector.load %arg2[%c0, %c0_1] : memref<512x512xi8, #tpu.memory_space<vmem>>, vector<512x512xi8>
    %4 = arith.sitofp %3 : vector<512x512xi8> to vector<512x512xbf16>
    %c0_2 = arith.constant 0 : index
    %c0_3 = arith.constant 0 : index
    %5 = vector.load %arg5[%c0_2, %c0_3] : memref<512x128xf32, #tpu.memory_space<vmem>>, vector<512x128xf32>
    %c512_i32 = arith.constant 512 : i32
    %6 = arith.muli %arg1, %c512_i32 : i32
    %7 = tpu.assume_multiple %6, 512 : i32
    %8 = arith.index_cast %7 : i32 to index
    %c0_4 = arith.constant 0 : index
    %9 = vector.load %arg3[%8, %c0_4] : memref<1024x128xbf16, #tpu.memory_space<vmem>>, vector<512x128xbf16>
    %cst = arith.constant dense<0.000000e+00> : vector<512x128xf32>
    %10 = tpu.matmul %4, %9, %cst {dimension_numbers = #tpu.dot_dimension_numbers<[1], [0], [0], [1], [0, 0, 1, 1], [], []>} : vector<512x512xbf16>, vector<512x128xbf16>, vector<512x128xf32> -> vector<512x128xf32>
    %11 = arith.addf %5, %10 : vector<512x128xf32>
    %c0_5 = arith.constant 0 : index
    %c0_6 = arith.constant 0 : index
    %12 = vector.load %arg5[%c0_5, %c0_6] : memref<512x128xf32, #tpu.memory_space<vmem>>, vector<512x128xf32>
    tpu.vector_store %arg5[%c0_5, %c0_6], %11 {strides = array<i32>} : memref<512x128xf32, #tpu.memory_space<vmem>>, vector<512x128xf32>,
    return
  }
  func.func @transform_0(%arg0: i32, %arg1: i32) -> (i32, i32) {
    %c0_i32 = arith.constant 0 : i32
    return %arg0, %arg1 : i32, i32
  }
  func.func @transform_1(%arg0: i32, %arg1: i32) -> (i32, i32) {
    %c0_i32 = arith.constant 0 : i32
    %c0_i32_0 = arith.constant 0 : i32
    %c0_i32_1 = arith.constant 0 : i32
    return %c0_i32, %c0_i32_0 : i32, i32
  }
  func.func @transform_2(%arg0: i32, %arg1: i32) -> (i32, i32) {
    %c0_i32 = arith.constant 0 : i32
    %c0_i32_0 = arith.constant 0 : i32
    %c0_i32_1 = arith.constant 0 : i32
    return %c0_i32, %c0_i32_0 : i32, i32
  }
  func.func @transform_3(%arg0: i32, %arg1: i32) -> (i32, i32) {
    %c0_i32 = arith.constant 0 : i32
    %c0_i32_0 = arith.constant 0 : i32
    return %arg0, %c0_i32 : i32, i32
  }
}

</mosaic_0001>

<llo_original>
// kernel: gcn_forward.3
$region0: #{gcn_forward.3}
  #allocation0 [shape = 'u32[]', space=smem, size = 0x4, offset = 0x4, fixed_abs, tag = 'smem constant byte address 0x4 - core index']
  #allocation1 [shape = 'u32[144,128]{1,0:T(1,128)}', space=vmem, size = 0x12000, scoped, tag = 'internal scratch']
  %s0 = inlined_call_operand.vmem [shape: s8[1024,1024], index: 0, kind: input, shape index: {}]
  %s1 = inlined_call_operand.vmem [shape: bf16[1024,128], index: 1, kind: input, shape index: {}]
  %s2 = inlined_call_operand.vmem [shape: f32[1,128], index: 2, kind: input, shape index: {}]
  %s3 = inlined_call_operand.vmem [shape: f32[1024,128], index: 3, kind: output, shape index: {}]
  %s4 = sld [smem:[#allocation0]]
  $region72: #{gcn_forward.3} parent=0
    _
  %s6 = ssub.s32 1, %s4
  %s7 = scalar_select 0, %s6, %s4
  $region1: #{gcn_forward.3} parent=0
    #allocation2 [shape = 'u8[524288]{0}', space=vmem, size = 0x80000, scoped, tag = 'input window, operand 0']
    loop: start=0, step=1, limit=6
    $region2: #{gcn_forward.3} parent=1 // loop_pre_header
      _
    $region3: #{gcn_forward.3} parent=1 // loop_header
      %s9 = sphi 0, %s13
      %p10 = scmp.ge.s32.totalorder %s9, 6
      %s16 = sphi 0, %s28
      %s17 = sphi 0, %s24
      %s18 = sphi 0, %s16
      %s19 = sphi 0, %s17
      %s20 = sphi 0, %s18
      %s21 = sphi 0, %s19
      %s33 = sphi 0, %s35
      %s36 = sphi 0, %s33
      %s37 = sphi 0, %s36
      %s53 = sphi 0, %s37
      %s57 = sphi 0, %s57
      %s59 = sphi 0, %s57
      %s60 = sphi 0, %s59
      %s74 = sphi 0, %s60
      %s78 = sphi 0, %s78
      %s80 = sphi 0, %s78
      %s81 = sphi 0, %s80
      %s95 = sphi 0, %s81
      %s101 = sphi 0, %s103
      %s104 = sphi 0, %s101
      %s105 = sphi 0, %s104
      %s121 = sphi 0, %s105
    $region4: #{gcn_forward.3} parent=1 // loop_header_branch
      %12 = sbr.rel (%p10) target = $region8
    $region5: #{gcn_forward.3} parent=1 // loop_body
      %s14 = ssub.s32 %s9, 1
      %s15 = ssub.s32 %s9, 2
      %s22 = sadd.s32 1, %s17
      %p23 = scmp.ge.s32.totalorder %s22, 2
      %s24 = scalar_select %p23, 0, %s22
      %s25 = sadd.s32 1, %s16
      %s26 = scalar_select %p23, %s25, %s16
      %p27 = scmp.ge.s32.totalorder %s26, 2
      %s28 = scalar_select %p27, 0, %s26
      %s29 = ssub.s32 %s16, %s28
      %s30 = ssub.s32 %s17, %s24
      %s31 = sor.u32 %s29, %s30
      %p32 = scmp.eq.s32.totalorder %s31, 0
      %s34 = sadd.s32 %s33, 1
      %s35 = scalar_select %p32, %s33, %s34
      %p38 = pneg %p32
      %p39 = scmp.eq.s32.totalorder %s9, 3
      %p40 = por %p38, %p39
      %p41 = scmp.ne.s32.totalorder %s33, %s36
      %p42 = scmp.eq.s32.totalorder %s9, 0
      %p43 = por %p41, %p42
      %p44 = scmp.ne.s32.totalorder %s33, %s36
      %p45 = scmp.eq.s32.totalorder %s14, 3
      %p46 = por %p44, %p45
      %p47 = scmp.ne.s32.totalorder %s36, %s37
      %p48 = scmp.eq.s32.totalorder %s14, 0
      %p49 = por %p47, %p48
      %p50 = scmp.ne.s32.totalorder %s36, %s37
      %p51 = scmp.eq.s32.totalorder %s15, 3
      %p52 = por %p50, %p51
      %p54 = scmp.ne.s32.totalorder %s37, %s53
      %p55 = scmp.eq.s32.totalorder %s15, 0
      %p56 = por %p54, %p55
      %s58 = sadd.s32 %s57, 1
      %p61 = scmp.eq.s32.totalorder %s9, 3
      %p62 = scmp.ne.s32.totalorder %s57, %s59
      %p63 = scmp.eq.s32.totalorder %s9, 0
      %p64 = por %p62, %p63
      %p65 = scmp.ne.s32.totalorder %s57, %s59
      %p66 = scmp.eq.s32.totalorder %s14, 3
      %p67 = por %p65, %p66
      %p68 = scmp.ne.s32.totalorder %s59, %s60
      %p69 = scmp.eq.s32.totalorder %s14, 0
      %p70 = por %p68, %p69
      %p71 = scmp.ne.s32.totalorder %s59, %s60
      %p72 = scmp.eq.s32.totalorder %s15, 3
      %p73 = por %p71, %p72
      %p75 = scmp.ne.s32.totalorder %s60, %s74
      %p76 = scmp.eq.s32.totalorder %s15, 0
      %p77 = por %p75, %p76
      %s79 = sadd.s32 %s78, 1
      %p82 = scmp.eq.s32.totalorder %s9, 3
      %p83 = scmp.ne.s32.totalorder %s78, %s80
      %p84 = scmp.eq.s32.totalorder %s9, 0
      %p85 = por %p83, %p84
      %p86 = scmp.ne.s32.totalorder %s78, %s80
      %p87 = scmp.eq.s32.totalorder %s14, 3
      %p88 = por %p86, %p87
      %p89 = scmp.ne.s32.totalorder %s80, %s81
      %p90 = scmp.eq.s32.totalorder %s14, 0
      %p91 = por %p89, %p90
      %p92 = scmp.ne.s32.totalorder %s80, %s81
      %p93 = scmp.eq.s32.totalorder %s15, 3
      %p94 = por %p92, %p93
      %p96 = scmp.ne.s32.totalorder %s81, %s95
      %p97 = scmp.eq.s32.totalorder %s15, 0
      %p98 = por %p96, %p97
      %s99 = ssub.s32 %s16, %s28
      %p100 = scmp.eq.s32.totalorder %s99, 0
      %s102 = sadd.s32 %s101, 1
      %s103 = scalar_select %p100, %s101, %s102
      %p106 = pneg %p100
      %p107 = scmp.eq.s32.totalorder %s9, 3
      %p108 = por %p106, %p107
      %p109 = scmp.ne.s32.totalorder %s101, %s104
      %p110 = scmp.eq.s32.totalorder %s9, 0
      %p111 = por %p109, %p110
      %p112 = scmp.ne.s32.totalorder %s101, %s104
      %p113 = scmp.eq.s32.totalorder %s14, 3
      %p114 = por %p112, %p113
      %p115 = scmp.ne.s32.totalorder %s104, %s105
      %p116 = scmp.eq.s32.totalorder %s14, 0
      %p117 = por %p115, %p116
      %p118 = scmp.ne.s32.totalorder %s104, %s105
      %p119 = scmp.eq.s32.totalorder %s15, 3
      %p120 = por %p118, %p119
      %p122 = scmp.ne.s32.totalorder %s105, %s121
      %p123 = scmp.eq.s32.totalorder %s15, 0
      %p124 = por %p122, %p123
      %p125 = scmp.le.s32.totalorder 1, %s9
      %p126 = scmp.lt.s32.totalorder %s9, 5
      %p127 = pnand %p125, %p126
      %p128 = pneg %p127
      // Predicated region
      $region9: #{gcn_forward.3} parent=5 // pred_check
        _
      $region10: #{gcn_forward.3} parent=5 // pred_check_branch
        %130 = sbr.rel (%p127) target = $region12
      $region11: #{gcn_forward.3} parent=5 // pred_region
        %s131 = ssub.s32 %s9, 1
        // Predicated region
        $region13: #{gcn_forward.3} parent=11 // pred_check
          %p132 = pneg %p70
        $region14: #{gcn_forward.3} parent=11 // pred_check_branch
          %134 = sbr.rel (%p132) target = $region16
        $region15: #{gcn_forward.3} parent=11 // pred_region
          _
        $region16: #{gcn_forward.3} parent=11 // pred_fallthru
          _
        // Predicated region
        $region17: #{gcn_forward.3} parent=11 // pred_check
          %p135 = pneg %p91
        $region18: #{gcn_forward.3} parent=11 // pred_check_branch
          %137 = sbr.rel (%p135) target = $region20
        $region19: #{gcn_forward.3} parent=11 // pred_region
          _
        $region20: #{gcn_forward.3} parent=11 // pred_fallthru
          _
      $region12: #{gcn_forward.3} parent=5 // pred_fallthru
        _
      %p138 = scmp.lt.s32.totalorder %s9, 4
      // Predicated region
      $region21: #{gcn_forward.3} parent=5 // pred_check
        %p139 = pneg %p138
      $region22: #{gcn_forward.3} parent=5 // pred_check_branch
        %141 = sbr.rel (%p139) target = $region24
      $region23: #{gcn_forward.3} parent=5 // pred_region
        // Predicated region
        $region25: #{gcn_forward.3} parent=23 // pred_check
          %p142 = pneg %p43
        $region26: #{gcn_forward.3} parent=23 // pred_check_branch
          %144 = sbr.rel (%p142) target = $region28
        $region27: #{gcn_forward.3} parent=23 // pred_region
          %s145 = sand.u32 %s33, 1
          %s146 = sand.u32 %s33, 1
          %s147 = smul.addr %s146, 512
          %s148 = scalar_lea.vmem [#allocation2], %s147
          %s149 = smul.u32 16, %s16
          %s150 = smul.u32 4, %s17
          %s151 = smul.addr %s149, 8
          %s152 = sadd.s32 %s150, %s151
          %s153 = smul.addr %s152, 8
          %s154 = scalar_lea.vmem %s0, %s153
          // Predicated region
          $region29: #{gcn_forward.3} parent=27 // pred_check
            _
          $region30: #{gcn_forward.3} parent=27 // pred_check_branch
            %156 = sbr.rel (0) target = $region32
          $region31: #{gcn_forward.3} parent=27 // pred_region
            // Predicated region
            $region33: #{gcn_forward.3} parent=31 // pred_check
              _
            $region34: #{gcn_forward.3} parent=31 // pred_check_branch
              %158 = sbr.rel (0) target = $region36
            $region35: #{gcn_forward.3} parent=31 // pred_region
              loop: start=0, step=1, limit=1
              $region37: #{gcn_forward.3} parent=35 // loop_pre_header
                _
              $region38: #{gcn_forward.3} parent=35 // loop_header
                %s160 = sphi 0, %s164
                %p161 = scmp.ge.s32.totalorder %s160, 1
                %s165 = sphi %s154, %s154
                %s166 = sphi %s148, %s148
              $region39: #{gcn_forward.3} parent=35 // loop_header_branch
                %163 = sbr.rel (%p161) target = $region43
              $region40: #{gcn_forward.3} parent=35 // loop_body
                %v167 = vld [vmem:[%s165] sm:$0xff]
                %168 = vst [vmem:[%s166] sm:$0xff] %v167
                %v169 = vld [vmem:[%s165 + $0x8] sm:$0xff]
                %170 = vst [vmem:[%s166 + $0x8] sm:$0xff] %v169
                %v171 = vld [vmem:[%s165 + $0x10] sm:$0xff]
                %172 = vst [vmem:[%s166 + $0x10] sm:$0xff] %v171
                %v173 = vld [vmem:[%s165 + $0x18] sm:$0xff]
                %174 = vst [vmem:[%s166 + $0x18] sm:$0xff] %v173
                %v175 = vld [vmem:[%s165 + $0x40] sm:$0xff]
                %176 = vst [vmem:[%s166 + $0x20] sm:$0xff] %v175
                %v177 = vld [vmem:[%s165 + $0x48] sm:$0xff]
                %178 = vst [vmem:[%s166 + $0x28] sm:$0xff] %v177
                %v179 = vld [vmem:[%s165 + $0x50] sm:$0xff]
                %180 = vst [vmem:[%s166 + $0x30] sm:$0xff] %v179
                %v181 = vld [vmem:[%s165 + $0x58] sm:$0xff]
                %182 = vst [vmem:[%s166 + $0x38] sm:$0xff] %v181
                %v183 = vld [vmem:[%s165 + $0x80] sm:$0xff]
                %184 = vst [vmem:[%s166 + $0x40] sm:$0xff] %v183
                %v185 = vld [vmem:[%s165 + $0x88] sm:$0xff]
                %186 = vst [vmem:[%s166 + $0x48] sm:$0xff] %v185
                %v187 = vld [vmem:[%s165 + $0x90] sm:$0xff]
                %188 = vst [vmem:[%s166 + $0x50] sm:$0xff] %v187
                %v189 = vld [vmem:[%s165 + $0x98] sm:$0xff]
                %190 = vst [vmem:[%s166 + $0x58] sm:$0xff] %v189
                %v191 = vld [vmem:[%s165 + $0xc0] sm:$0xff]
                %192 = vst [vmem:[%s166 + $0x60] sm:$0xff] %v191
                %v193 = vld [vmem:[%s165 + $0xc8] sm:$0xff]
                %194 = vst [vmem:[%s166 + $0x68] sm:$0xff] %v193
                %v195 = vld [vmem:[%s165 + $0xd0] sm:$0xff]
                %196 = vst [vmem:[%s166 + $0x70] sm:$0xff] %v195
                %v197 = vld [vmem:[%s165 + $0xd8] sm:$0xff]
                %198 = vst [vmem:[%s166 + $0x78] sm:$0xff] %v197
                %v199 = vld [vmem:[%s165 + $0x100] sm:$0xff]
                %200 = vst [vmem:[%s166 + $0x80] sm:$0xff] %v199
                %v201 = vld [vmem:[%s165 + $0x108] sm:$0xff]
                %202 = vst [vmem:[%s166 + $0x88] sm:$0xff] %v201
                %v203 = vld [vmem:[%s165 + $0x110] sm:$0xff]
                %204 = vst [vmem:[%s166 + $0x90] sm:$0xff] %v203
                %v205 = vld [vmem:[%s165 + $0x118] sm:$0xff]
                %206 = vst [vmem:[%s166 + $0x98] sm:$0xff] %v205
                %v207 = vld [vmem:[%s165 + $0x140] sm:$0xff]
                %208 = vst [vmem:[%s166 + $0xa0] sm:$0xff] %v207
                %v209 = vld [vmem:[%s165 + $0x148] sm:$0xff]
                %210 = vst [vmem:[%s166 + $0xa8] sm:$0xff] %v209
                %v211 = vld [vmem:[%s165 + $0x150] sm:$0xff]
                %212 = vst [vmem:[%s166 + $0xb0] sm:$0xff] %v211
                %v213 = vld [vmem:[%s165 + $0x158] sm:$0xff]
                %214 = vst [vmem:[%s166 + $0xb8] sm:$0xff] %v213
                %v215 = vld [vmem:[%s165 + $0x180] sm:$0xff]
                %216 = vst [vmem:[%s166 + $0xc0] sm:$0xff] %v215
                %v217 = vld [vmem:[%s165 + $0x188] sm:$0xff]
                %218 = vst [vmem:[%s166 + $0xc8] sm:$0xff] %v217
                %v219 = vld [vmem:[%s165 + $0x190] sm:$0xff]
                %220 = vst [vmem:[%s166 + $0xd0] sm:$0xff] %v219
                %v221 = vld [vmem:[%s165 + $0x198] sm:$0xff]
                %222 = vst [vmem:[%s166 + $0xd8] sm:$0xff] %v221
                %v223 = vld [vmem:[%s165 + $0x1c0] sm:$0xff]
                %224 = vst [vmem:[%s166 + $0xe0] sm:$0xff] %v223
                %v225 = vld [vmem:[%s165 + $0x1c8] sm:$0xff]
                %226 = vst [vmem:[%s166 + $0xe8] sm:$0xff] %v225
                %v227 = vld [vmem:[%s165 + $0x1d0] sm:$0xff]
                %228 = vst [vmem:[%s166 + $0xf0] sm:$0xff] %v227
                %v229 = vld [vmem:[%s165 + $0x1d8] sm:$0xff]
                %230 = vst [vmem:[%s166 + $0xf8] sm:$0xff] %v229
                %v231 = vld [vmem:[%s165 + $0x200] sm:$0xff]
                %232 = vst [vmem:[%s166 + $0x100] sm:$0xff] %v231
                %v233 = vld [vmem:[%s165 + $0x208] sm:$0xff]
                %234 = vst [vmem:[%s166 + $0x108] sm:$0xff] %v233
                %v235 = vld [vmem:[%s165 + $0x210] sm:$0xff]
                %236 = vst [vmem:[%s166 + $0x110] sm:$0xff] %v235
                %v237 = vld [vmem:[%s165 + $0x218] sm:$0xff]
                %238 = vst [vmem:[%s166 + $0x118] sm:$0xff] %v237
                %v239 = vld [vmem:[%s165 + $0x240] sm:$0xff]
                %240 = vst [vmem:[%s166 + $0x120] sm:$0xff] %v239
                %v241 = vld [vmem:[%s165 + $0x248] sm:$0xff]
                %242 = vst [vmem:[%s166 + $0x128] sm:$0xff] %v241
                %v243 = vld [vmem:[%s165 + $0x250] sm:$0xff]
                %244 = vst [vmem:[%s166 + $0x130] sm:$0xff] %v243
                %v245 = vld [vmem:[%s165 + $0x258] sm:$0xff]
                %246 = vst [vmem:[%s166 + $0x138] sm:$0xff] %v245
                %v247 = vld [vmem:[%s165 + $0x280] sm:$0xff]
                %248 = vst [vmem:[%s166 + $0x140] sm:$0xff] %v247
                %v249 = vld [vmem:[%s165 + $0x288] sm:$0xff]
                %250 = vst [vmem:[%s166 + $0x148] sm:$0xff] %v249
                %v251 = vld [vmem:[%s165 + $0x290] sm:$0xff]
                %252 = vst [vmem:[%s166 + $0x150] sm:$0xff] %v251
                %v253 = vld [vmem:[%s165 + $0x298] sm:$0xff]
                %254 = vst [vmem:[%s166 + $0x158] sm:$0xff] %v253
                %v255 = vld [vmem:[%s165 + $0x2c0] sm:$0xff]
                %256 = vst [vmem:[%s166 + $0x160] sm:$0xff] %v255
                %v257 = vld [vmem:[%s165 + $0x2c8] sm:$0xff]
                %258 = vst [vmem:[%s166 + $0x168] sm:$0xff] %v257
                %v259 = vld [vmem:[%s165 + $0x2d0] sm:$0xff]
                %260 = vst [vmem:[%s166 + $0x170] sm:$0xff] %v259
                %v261 = vld [vmem:[%s165 + $0x2d8] sm:$0xff]
                %262 = vst [vmem:[%s166 + $0x178] sm:$0xff] %v261
                %v263 = vld [vmem:[%s165 + $0x300] sm:$0xff]
                %264 = vst [vmem:[%s166 + $0x180] sm:$0xff] %v263
                %v265 = vld [vmem:[%s165 + $0x308] sm:$0xff]
                %266 = vst [vmem:[%s166 + $0x188] sm:$0xff] %v265
                %v267 = vld [vmem:[%s165 + $0x310] sm:$0xff]
                %268 = vst [vmem:[%s166 + $0x190] sm:$0xff] %v267
                %v269 = vld [vmem:[%s165 + $0x318] sm:$0xff]
                %270 = vst [vmem:[%s166 + $0x198] sm:$0xff] %v269
                %v271 = vld [vmem:[%s165 + $0x340] sm:$0xff]
                %272 = vst [vmem:[%s166 + $0x1a0] sm:$0xff] %v271
                %v273 = vld [vmem:[%s165 + $0x348] sm:$0xff]
                %274 = vst [vmem:[%s166 + $0x1a8] sm:$0xff] %v273
                %v275 = vld [vmem:[%s165 + $0x350] sm:$0xff]
                %276 = vst [vmem:[%s166 + $0x1b0] sm:$0xff] %v275
                %v277 = vld [vmem:[%s165 + $0x358] sm:$0xff]
                %278 = vst [vmem:[%s166 + $0x1b8] sm:$0xff] %v277
                %v279 = vld [vmem:[%s165 + $0x380] sm:$0xff]
                %280 = vst [vmem:[%s166 + $0x1c0] sm:$0xff] %v279
                %v281 = vld [vmem:[%s165 + $0x388] sm:$0xff]
                %282 = vst [vmem:[%s166 + $0x1c8] sm:$0xff] %v281
                %v283 = vld [vmem:[%s165 + $0x390] sm:$0xff]
                %284 = vst [vmem:[%s166 + $0x1d0] sm:$0xff] %v283
                %v285 = vld [vmem:[%s165 + $0x398] sm:$0xff]
                %286 = vst [vmem:[%s166 + $0x1d8] sm:$0xff] %v285
                %v287 = vld [vmem:[%s165 + $0x3c0] sm:$0xff]
                %288 = vst [vmem:[%s166 + $0x1e0] sm:$0xff] %v287
                %v289 = vld [vmem:[%s165 + $0x3c8] sm:$0xff]
                %290 = vst [vmem:[%s166 + $0x1e8] sm:$0xff] %v289
                %v291 = vld [vmem:[%s165 + $0x3d0] sm:$0xff]
                %292 = vst [vmem:[%s166 + $0x1f0] sm:$0xff] %v291
                %v293 = vld [vmem:[%s165 + $0x3d8] sm:$0xff]
                %294 = vst [vmem:[%s166 + $0x1f8] sm:$0xff] %v293
              $region41: #{gcn_forward.3} parent=35 // loop_footer
                %s164 = sadd.s32 1, %s160
              $region42: #{gcn_forward.3} parent=35 // loop_footer_branch
                %159 = sbr.rel target = $region38
              $region43: #{gcn_forward.3} parent=35 // loop_exit
                _
            $region36: #{gcn_forward.3} parent=31 // pred_fallthru
              _
            // Predicated region
            $region44: #{gcn_forward.3} parent=31 // pred_check
              _
            $region45: #{gcn_forward.3} parent=31 // pred_check_branch
              %296 = sbr.rel target = $region47
            $region46: #{gcn_forward.3} parent=31 // pred_region
              _
            $region47: #{gcn_forward.3} parent=31 // pred_fallthru
              _
          $region32: #{gcn_forward.3} parent=27 // pred_fallthru
            _
          %297 = vnop
        $region28: #{gcn_forward.3} parent=23 // pred_fallthru
          _
      $region24: #{gcn_forward.3} parent=5 // pred_fallthru
        _
      %p298 = scmp.le.s32.totalorder 1, %s9
      %p299 = scmp.lt.s32.totalorder %s9, 5
      %p300 = pnand %p298, %p299
      %p301 = pneg %p300
      // Predicated region
      $region48: #{gcn_forward.3} parent=5 // pred_check
        _
      $region49: #{gcn_forward.3} parent=5 // pred_check_branch
        %303 = sbr.rel (%p300) target = $region51
      $region50: #{gcn_forward.3} parent=5 // pred_region
        %s304 = ssub.s32 %s9, 1
        %s305 = sand.u32 %s36, 1
        %s306 = sand.u32 %s36, 1
        %s307 = smul.addr %s306, 512
        %s308 = scalar_lea.vmem [#allocation2], %s307
        // Predicated region
        $region52: #{gcn_forward.3} parent=50 // pred_check
          %p309 = pneg %p49
        $region53: #{gcn_forward.3} parent=50 // pred_check_branch
          %311 = sbr.rel (%p309) target = $region55
        $region54: #{gcn_forward.3} parent=50 // pred_region
          _
        $region55: #{gcn_forward.3} parent=50 // pred_fallthru
          _
        %s312 = sand.u32 %s36, 1
        %s313 = sand.u32 %s36, 1
        %s314 = smul.addr %s313, 512
        %s315 = scalar_lea.vmem [#allocation2], %s314
        %p316 = pneg %p49
        %p317 = pneg %p46
        %p318 = pneg %p70
        %p319 = pneg %p67
        %p320 = pneg %p91
        %p321 = pneg %p88
        %p322 = pneg %p117
        %p323 = pneg %p114
        %s324 = smul.u32 64, %s18
        %p325 = scmp.lt.s32.totalorder %s324, 127
        %s326 = scalar_select %p325, %s324, 127
        %s327 = smul.addr %s326, 8
        %s328 = scalar_lea.vmem %s3, %s327
        %s329 = smul.u32 16, %s18
        %s330 = smul.u32 4, %s19
        %s331 = smul.u32 64, %s18
        %p332 = scmp.lt.s32.totalorder %s331, 127
        %s333 = scalar_select %p332, %s331, 127
        %s334 = smul.addr %s333, 8
        %s335 = scalar_lea.vmem %s3, %s334
        %s336 = smul.u32 64, %s18
        %p338 = scmp.eq.s32.totalorder %s19, 0
        // Predicated region
        $region56: #{gcn_forward.3} parent=50 // pred_check
          %p339 = pneg %p338
        $region57: #{gcn_forward.3} parent=50 // pred_check_branch
          %341 = sbr.rel (%p339) target = $region59
        $region58: #{gcn_forward.3} parent=50 // pred_region
          %v342 = vld [vmem:[%s2] sm:$0x1]
          %v344 = vlaneseq
          %v345 = vshrl.u32 %v344, 7
          %v346 = vsub.s32 0, %v345
          %v347 = vrot.slane %v342, %v346
          %349 = vst [vmem:[%s335] sm:$0xff] %v347
          %350 = vst [vmem:[%s335 + $0x8] sm:$0xff] %v347
          %351 = vst [vmem:[%s335 + $0x10] sm:$0xff] %v347
          %352 = vst [vmem:[%s335 + $0x18] sm:$0xff] %v347
          %353 = vst [vmem:[%s335 + $0x20] sm:$0xff] %v347
          %354 = vst [vmem:[%s335 + $0x28] sm:$0xff] %v347
          %355 = vst [vmem:[%s335 + $0x30] sm:$0xff] %v347
          %356 = vst [vmem:[%s335 + $0x38] sm:$0xff] %v347
          %357 = vst [vmem:[%s335 + $0x40] sm:$0xff] %v347
          %358 = vst [vmem:[%s335 + $0x48] sm:$0xff] %v347
          %359 = vst [vmem:[%s335 + $0x50] sm:$0xff] %v347
          %360 = vst [vmem:[%s335 + $0x58] sm:$0xff] %v347
          %361 = vst [vmem:[%s335 + $0x60] sm:$0xff] %v347
          %362 = vst [vmem:[%s335 + $0x68] sm:$0xff] %v347
          %363 = vst [vmem:[%s335 + $0x70] sm:$0xff] %v347
          %364 = vst [vmem:[%s335 + $0x78] sm:$0xff] %v347
          %365 = vst [vmem:[%s335 + $0x80] sm:$0xff] %v347
          %366 = vst [vmem:[%s335 + $0x88] sm:$0xff] %v347
          %367 = vst [vmem:[%s335 + $0x90] sm:$0xff] %v347
          %368 = vst [vmem:[%s335 + $0x98] sm:$0xff] %v347
          %369 = vst [vmem:[%s335 + $0xa0] sm:$0xff] %v347
          %370 = vst [vmem:[%s335 + $0xa8] sm:$0xff] %v347
          %371 = vst [vmem:[%s335 + $0xb0] sm:$0xff] %v347
          %372 = vst [vmem:[%s335 + $0xb8] sm:$0xff] %v347
          %373 = vst [vmem:[%s335 + $0xc0] sm:$0xff] %v347
          %374 = vst [vmem:[%s335 + $0xc8] sm:$0xff] %v347
          %375 = vst [vmem:[%s335 + $0xd0] sm:$0xff] %v347
          %376 = vst [vmem:[%s335 + $0xd8] sm:$0xff] %v347
          %377 = vst [vmem:[%s335 + $0xe0] sm:$0xff] %v347
          %378 = vst [vmem:[%s335 + $0xe8] sm:$0xff] %v347
          %379 = vst [vmem:[%s335 + $0xf0] sm:$0xff] %v347
          %380 = vst [vmem:[%s335 + $0xf8] sm:$0xff] %v347
          %381 = vst [vmem:[%s335 + $0x100] sm:$0xff] %v347
          %382 = vst [vmem:[%s335 + $0x108] sm:$0xff] %v347
          %383 = vst [vmem:[%s335 + $0x110] sm:$0xff] %v347
          %384 = vst [vmem:[%s335 + $0x118] sm:$0xff] %v347
          %385 = vst [vmem:[%s335 + $0x120] sm:$0xff] %v347
          %386 = vst [vmem:[%s335 + $0x128] sm:$0xff] %v347
          %387 = vst [vmem:[%s335 + $0x130] sm:$0xff] %v347
          %388 = vst [vmem:[%s335 + $0x138] sm:$0xff] %v347
          %389 = vst [vmem:[%s335 + $0x140] sm:$0xff] %v347
          %390 = vst [vmem:[%s335 + $0x148] sm:$0xff] %v347
          %391 = vst [vmem:[%s335 + $0x150] sm:$0xff] %v347
          %392 = vst [vmem:[%s335 + $0x158] sm:$0xff] %v347
          %393 = vst [vmem:[%s335 + $0x160] sm:$0xff] %v347
          %394 = vst [vmem:[%s335 + $0x168] sm:$0xff] %v347
          %395 = vst [vmem:[%s335 + $0x170] sm:$0xff] %v347
          %396 = vst [vmem:[%s335 + $0x178] sm:$0xff] %v347
          %397 = vst [vmem:[%s335 + $0x180] sm:$0xff] %v347
          %398 = vst [vmem:[%s335 + $0x188] sm:$0xff] %v347
          %399 = vst [vmem:[%s335 + $0x190] sm:$0xff] %v347
          %400 = vst [vmem:[%s335 + $0x198] sm:$0xff] %v347
          %401 = vst [vmem:[%s335 + $0x1a0] sm:$0xff] %v347
          %402 = vst [vmem:[%s335 + $0x1a8] sm:$0xff] %v347
          %403 = vst [vmem:[%s335 + $0x1b0] sm:$0xff] %v347
          %404 = vst [vmem:[%s335 + $0x1b8] sm:$0xff] %v347
          %405 = vst [vmem:[%s335 + $0x1c0] sm:$0xff] %v347
          %406 = vst [vmem:[%s335 + $0x1c8] sm:$0xff] %v347
          %407 = vst [vmem:[%s335 + $0x1d0] sm:$0xff] %v347
          %408 = vst [vmem:[%s335 + $0x1d8] sm:$0xff] %v347
          %409 = vst [vmem:[%s335 + $0x1e0] sm:$0xff] %v347
          %410 = vst [vmem:[%s335 + $0x1e8] sm:$0xff] %v347
          %411 = vst [vmem:[%s335 + $0x1f0] sm:$0xff] %v347
          %412 = vst [vmem:[%s335 + $0x1f8] sm:$0xff] %v347
        $region59: #{gcn_forward.3} parent=50 // pred_fallthru
          _
        %v413 = vld [vmem:[%s308] sm:$0xff]
        %v414 = vld [vmem:[%s308 + $0x8] sm:$0xff]
        %v415 = vld [vmem:[%s308 + $0x10] sm:$0xff]
        %v416 = vld [vmem:[%s308 + $0x18] sm:$0xff]
        %v417 = vld [vmem:[%s308 + $0x20] sm:$0xff]
        %v418 = vld [vmem:[%s308 + $0x28] sm:$0xff]
        %v419 = vld [vmem:[%s308 + $0x30] sm:$0xff]
        %v420 = vld [vmem:[%s308 + $0x38] sm:$0xff]
        %v421 = vld [vmem:[%s308 + $0x40] sm:$0xff]
        %v422 = vld [vmem:[%s308 + $0x48] sm:$0xff]
        %v423 = vld [vmem:[%s308 + $0x50] sm:$0xff]
        %v424 = vld [vmem:[%s308 + $0x58] sm:$0xff]
        %v425 = vld [vmem:[%s308 + $0x60] sm:$0xff]
        %v426 = vld [vmem:[%s308 + $0x68] sm:$0xff]
        %v427 = vld [vmem:[%s308 + $0x70] sm:$0xff]
        %v428 = vld [vmem:[%s308 + $0x78] sm:$0xff]
        %v429 = vld [vmem:[%s308 + $0x80] sm:$0xff]
        %v430 = vld [vmem:[%s308 + $0x88] sm:$0xff]
        %v431 = vld [vmem:[%s308 + $0x90] sm:$0xff]
        %v432 = vld [vmem:[%s308 + $0x98] sm:$0xff]
        %v433 = vld [vmem:[%s308 + $0xa0] sm:$0xff]
        %v434 = vld [vmem:[%s308 + $0xa8] sm:$0xff]
        %v435 = vld [vmem:[%s308 + $0xb0] sm:$0xff]
        %v436 = vld [vmem:[%s308 + $0xb8] sm:$0xff]
        %v437 = vld [vmem:[%s308 + $0xc0] sm:$0xff]
        %v438 = vld [vmem:[%s308 + $0xc8] sm:$0xff]
        %v439 = vld [vmem:[%s308 + $0xd0] sm:$0xff]
        %v440 = vld [vmem:[%s308 + $0xd8] sm:$0xff]
        %v441 = vld [vmem:[%s308 + $0xe0] sm:$0xff]
        %v442 = vld [vmem:[%s308 + $0xe8] sm:$0xff]
        %v443 = vld [vmem:[%s308 + $0xf0] sm:$0xff]
        %v444 = vld [vmem:[%s308 + $0xf8] sm:$0xff]
        %v445 = vld [vmem:[%s308 + $0x100] sm:$0xff]
        %v446 = vld [vmem:[%s308 + $0x108] sm:$0xff]
        %v447 = vld [vmem:[%s308 + $0x110] sm:$0xff]
        %v448 = vld [vmem:[%s308 + $0x118] sm:$0xff]
        %v449 = vld [vmem:[%s308 + $0x120] sm:$0xff]
        %v450 = vld [vmem:[%s308 + $0x128] sm:$0xff]
        %v451 = vld [vmem:[%s308 + $0x130] sm:$0xff]
        %v452 = vld [vmem:[%s308 + $0x138] sm:$0xff]
        %v453 = vld [vmem:[%s308 + $0x140] sm:$0xff]
        %v454 = vld [vmem:[%s308 + $0x148] sm:$0xff]
        %v455 = vld [vmem:[%s308 + $0x150] sm:$0xff]
        %v456 = vld [vmem:[%s308 + $0x158] sm:$0xff]
        %v457 = vld [vmem:[%s308 + $0x160] sm:$0xff]
        %v458 = vld [vmem:[%s308 + $0x168] sm:$0xff]
        %v459 = vld [vmem:[%s308 + $0x170] sm:$0xff]
        %v460 = vld [vmem:[%s308 + $0x178] sm:$0xff]
        %v461 = vld [vmem:[%s308 + $0x180] sm:$0xff]
        %v462 = vld [vmem:[%s308 + $0x188] sm:$0xff]
        %v463 = vld [vmem:[%s308 + $0x190] sm:$0xff]
        %v464 = vld [vmem:[%s308 + $0x198] sm:$0xff]
        %v465 = vld [vmem:[%s308 + $0x1a0] sm:$0xff]
        %v466 = vld [vmem:[%s308 + $0x1a8] sm:$0xff]
        %v467 = vld [vmem:[%s308 + $0x1b0] sm:$0xff]
        %v468 = vld [vmem:[%s308 + $0x1b8] sm:$0xff]
        %v469 = vld [vmem:[%s308 + $0x1c0] sm:$0xff]
        %v470 = vld [vmem:[%s308 + $0x1c8] sm:$0xff]
        %v471 = vld [vmem:[%s308 + $0x1d0] sm:$0xff]
        %v472 = vld [vmem:[%s308 + $0x1d8] sm:$0xff]
        %v473 = vld [vmem:[%s308 + $0x1e0] sm:$0xff]
        %v474 = vld [vmem:[%s308 + $0x1e8] sm:$0xff]
        %v475 = vld [vmem:[%s308 + $0x1f0] sm:$0xff]
        %v476 = vld [vmem:[%s308 + $0x1f8] sm:$0xff]
        %v477 = vunpack.c.l.s8.bf16 %v413
        %v478 = vunpack.c.l.s8.bf16 %v414
        %v479 = vunpack.c.l.s8.bf16 %v415
        %v480 = vunpack.c.l.s8.bf16 %v416
        %v481 = vunpack.c.h.s8.bf16 %v413
        %v482 = vunpack.c.h.s8.bf16 %v414
        %v483 = vunpack.c.h.s8.bf16 %v415
        %v484 = vunpack.c.h.s8.bf16 %v416
        %v485 = vunpack.c.l.s8.bf16 %v417
        %v486 = vunpack.c.l.s8.bf16 %v418
        %v487 = vunpack.c.l.s8.bf16 %v419
        %v488 = vunpack.c.l.s8.bf16 %v420
        %v489 = vunpack.c.h.s8.bf16 %v417
        %v490 = vunpack.c.h.s8.bf16 %v418
        %v491 = vunpack.c.h.s8.bf16 %v419
        %v492 = vunpack.c.h.s8.bf16 %v420
        %v493 = vunpack.c.l.s8.bf16 %v421
        %v494 = vunpack.c.l.s8.bf16 %v422
        %v495 = vunpack.c.l.s8.bf16 %v423
        %v496 = vunpack.c.l.s8.bf16 %v424
        %v497 = vunpack.c.h.s8.bf16 %v421
        %v498 = vunpack.c.h.s8.bf16 %v422
        %v499 = vunpack.c.h.s8.bf16 %v423
        %v500 = vunpack.c.h.s8.bf16 %v424
        %v501 = vunpack.c.l.s8.bf16 %v425
        %v502 = vunpack.c.l.s8.bf16 %v426
        %v503 = vunpack.c.l.s8.bf16 %v427
        %v504 = vunpack.c.l.s8.bf16 %v428
        %v505 = vunpack.c.h.s8.bf16 %v425
        %v506 = vunpack.c.h.s8.bf16 %v426
        %v507 = vunpack.c.h.s8.bf16 %v427
        %v508 = vunpack.c.h.s8.bf16 %v428
        %v509 = vunpack.c.l.s8.bf16 %v429
        %v510 = vunpack.c.l.s8.bf16 %v430
        %v511 = vunpack.c.l.s8.bf16 %v431
        %v512 = vunpack.c.l.s8.bf16 %v432
        %v513 = vunpack.c.h.s8.bf16 %v429
        %v514 = vunpack.c.h.s8.bf16 %v430
        %v515 = vunpack.c.h.s8.bf16 %v431
        %v516 = vunpack.c.h.s8.bf16 %v432
        %v517 = vunpack.c.l.s8.bf16 %v433
        %v518 = vunpack.c.l.s8.bf16 %v434
        %v519 = vunpack.c.l.s8.bf16 %v435
        %v520 = vunpack.c.l.s8.bf16 %v436
        %v521 = vunpack.c.h.s8.bf16 %v433
        %v522 = vunpack.c.h.s8.bf16 %v434
        %v523 = vunpack.c.h.s8.bf16 %v435
        %v524 = vunpack.c.h.s8.bf16 %v436
        %v525 = vunpack.c.l.s8.bf16 %v437
        %v526 = vunpack.c.l.s8.bf16 %v438
        %v527 = vunpack.c.l.s8.bf16 %v439
        %v528 = vunpack.c.l.s8.bf16 %v440
        %v529 = vunpack.c.h.s8.bf16 %v437
        %v530 = vunpack.c.h.s8.bf16 %v438
        %v531 = vunpack.c.h.s8.bf16 %v439
        %v532 = vunpack.c.h.s8.bf16 %v440
        %v533 = vunpack.c.l.s8.bf16 %v441
        %v534 = vunpack.c.l.s8.bf16 %v442
        %v535 = vunpack.c.l.s8.bf16 %v443
        %v536 = vunpack.c.l.s8.bf16 %v444
        %v537 = vunpack.c.h.s8.bf16 %v441
        %v538 = vunpack.c.h.s8.bf16 %v442
        %v539 = vunpack.c.h.s8.bf16 %v443
        %v540 = vunpack.c.h.s8.bf16 %v444
        %v541 = vunpack.c.l.s8.bf16 %v445
        %v542 = vunpack.c.l.s8.bf16 %v446
        %v543 = vunpack.c.l.s8.bf16 %v447
        %v544 = vunpack.c.l.s8.bf16 %v448
        %v545 = vunpack.c.h.s8.bf16 %v445
        %v546 = vunpack.c.h.s8.bf16 %v446
        %v547 = vunpack.c.h.s8.bf16 %v447
        %v548 = vunpack.c.h.s8.bf16 %v448
        %v549 = vunpack.c.l.s8.bf16 %v449
        %v550 = vunpack.c.l.s8.bf16 %v450
        %v551 = vunpack.c.l.s8.bf16 %v451
        %v552 = vunpack.c.l.s8.bf16 %v452
        %v553 = vunpack.c.h.s8.bf16 %v449
        %v554 = vunpack.c.h.s8.bf16 %v450
        %v555 = vunpack.c.h.s8.bf16 %v451
        %v556 = vunpack.c.h.s8.bf16 %v452
        %v557 = vunpack.c.l.s8.bf16 %v453
        %v558 = vunpack.c.l.s8.bf16 %v454
        %v559 = vunpack.c.l.s8.bf16 %v455
        %v560 = vunpack.c.l.s8.bf16 %v456
        %v561 = vunpack.c.h.s8.bf16 %v453
        %v562 = vunpack.c.h.s8.bf16 %v454
        %v563 = vunpack.c.h.s8.bf16 %v455
        %v564 = vunpack.c.h.s8.bf16 %v456
        %v565 = vunpack.c.l.s8.bf16 %v457
        %v566 = vunpack.c.l.s8.bf16 %v458
        %v567 = vunpack.c.l.s8.bf16 %v459
        %v568 = vunpack.c.l.s8.bf16 %v460
        %v569 = vunpack.c.h.s8.bf16 %v457
        %v570 = vunpack.c.h.s8.bf16 %v458
        %v571 = vunpack.c.h.s8.bf16 %v459
        %v572 = vunpack.c.h.s8.bf16 %v460
        %v573 = vunpack.c.l.s8.bf16 %v461
        %v574 = vunpack.c.l.s8.bf16 %v462
        %v575 = vunpack.c.l.s8.bf16 %v463
        %v576 = vunpack.c.l.s8.bf16 %v464
        %v577 = vunpack.c.h.s8.bf16 %v461
        %v578 = vunpack.c.h.s8.bf16 %v462
        %v579 = vunpack.c.h.s8.bf16 %v463
        %v580 = vunpack.c.h.s8.bf16 %v464
        %v581 = vunpack.c.l.s8.bf16 %v465
        %v582 = vunpack.c.l.s8.bf16 %v466
        %v583 = vunpack.c.l.s8.bf16 %v467
        %v584 = vunpack.c.l.s8.bf16 %v468
        %v585 = vunpack.c.h.s8.bf16 %v465
        %v586 = vunpack.c.h.s8.bf16 %v466
        %v587 = vunpack.c.h.s8.bf16 %v467
        %v588 = vunpack.c.h.s8.bf16 %v468
        %v589 = vunpack.c.l.s8.bf16 %v469
        %v590 = vunpack.c.l.s8.bf16 %v470
        %v591 = vunpack.c.l.s8.bf16 %v471
        %v592 = vunpack.c.l.s8.bf16 %v472
        %v593 = vunpack.c.h.s8.bf16 %v469
        %v594 = vunpack.c.h.s8.bf16 %v470
        %v595 = vunpack.c.h.s8.bf16 %v471
        %v596 = vunpack.c.h.s8.bf16 %v472
        %v597 = vunpack.c.l.s8.bf16 %v473
        %v598 = vunpack.c.l.s8.bf16 %v474
        %v599 = vunpack.c.l.s8.bf16 %v475
        %v600 = vunpack.c.l.s8.bf16 %v476
        %v601 = vunpack.c.h.s8.bf16 %v473
        %v602 = vunpack.c.h.s8.bf16 %v474
        %v603 = vunpack.c.h.s8.bf16 %v475
        %v604 = vunpack.c.h.s8.bf16 %v476
        %v605 = vld [vmem:[%s335] sm:$0xff]
        %v606 = vld [vmem:[%s335 + $0x8] sm:$0xff]
        %v607 = vld [vmem:[%s335 + $0x10] sm:$0xff]
        %v608 = vld [vmem:[%s335 + $0x18] sm:$0xff]
        %v609 = vld [vmem:[%s335 + $0x20] sm:$0xff]
        %v610 = vld [vmem:[%s335 + $0x28] sm:$0xff]
        %v611 = vld [vmem:[%s335 + $0x30] sm:$0xff]
        %v612 = vld [vmem:[%s335 + $0x38] sm:$0xff]
        %v613 = vld [vmem:[%s335 + $0x40] sm:$0xff]
        %v614 = vld [vmem:[%s335 + $0x48] sm:$0xff]
        %v615 = vld [vmem:[%s335 + $0x50] sm:$0xff]
        %v616 = vld [vmem:[%s335 + $0x58] sm:$0xff]
        %v617 = vld [vmem:[%s335 + $0x60] sm:$0xff]
        %v618 = vld [vmem:[%s335 + $0x68] sm:$0xff]
        %v619 = vld [vmem:[%s335 + $0x70] sm:$0xff]
        %v620 = vld [vmem:[%s335 + $0x78] sm:$0xff]
        %v621 = vld [vmem:[%s335 + $0x80] sm:$0xff]
        %v622 = vld [vmem:[%s335 + $0x88] sm:$0xff]
        %v623 = vld [vmem:[%s335 + $0x90] sm:$0xff]
        %v624 = vld [vmem:[%s335 + $0x98] sm:$0xff]
        %v625 = vld [vmem:[%s335 + $0xa0] sm:$0xff]
        %v626 = vld [vmem:[%s335 + $0xa8] sm:$0xff]
        %v627 = vld [vmem:[%s335 + $0xb0] sm:$0xff]
        %v628 = vld [vmem:[%s335 + $0xb8] sm:$0xff]
        %v629 = vld [vmem:[%s335 + $0xc0] sm:$0xff]
        %v630 = vld [vmem:[%s335 + $0xc8] sm:$0xff]
        %v631 = vld [vmem:[%s335 + $0xd0] sm:$0xff]
        %v632 = vld [vmem:[%s335 + $0xd8] sm:$0xff]
        %v633 = vld [vmem:[%s335 + $0xe0] sm:$0xff]
        %v634 = vld [vmem:[%s335 + $0xe8] sm:$0xff]
        %v635 = vld [vmem:[%s335 + $0xf0] sm:$0xff]
        %v636 = vld [vmem:[%s335 + $0xf8] sm:$0xff]
        %v637 = vld [vmem:[%s335 + $0x100] sm:$0xff]
        %v638 = vld [vmem:[%s335 + $0x108] sm:$0xff]
        %v639 = vld [vmem:[%s335 + $0x110] sm:$0xff]
        %v640 = vld [vmem:[%s335 + $0x118] sm:$0xff]
        %v641 = vld [vmem:[%s335 + $0x120] sm:$0xff]
        %v642 = vld [vmem:[%s335 + $0x128] sm:$0xff]
        %v643 = vld [vmem:[%s335 + $0x130] sm:$0xff]
        %v644 = vld [vmem:[%s335 + $0x138] sm:$0xff]
        %v645 = vld [vmem:[%s335 + $0x140] sm:$0xff]
        %v646 = vld [vmem:[%s335 + $0x148] sm:$0xff]
        %v647 = vld [vmem:[%s335 + $0x150] sm:$0xff]
        %v648 = vld [vmem:[%s335 + $0x158] sm:$0xff]
        %v649 = vld [vmem:[%s335 + $0x160] sm:$0xff]
        %v650 = vld [vmem:[%s335 + $0x168] sm:$0xff]
        %v651 = vld [vmem:[%s335 + $0x170] sm:$0xff]
        %v652 = vld [vmem:[%s335 + $0x178] sm:$0xff]
        %v653 = vld [vmem:[%s335 + $0x180] sm:$0xff]
        %v654 = vld [vmem:[%s335 + $0x188] sm:$0xff]
        %v655 = vld [vmem:[%s335 + $0x190] sm:$0xff]
        %v656 = vld [vmem:[%s335 + $0x198] sm:$0xff]
        %v657 = vld [vmem:[%s335 + $0x1a0] sm:$0xff]
        %v658 = vld [vmem:[%s335 + $0x1a8] sm:$0xff]
        %v659 = vld [vmem:[%s335 + $0x1b0] sm:$0xff]
        %v660 = vld [vmem:[%s335 + $0x1b8] sm:$0xff]
        %v661 = vld [vmem:[%s335 + $0x1c0] sm:$0xff]
        %v662 = vld [vmem:[%s335 + $0x1c8] sm:$0xff]
        %v663 = vld [vmem:[%s335 + $0x1d0] sm:$0xff]
        %v664 = vld [vmem:[%s335 + $0x1d8] sm:$0xff]
        %v665 = vld [vmem:[%s335 + $0x1e0] sm:$0xff]
        %v666 = vld [vmem:[%s335 + $0x1e8] sm:$0xff]
        %v667 = vld [vmem:[%s335 + $0x1f0] sm:$0xff]
        %v668 = vld [vmem:[%s335 + $0x1f8] sm:$0xff]
        %s669 = smul.u32 %s19, 512
        %s670 = sshra.s32 %s669, 3
        %s671 = sand.u32 %s669, 7
        %s672 = smul.addr %s670, 4
        %s673 = scalar_lea.vmem %s1, %s672
        %v674 = vld [vmem:[%s673] sm:$0xf]
        %v675 = vld [vmem:[%s673 + $0x4] sm:$0xf]
        %v676 = vld [vmem:[%s673 + $0x8] sm:$0xf]
        %v677 = vld [vmem:[%s673 + $0xc] sm:$0xf]
        %v678 = vld [vmem:[%s673 + $0x10] sm:$0xf]
        %v679 = vld [vmem:[%s673 + $0x14] sm:$0xf]
        %v680 = vld [vmem:[%s673 + $0x18] sm:$0xf]
        %v681 = vld [vmem:[%s673 + $0x1c] sm:$0xf]
        %v682 = vld [vmem:[%s673 + $0x20] sm:$0xf]
        %v683 = vld [vmem:[%s673 + $0x24] sm:$0xf]
        %v684 = vld [vmem:[%s673 + $0x28] sm:$0xf]
        %v685 = vld [vmem:[%s673 + $0x2c] sm:$0xf]
        %v686 = vld [vmem:[%s673 + $0x30] sm:$0xf]
        %v687 = vld [vmem:[%s673 + $0x34] sm:$0xf]
        %v688 = vld [vmem:[%s673 + $0x38] sm:$0xf]
        %v689 = vld [vmem:[%s673 + $0x3c] sm:$0xf]
        %v690 = vld [vmem:[%s673 + $0x40] sm:$0xf]
        %v691 = vld [vmem:[%s673 + $0x44] sm:$0xf]
        %v692 = vld [vmem:[%s673 + $0x48] sm:$0xf]
        %v693 = vld [vmem:[%s673 + $0x4c] sm:$0xf]
        %v694 = vld [vmem:[%s673 + $0x50] sm:$0xf]
        %v695 = vld [vmem:[%s673 + $0x54] sm:$0xf]
        %v696 = vld [vmem:[%s673 + $0x58] sm:$0xf]
        %v697 = vld [vmem:[%s673 + $0x5c] sm:$0xf]
        %v698 = vld [vmem:[%s673 + $0x60] sm:$0xf]
        %v699 = vld [vmem:[%s673 + $0x64] sm:$0xf]
        %v700 = vld [vmem:[%s673 + $0x68] sm:$0xf]
        %v701 = vld [vmem:[%s673 + $0x6c] sm:$0xf]
        %v702 = vld [vmem:[%s673 + $0x70] sm:$0xf]
        %v703 = vld [vmem:[%s673 + $0x74] sm:$0xf]
        %v704 = vld [vmem:[%s673 + $0x78] sm:$0xf]
        %v705 = vld [vmem:[%s673 + $0x7c] sm:$0xf]
        %v706 = vld [vmem:[%s673 + $0x80] sm:$0xf]
        %v707 = vld [vmem:[%s673 + $0x84] sm:$0xf]
        %v708 = vld [vmem:[%s673 + $0x88] sm:$0xf]
        %v709 = vld [vmem:[%s673 + $0x8c] sm:$0xf]
        %v710 = vld [vmem:[%s673 + $0x90] sm:$0xf]
        %v711 = vld [vmem:[%s673 + $0x94] sm:$0xf]
        %v712 = vld [vmem:[%s673 + $0x98] sm:$0xf]
        %v713 = vld [vmem:[%s673 + $0x9c] sm:$0xf]
        %v714 = vld [vmem:[%s673 + $0xa0] sm:$0xf]
        %v715 = vld [vmem:[%s673 + $0xa4] sm:$0xf]
        %v716 = vld [vmem:[%s673 + $0xa8] sm:$0xf]
        %v717 = vld [vmem:[%s673 + $0xac] sm:$0xf]
        %v718 = vld [vmem:[%s673 + $0xb0] sm:$0xf]
        %v719 = vld [vmem:[%s673 + $0xb4] sm:$0xf]
        %v720 = vld [vmem:[%s673 + $0xb8] sm:$0xf]
        %v721 = vld [vmem:[%s673 + $0xbc] sm:$0xf]
        %v722 = vld [vmem:[%s673 + $0xc0] sm:$0xf]
        %v723 = vld [vmem:[%s673 + $0xc4] sm:$0xf]
        %v724 = vld [vmem:[%s673 + $0xc8] sm:$0xf]
        %v725 = vld [vmem:[%s673 + $0xcc] sm:$0xf]
        %v726 = vld [vmem:[%s673 + $0xd0] sm:$0xf]
        %v727 = vld [vmem:[%s673 + $0xd4] sm:$0xf]
        %v728 = vld [vmem:[%s673 + $0xd8] sm:$0xf]
        %v729 = vld [vmem:[%s673 + $0xdc] sm:$0xf]
        %v730 = vld [vmem:[%s673 + $0xe0] sm:$0xf]
        %v731 = vld [vmem:[%s673 + $0xe4] sm:$0xf]
        %v732 = vld [vmem:[%s673 + $0xe8] sm:$0xf]
        %v733 = vld [vmem:[%s673 + $0xec] sm:$0xf]
        %v734 = vld [vmem:[%s673 + $0xf0] sm:$0xf]
        %v735 = vld [vmem:[%s673 + $0xf4] sm:$0xf]
        %v736 = vld [vmem:[%s673 + $0xf8] sm:$0xf]
        %v737 = vld [vmem:[%s673 + $0xfc] sm:$0xf]
        %v802 = vunpack.c.l.b16 %v674
        %v803 = vunpack.c.l.b16 %v675
        %v804 = vunpack.c.l.b16 %v676
        %v805 = vunpack.c.l.b16 %v677
        %v806 = vunpack.c.l.b16 %v678
        %v807 = vunpack.c.l.b16 %v679
        %v808 = vunpack.c.l.b16 %v680
        %v809 = vunpack.c.l.b16 %v681
        %v810 = vunpack.c.l.b16 %v682
        %v811 = vunpack.c.l.b16 %v683
        %v812 = vunpack.c.l.b16 %v684
        %v813 = vunpack.c.l.b16 %v685
        %v814 = vunpack.c.l.b16 %v686
        %v815 = vunpack.c.l.b16 %v687
        %v816 = vunpack.c.l.b16 %v688
        %v817 = vunpack.c.l.b16 %v689
        %v818 = vunpack.c.l.b16 %v690
        %v819 = vunpack.c.l.b16 %v691
        %v820 = vunpack.c.l.b16 %v692
        %v821 = vunpack.c.l.b16 %v693
        %v822 = vunpack.c.l.b16 %v694
        %v823 = vunpack.c.l.b16 %v695
        %v824 = vunpack.c.l.b16 %v696
        %v825 = vunpack.c.l.b16 %v697
        %v826 = vunpack.c.l.b16 %v698
        %v827 = vunpack.c.l.b16 %v699
        %v828 = vunpack.c.l.b16 %v700
        %v829 = vunpack.c.l.b16 %v701
        %v830 = vunpack.c.l.b16 %v702
        %v831 = vunpack.c.l.b16 %v703
        %v832 = vunpack.c.l.b16 %v704
        %v833 = vunpack.c.l.b16 %v705
        %v834 = vunpack.c.l.b16 %v706
        %v835 = vunpack.c.l.b16 %v707
        %v836 = vunpack.c.l.b16 %v708
        %v837 = vunpack.c.l.b16 %v709
        %v838 = vunpack.c.l.b16 %v710
        %v839 = vunpack.c.l.b16 %v711
        %v840 = vunpack.c.l.b16 %v712
        %v841 = vunpack.c.l.b16 %v713
        %v842 = vunpack.c.l.b16 %v714
        %v843 = vunpack.c.l.b16 %v715
        %v844 = vunpack.c.l.b16 %v716
        %v845 = vunpack.c.l.b16 %v717
        %v846 = vunpack.c.l.b16 %v718
        %v847 = vunpack.c.l.b16 %v719
        %v848 = vunpack.c.l.b16 %v720
        %v849 = vunpack.c.l.b16 %v721
        %v850 = vunpack.c.l.b16 %v722
        %v851 = vunpack.c.l.b16 %v723
        %v852 = vunpack.c.l.b16 %v724
        %v853 = vunpack.c.l.b16 %v725
        %v854 = vunpack.c.l.b16 %v726
        %v855 = vunpack.c.l.b16 %v727
        %v856 = vunpack.c.l.b16 %v728
        %v857 = vunpack.c.l.b16 %v729
        %v858 = vunpack.c.l.b16 %v730
        %v859 = vunpack.c.l.b16 %v731
        %v860 = vunpack.c.l.b16 %v732
        %v861 = vunpack.c.l.b16 %v733
        %v862 = vunpack.c.l.b16 %v734
        %v863 = vunpack.c.l.b16 %v735
        %v864 = vunpack.c.l.b16 %v736
        %v865 = vunpack.c.l.b16 %v737
        %v866 = vpack.c.b16 %v803, %v802
        %v867 = vpack.c.b16 %v805, %v804
        %v868 = vpack.c.b16 %v807, %v806
        %v869 = vpack.c.b16 %v809, %v808
        %v870 = vpack.c.b16 %v811, %v810
        %v871 = vpack.c.b16 %v813, %v812
        %v872 = vpack.c.b16 %v815, %v814
        %v873 = vpack.c.b16 %v817, %v816
        %v874 = vpack.c.b16 %v819, %v818
        %v875 = vpack.c.b16 %v821, %v820
        %v876 = vpack.c.b16 %v823, %v822
        %v877 = vpack.c.b16 %v825, %v824
        %v878 = vpack.c.b16 %v827, %v826
        %v879 = vpack.c.b16 %v829, %v828
        %v880 = vpack.c.b16 %v831, %v830
        %v881 = vpack.c.b16 %v833, %v832
        %v882 = vpack.c.b16 %v835, %v834
        %v883 = vpack.c.b16 %v837, %v836
        %v884 = vpack.c.b16 %v839, %v838
        %v885 = vpack.c.b16 %v841, %v840
        %v886 = vpack.c.b16 %v843, %v842
        %v887 = vpack.c.b16 %v845, %v844
        %v888 = vpack.c.b16 %v847, %v846
        %v889 = vpack.c.b16 %v849, %v848
        %v890 = vpack.c.b16 %v851, %v850
        %v891 = vpack.c.b16 %v853, %v852
        %v892 = vpack.c.b16 %v855, %v854
        %v893 = vpack.c.b16 %v857, %v856
        %v894 = vpack.c.b16 %v859, %v858
        %v895 = vpack.c.b16 %v861, %v860
        %v896 = vpack.c.b16 %v863, %v862
        %v897 = vpack.c.b16 %v865, %v864
        %930 = vmatprep.subr.bf16.mxu0 0
        %931 = vmatpush1.bf16.msra.mxu0 %v866
        %932 = vmatprep.subr.bf16.mxu0 0
        %933 = vmatpush1.bf16.msra.mxu0 %v867
        %934 = vmatprep.subr.bf16.mxu0 0
        %935 = vmatpush1.bf16.msra.mxu0 %v868
        %936 = vmatprep.subr.bf16.mxu0 0
        %937 = vmatpush1.bf16.msra.mxu0 %v869
        %938 = vmatprep.subr.bf16.mxu0 0
        %939 = vmatpush1.bf16.msra.mxu0 %v870
        %940 = vmatprep.subr.bf16.mxu0 0
        %941 = vmatpush1.bf16.msra.mxu0 %v871
        %942 = vmatprep.subr.bf16.mxu0 0
        %943 = vmatpush1.bf16.msra.mxu0 %v872
        %944 = vmatprep.subr.bf16.mxu0 0
        %945 = vmatpush1.bf16.msra.mxu0 %v873
        %946 = vmatprep.subr.bf16.mxu0 0
        %947 = vmatpush1.bf16.msra.mxu0 %v874
        %948 = vmatprep.subr.bf16.mxu0 0
        %949 = vmatpush1.bf16.msra.mxu0 %v875
        %950 = vmatprep.subr.bf16.mxu0 0
        %951 = vmatpush1.bf16.msra.mxu0 %v876
        %952 = vmatprep.subr.bf16.mxu0 0
        %953 = vmatpush1.bf16.msra.mxu0 %v877
        %954 = vmatprep.subr.bf16.mxu0 0
        %955 = vmatpush1.bf16.msra.mxu0 %v878
        %956 = vmatprep.subr.bf16.mxu0 0
        %957 = vmatpush1.bf16.msra.mxu0 %v879
        %958 = vmatprep.subr.bf16.mxu0 0
        %959 = vmatpush1.bf16.msra.mxu0 %v880
        %960 = vmatprep.subr.bf16.mxu0 0
        %961 = vmatpush1.bf16.msra.mxu0 %v881
        %962 = vmatprep.mubr.bf16.mxu0 %v478
        %963 = vmatmul.mubr.bf16.gmra.mrb[0].mxu0 %v477
        %v964 = vpop.f32.mrb[0].mxu0
        %v965 = vadd.f32 0.0, %v964
        %v966 = vpop.f32.mrb[0].mxu0
        %v967 = vpop.f32.mrb[0].mxu0
        %v968 = vadd.f32 0.0, %v967
        %v969 = vpop.f32.mrb[0].mxu0
        %970 = vmatprep.mubr.bf16.mxu0 %v482
        %971 = vmatmul.mubr.bf16.gmra.mrb[0].mxu0 %v481
        %v972 = vpop.f32.mrb[0].mxu0
        %v973 = vadd.f32 0.0, %v972
        %v974 = vpop.f32.mrb[0].mxu0
        %v975 = vpop.f32.mrb[0].mxu0
        %v976 = vadd.f32 0.0, %v975
        %v977 = vpop.f32.mrb[0].mxu0
        %978 = vmatprep.mubr.bf16.mxu0 %v486
        %979 = vmatmul.mubr.bf16.gmra.mrb[0].mxu0 %v485
        %v980 = vpop.f32.mrb[0].mxu0
        %v981 = vadd.f32 0.0, %v980
        %v982 = vpop.f32.mrb[0].mxu0
        %v983 = vpop.f32.mrb[0].mxu0
        %v984 = vadd.f32 0.0, %v983
        %v985 = vpop.f32.mrb[0].mxu0
        %986 = vmatprep.mubr.bf16.mxu0 %v490
        %987 = vmatmul.mubr.bf16.gmra.mrb[0].mxu0 %v489
        %v988 = vpop.f32.mrb[0].mxu0
        %v989 = vadd.f32 0.0, %v988
        %v990 = vpop.f32.mrb[0].mxu0
        %v991 = vpop.f32.mrb[0].mxu0
        %v992 = vadd.f32 0.0, %v991
        %v993 = vpop.f32.mrb[0].mxu0
        %994 = vmatprep.mubr.bf16.mxu0 %v494
        %995 = vmatmul.mubr.bf16.gmra.mrb[0].mxu0 %v493
        %v996 = vpop.f32.mrb[0].mxu0
        %v997 = vadd.f32 0.0, %v996
        %v998 = vpop.f32.mrb[0].mxu0
        %v999 = vpop.f32.mrb[0].mxu0
        %v1000 = vadd.f32 0.0, %v999
        %v1001 = vpop.f32.mrb[0].mxu0
        %1002 = vmatprep.mubr.bf16.mxu0 %v498
        %1003 = vmatmul.mubr.bf16.gmra.mrb[0].mxu0 %v497
        %v1004 = vpop.f32.mrb[0].mxu0
        %v1005 = vadd.f32 0.0, %v1004
        %v1006 = vpop.f32.mrb[0].mxu0
        %v1007 = vpop.f32.mrb[0].mxu0
        %v1008 = vadd.f32 0.0, %v1007
        %v1009 = vpop.f32.mrb[0].mxu0
        %1010 = vmatprep.mubr.bf16.mxu0 %v502
        %1011 = vmatmul.mubr.bf16.gmra.mrb[0].mxu0 %v501
        %v1012 = vpop.f32.mrb[0].mxu0
        %v1013 = vadd.f32 0.0, %v1012
        %v1014 = vpop.f32.mrb[0].mxu0
        %v1015 = vpop.f32.mrb[0].mxu0
        %v1016 = vadd.f32 0.0, %v1015
        %v1017 = vpop.f32.mrb[0].mxu0
        %1018 = vmatprep.mubr.bf16.mxu0 %v506
        %1019 = vmatmul.mubr.bf16.gmra.mrb[0].mxu0 %v505
        %v1020 = vpop.f32.mrb[0].mxu0
        %v1021 = vadd.f32 0.0, %v1020
        %v1022 = vpop.f32.mrb[0].mxu0
        %v1023 = vpop.f32.mrb[0].mxu0
        %v1024 = vadd.f32 0.0, %v1023
        %v1025 = vpop.f32.mrb[0].mxu0
        %1026 = vmatprep.mubr.bf16.mxu0 %v510
        %1027 = vmatmul.mubr.bf16.gmra.mrb[0].mxu0 %v509
        %v1028 = vpop.f32.mrb[0].mxu0
        %v1029 = vadd.f32 0.0, %v1028
        %v1030 = vpop.f32.mrb[0].mxu0
        %v1031 = vpop.f32.mrb[0].mxu0
        %v1032 = vadd.f32 0.0, %v1031
        %v1033 = vpop.f32.mrb[0].mxu0
        %1034 = vmatprep.mubr.bf16.mxu0 %v514
        %1035 = vmatmul.mubr.bf16.gmra.mrb[0].mxu0 %v513
        %v1036 = vpop.f32.mrb[0].mxu0
        %v1037 = vadd.f32 0.0, %v1036
        %v1038 = vpop.f32.mrb[0].mxu0
        %v1039 = vpop.f32.mrb[0].mxu0
        %v1040 = vadd.f32 0.0, %v1039
        %v1041 = vpop.f32.mrb[0].mxu0
        %1042 = vmatprep.mubr.bf16.mxu0 %v518
        %1043 = vmatmul.mubr.bf16.gmra.mrb[0].mxu0 %v517
        %v1044 = vpop.f32.mrb[0].mxu0
        %v1045 = vadd.f32 0.0, %v1044
        %v1046 = vpop.f32.mrb[0].mxu0
        %v1047 = vpop.f32.mrb[0].mxu0
        %v1048 = vadd.f32 0.0, %v1047
        %v1049 = vpop.f32.mrb[0].mxu0
        %1050 = vmatprep.mubr.bf16.mxu0 %v522
        %1051 = vmatmul.mubr.bf16.gmra.mrb[0].mxu0 %v521
        %v1052 = vpop.f32.mrb[0].mxu0
        %v1053 = vadd.f32 0.0, %v1052
        %v1054 = vpop.f32.mrb[0].mxu0
        %v1055 = vpop.f32.mrb[0].mxu0
        %v1056 = vadd.f32 0.0, %v1055
        %v1057 = vpop.f32.mrb[0].mxu0
        %1058 = vmatprep.mubr.bf16.mxu0 %v526
        %1059 = vmatmul.mubr.bf16.gmra.mrb[0].mxu0 %v525
        %v1060 = vpop.f32.mrb[0].mxu0
        %v1061 = vadd.f32 0.0, %v1060
        %v1062 = vpop.f32.mrb[0].mxu0
        %v1063 = vpop.f32.mrb[0].mxu0
        %v1064 = vadd.f32 0.0, %v1063
        %v1065 = vpop.f32.mrb[0].mxu0
        %1066 = vmatprep.mubr.bf16.mxu0 %v530
        %1067 = vmatmul.mubr.bf16.gmra.mrb[0].mxu0 %v529
        %v1068 = vpop.f32.mrb[0].mxu0
        %v1069 = vadd.f32 0.0, %v1068
        %v1070 = vpop.f32.mrb[0].mxu0
        %v1071 = vpop.f32.mrb[0].mxu0
        %v1072 = vadd.f32 0.0, %v1071
        %v1073 = vpop.f32.mrb[0].mxu0
        %1074 = vmatprep.mubr.bf16.mxu0 %v534
        %1075 = vmatmul.mubr.bf16.gmra.mrb[0].mxu0 %v533
        %v1076 = vpop.f32.mrb[0].mxu0
        %v1077 = vadd.f32 0.0, %v1076
        %v1078 = vpop.f32.mrb[0].mxu0
        %v1079 = vpop.f32.mrb[0].mxu0
        %v1080 = vadd.f32 0.0, %v1079
        %v1081 = vpop.f32.mrb[0].mxu0
        %1082 = vmatprep.mubr.bf16.mxu0 %v538
        %1083 = vmatmul.mubr.bf16.gmra.mrb[0].mxu0 %v537
        %v1084 = vpop.f32.mrb[0].mxu0
        %v1085 = vadd.f32 0.0, %v1084
        %v1086 = vpop.f32.mrb[0].mxu0
        %v1087 = vpop.f32.mrb[0].mxu0
        %v1088 = vadd.f32 0.0, %v1087
        %v1089 = vpop.f32.mrb[0].mxu0
        %1090 = vmatprep.mubr.bf16.mxu0 %v542
        %1091 = vmatmul.mubr.bf16.gmra.mrb[0].mxu0 %v541
        %v1092 = vpop.f32.mrb[0].mxu0
        %v1093 = vadd.f32 0.0, %v1092
        %v1094 = vpop.f32.mrb[0].mxu0
        %v1095 = vpop.f32.mrb[0].mxu0
        %v1096 = vadd.f32 0.0, %v1095
        %v1097 = vpop.f32.mrb[0].mxu0
        %1098 = vmatprep.mubr.bf16.mxu0 %v546
        %1099 = vmatmul.mubr.bf16.gmra.mrb[0].mxu0 %v545
        %v1100 = vpop.f32.mrb[0].mxu0
        %v1101 = vadd.f32 0.0, %v1100
        %v1102 = vpop.f32.mrb[0].mxu0
        %v1103 = vpop.f32.mrb[0].mxu0
        %v1104 = vadd.f32 0.0, %v1103
        %v1105 = vpop.f32.mrb[0].mxu0
        %1106 = vmatprep.mubr.bf16.mxu0 %v550
        %1107 = vmatmul.mubr.bf16.gmra.mrb[0].mxu0 %v549
        %v1108 = vpop.f32.mrb[0].mxu0
        %v1109 = vadd.f32 0.0, %v1108
        %v1110 = vpop.f32.mrb[0].mxu0
        %v1111 = vpop.f32.mrb[0].mxu0
        %v1112 = vadd.f32 0.0, %v1111
        %v1113 = vpop.f32.mrb[0].mxu0
        %1114 = vmatprep.mubr.bf16.mxu0 %v554
        %1115 = vmatmul.mubr.bf16.gmra.mrb[0].mxu0 %v553
        %v1116 = vpop.f32.mrb[0].mxu0
        %v1117 = vadd.f32 0.0, %v1116
        %v1118 = vpop.f32.mrb[0].mxu0
        %v1119 = vpop.f32.mrb[0].mxu0
        %v1120 = vadd.f32 0.0, %v1119
        %v1121 = vpop.f32.mrb[0].mxu0
        %1122 = vmatprep.mubr.bf16.mxu0 %v558
        %1123 = vmatmul.mubr.bf16.gmra.mrb[0].mxu0 %v557
        %v1124 = vpop.f32.mrb[0].mxu0
        %v1125 = vadd.f32 0.0, %v1124
        %v1126 = vpop.f32.mrb[0].mxu0
        %v1127 = vpop.f32.mrb[0].mxu0
        %v1128 = vadd.f32 0.0, %v1127
        %v1129 = vpop.f32.mrb[0].mxu0
        %1130 = vmatprep.mubr.bf16.mxu0 %v562
        %1131 = vmatmul.mubr.bf16.gmra.mrb[0].mxu0 %v561
        %v1132 = vpop.f32.mrb[0].mxu0
        %v1133 = vadd.f32 0.0, %v1132
        %v1134 = vpop.f32.mrb[0].mxu0
        %v1135 = vpop.f32.mrb[0].mxu0
        %v1136 = vadd.f32 0.0, %v1135
        %v1137 = vpop.f32.mrb[0].mxu0
        %1138 = vmatprep.mubr.bf16.mxu0 %v566
        %1139 = vmatmul.mubr.bf16.gmra.mrb[0].mxu0 %v565
        %v1140 = vpop.f32.mrb[0].mxu0
        %v1141 = vadd.f32 0.0, %v1140
        %v1142 = vpop.f32.mrb[0].mxu0
        %v1143 = vpop.f32.mrb[0].mxu0
        %v1144 = vadd.f32 0.0, %v1143
        %v1145 = vpop.f32.mrb[0].mxu0
        %1146 = vmatprep.mubr.bf16.mxu0 %v570
        %1147 = vmatmul.mubr.bf16.gmra.mrb[0].mxu0 %v569
        %v1148 = vpop.f32.mrb[0].mxu0
        %v1149 = vadd.f32 0.0, %v1148
        %v1150 = vpop.f32.mrb[0].mxu0
        %v1151 = vpop.f32.mrb[0].mxu0
        %v1152 = vadd.f32 0.0, %v1151
        %v1153 = vpop.f32.mrb[0].mxu0
        %1154 = vmatprep.mubr.bf16.mxu0 %v574
        %1155 = vmatmul.mubr.bf16.gmra.mrb[0].mxu0 %v573
        %v1156 = vpop.f32.mrb[0].mxu0
        %v1157 = vadd.f32 0.0, %v1156
        %v1158 = vpop.f32.mrb[0].mxu0
        %v1159 = vpop.f32.mrb[0].mxu0
        %v1160 = vadd.f32 0.0, %v1159
        %v1161 = vpop.f32.mrb[0].mxu0
        %1162 = vmatprep.mubr.bf16.mxu0 %v578
        %1163 = vmatmul.mubr.bf16.gmra.mrb[0].mxu0 %v577
        %v1164 = vpop.f32.mrb[0].mxu0
        %v1165 = vadd.f32 0.0, %v1164
        %v1166 = vpop.f32.mrb[0].mxu0
        %v1167 = vpop.f32.mrb[0].mxu0
        %v1168 = vadd.f32 0.0, %v1167
        %v1169 = vpop.f32.mrb[0].mxu0
        %1170 = vmatprep.mubr.bf16.mxu0 %v582
        %1171 = vmatmul.mubr.bf16.gmra.mrb[0].mxu0 %v581
        %v1172 = vpop.f32.mrb[0].mxu0
        %v1173 = vadd.f32 0.0, %v1172
        %v1174 = vpop.f32.mrb[0].mxu0
        %v1175 = vpop.f32.mrb[0].mxu0
        %v1176 = vadd.f32 0.0, %v1175
        %v1177 = vpop.f32.mrb[0].mxu0
        %1178 = vmatprep.mubr.bf16.mxu0 %v586
        %1179 = vmatmul.mubr.bf16.gmra.mrb[0].mxu0 %v585
        %v1180 = vpop.f32.mrb[0].mxu0
        %v1181 = vadd.f32 0.0, %v1180
        %v1182 = vpop.f32.mrb[0].mxu0
        %v1183 = vpop.f32.mrb[0].mxu0
        %v1184 = vadd.f32 0.0, %v1183
        %v1185 = vpop.f32.mrb[0].mxu0
        %1186 = vmatprep.mubr.bf16.mxu0 %v590
        %1187 = vmatmul.mubr.bf16.gmra.mrb[0].mxu0 %v589
        %v1188 = vpop.f32.mrb[0].mxu0
        %v1189 = vadd.f32 0.0, %v1188
        %v1190 = vpop.f32.mrb[0].mxu0
        %v1191 = vpop.f32.mrb[0].mxu0
        %v1192 = vadd.f32 0.0, %v1191
        %v1193 = vpop.f32.mrb[0].mxu0
        %1194 = vmatprep.mubr.bf16.mxu0 %v594
        %1195 = vmatmul.mubr.bf16.gmra.mrb[0].mxu0 %v593
        %v1196 = vpop.f32.mrb[0].mxu0
        %v1197 = vadd.f32 0.0, %v1196
        %v1198 = vpop.f32.mrb[0].mxu0
        %v1199 = vpop.f32.mrb[0].mxu0
        %v1200 = vadd.f32 0.0, %v1199
        %v1201 = vpop.f32.mrb[0].mxu0
        %1202 = vmatprep.mubr.bf16.mxu0 %v598
        %1203 = vmatmul.mubr.bf16.gmra.mrb[0].mxu0 %v597
        %v1204 = vpop.f32.mrb[0].mxu0
        %v1205 = vadd.f32 0.0, %v1204
        %v1206 = vpop.f32.mrb[0].mxu0
        %v1207 = vpop.f32.mrb[0].mxu0
        %v1208 = vadd.f32 0.0, %v1207
        %v1209 = vpop.f32.mrb[0].mxu0
        %1210 = vmatprep.mubr.bf16.mxu0 %v602
        %1211 = vmatmul.mubr.bf16.gmra.mrb[0].mxu0 %v601
        %v1212 = vpop.f32.mrb[0].mxu0
        %v1213 = vadd.f32 0.0, %v1212
        %v1214 = vpop.f32.mrb[0].mxu0
        %v1215 = vpop.f32.mrb[0].mxu0
        %v1216 = vadd.f32 0.0, %v1215
        %v1217 = vpop.f32.mrb[0].mxu0
        %1218 = vdwg.mxu0
        %1219 = vmatprep.subr.bf16.mxu0 0
        %1220 = vmatpush1.bf16.msra.mxu0 %v882
        %1221 = vmatprep.subr.bf16.mxu0 0
        %1222 = vmatpush1.bf16.msra.mxu0 %v883
        %1223 = vmatprep.subr.bf16.mxu0 0
        %1224 = vmatpush1.bf16.msra.mxu0 %v884
        %1225 = vmatprep.subr.bf16.mxu0 0
        %1226 = vmatpush1.bf16.msra.mxu0 %v885
        %1227 = vmatprep.subr.bf16.mxu0 0
        %1228 = vmatpush1.bf16.msra.mxu0 %v886
        %1229 = vmatprep.subr.bf16.mxu0 0
        %1230 = vmatpush1.bf16.msra.mxu0 %v887
        %1231 = vmatprep.subr.bf16.mxu0 0
        %1232 = vmatpush1.bf16.msra.mxu0 %v888
        %1233 = vmatprep.subr.bf16.mxu0 0
        %1234 = vmatpush1.bf16.msra.mxu0 %v889
        %1235 = vmatprep.subr.bf16.mxu0 0
        %1236 = vmatpush1.bf16.msra.mxu0 %v890
        %1237 = vmatprep.subr.bf16.mxu0 0
        %1238 = vmatpush1.bf16.msra.mxu0 %v891
        %1239 = vmatprep.subr.bf16.mxu0 0
        %1240 = vmatpush1.bf16.msra.mxu0 %v892
        %1241 = vmatprep.subr.bf16.mxu0 0
        %1242 = vmatpush1.bf16.msra.mxu0 %v893
        %1243 = vmatprep.subr.bf16.mxu0 0
        %1244 = vmatpush1.bf16.msra.mxu0 %v894
        %1245 = vmatprep.subr.bf16.mxu0 0
        %1246 = vmatpush1.bf16.msra.mxu0 %v895
        %1247 = vmatprep.subr.bf16.mxu0 0
        %1248 = vmatpush1.bf16.msra.mxu0 %v896
        %1249 = vmatprep.subr.bf16.mxu0 0
        %1250 = vmatpush1.bf16.msra.mxu0 %v897
        %1251 = vmatprep.mubr.bf16.mxu0 %v480
        %1252 = vmatmul.mubr.bf16.gmra.mrb[0].mxu0 %v479
        %v1253 = vpop.f32.mrb[0].mxu0
        %v1254 = vadd.f32 %v965, %v1253
        %v1255 = vpop.f32.mrb[0].mxu0
        %v1256 = vpop.f32.mrb[0].mxu0
        %v1257 = vadd.f32 %v968, %v1256
        %v1258 = vpop.f32.mrb[0].mxu0
        %1259 = vmatprep.mubr.bf16.mxu0 %v484
        %1260 = vmatmul.mubr.bf16.gmra.mrb[0].mxu0 %v483
        %v1261 = vpop.f32.mrb[0].mxu0
        %v1262 = vadd.f32 %v973, %v1261
        %v1263 = vpop.f32.mrb[0].mxu0
        %v1264 = vpop.f32.mrb[0].mxu0
        %v1265 = vadd.f32 %v976, %v1264
        %v1266 = vpop.f32.mrb[0].mxu0
        %1267 = vmatprep.mubr.bf16.mxu0 %v488
        %1268 = vmatmul.mubr.bf16.gmra.mrb[0].mxu0 %v487
        %v1269 = vpop.f32.mrb[0].mxu0
        %v1270 = vadd.f32 %v981, %v1269
        %v1271 = vpop.f32.mrb[0].mxu0
        %v1272 = vpop.f32.mrb[0].mxu0
        %v1273 = vadd.f32 %v984, %v1272
        %v1274 = vpop.f32.mrb[0].mxu0
        %1275 = vmatprep.mubr.bf16.mxu0 %v492
        %1276 = vmatmul.mubr.bf16.gmra.mrb[0].mxu0 %v491
        %v1277 = vpop.f32.mrb[0].mxu0
        %v1278 = vadd.f32 %v989, %v1277
        %v1279 = vpop.f32.mrb[0].mxu0
        %v1280 = vpop.f32.mrb[0].mxu0
        %v1281 = vadd.f32 %v992, %v1280
        %v1282 = vpop.f32.mrb[0].mxu0
        %1283 = vmatprep.mubr.bf16.mxu0 %v496
        %1284 = vmatmul.mubr.bf16.gmra.mrb[0].mxu0 %v495
        %v1285 = vpop.f32.mrb[0].mxu0
        %v1286 = vadd.f32 %v997, %v1285
        %v1287 = vpop.f32.mrb[0].mxu0
        %v1288 = vpop.f32.mrb[0].mxu0
        %v1289 = vadd.f32 %v1000, %v1288
        %v1290 = vpop.f32.mrb[0].mxu0
        %1291 = vmatprep.mubr.bf16.mxu0 %v500
        %1292 = vmatmul.mubr.bf16.gmra.mrb[0].mxu0 %v499
        %v1293 = vpop.f32.mrb[0].mxu0
        %v1294 = vadd.f32 %v1005, %v1293
        %v1295 = vpop.f32.mrb[0].mxu0
        %v1296 = vpop.f32.mrb[0].mxu0
        %v1297 = vadd.f32 %v1008, %v1296
        %v1298 = vpop.f32.mrb[0].mxu0
        %1299 = vmatprep.mubr.bf16.mxu0 %v504
        %1300 = vmatmul.mubr.bf16.gmra.mrb[0].mxu0 %v503
        %v1301 = vpop.f32.mrb[0].mxu0
        %v1302 = vadd.f32 %v1013, %v1301
        %v1303 = vpop.f32.mrb[0].mxu0
        %v1304 = vpop.f32.mrb[0].mxu0
        %v1305 = vadd.f32 %v1016, %v1304
        %v1306 = vpop.f32.mrb[0].mxu0
        %1307 = vmatprep.mubr.bf16.mxu0 %v508
        %1308 = vmatmul.mubr.bf16.gmra.mrb[0].mxu0 %v507
        %v1309 = vpop.f32.mrb[0].mxu0
        %v1310 = vadd.f32 %v1021, %v1309
        %v1311 = vpop.f32.mrb[0].mxu0
        %v1312 = vpop.f32.mrb[0].mxu0
        %v1313 = vadd.f32 %v1024, %v1312
        %v1314 = vpop.f32.mrb[0].mxu0
        %1315 = vmatprep.mubr.bf16.mxu0 %v512
        %1316 = vmatmul.mubr.bf16.gmra.mrb[0].mxu0 %v511
        %v1317 = vpop.f32.mrb[0].mxu0
        %v1318 = vadd.f32 %v1029, %v1317
        %v1319 = vpop.f32.mrb[0].mxu0
        %v1320 = vpop.f32.mrb[0].mxu0
        %v1321 = vadd.f32 %v1032, %v1320
        %v1322 = vpop.f32.mrb[0].mxu0
        %1323 = vmatprep.mubr.bf16.mxu0 %v516
        %1324 = vmatmul.mubr.bf16.gmra.mrb[0].mxu0 %v515
        %v1325 = vpop.f32.mrb[0].mxu0
        %v1326 = vadd.f32 %v1037, %v1325
        %v1327 = vpop.f32.mrb[0].mxu0
        %v1328 = vpop.f32.mrb[0].mxu0
        %v1329 = vadd.f32 %v1040, %v1328
        %v1330 = vpop.f32.mrb[0].mxu0
        %1331 = vmatprep.mubr.bf16.mxu0 %v520
        %1332 = vmatmul.mubr.bf16.gmra.mrb[0].mxu0 %v519
        %v1333 = vpop.f32.mrb[0].mxu0
        %v1334 = vadd.f32 %v1045, %v1333
        %v1335 = vpop.f32.mrb[0].mxu0
        %v1336 = vpop.f32.mrb[0].mxu0
        %v1337 = vadd.f32 %v1048, %v1336
        %v1338 = vpop.f32.mrb[0].mxu0
        %1339 = vmatprep.mubr.bf16.mxu0 %v524
        %1340 = vmatmul.mubr.bf16.gmra.mrb[0].mxu0 %v523
        %v1341 = vpop.f32.mrb[0].mxu0
        %v1342 = vadd.f32 %v1053, %v1341
        %v1343 = vpop.f32.mrb[0].mxu0
        %v1344 = vpop.f32.mrb[0].mxu0
        %v1345 = vadd.f32 %v1056, %v1344
        %v1346 = vpop.f32.mrb[0].mxu0
        %1347 = vmatprep.mubr.bf16.mxu0 %v528
        %1348 = vmatmul.mubr.bf16.gmra.mrb[0].mxu0 %v527
        %v1349 = vpop.f32.mrb[0].mxu0
        %v1350 = vadd.f32 %v1061, %v1349
        %v1351 = vpop.f32.mrb[0].mxu0
        %v1352 = vpop.f32.mrb[0].mxu0
        %v1353 = vadd.f32 %v1064, %v1352
        %v1354 = vpop.f32.mrb[0].mxu0
        %1355 = vmatprep.mubr.bf16.mxu0 %v532
        %1356 = vmatmul.mubr.bf16.gmra.mrb[0].mxu0 %v531
        %v1357 = vpop.f32.mrb[0].mxu0
        %v1358 = vadd.f32 %v1069, %v1357
        %v1359 = vpop.f32.mrb[0].mxu0
        %v1360 = vpop.f32.mrb[0].mxu0
        %v1361 = vadd.f32 %v1072, %v1360
        %v1362 = vpop.f32.mrb[0].mxu0
        %1363 = vmatprep.mubr.bf16.mxu0 %v536
        %1364 = vmatmul.mubr.bf16.gmra.mrb[0].mxu0 %v535
        %v1365 = vpop.f32.mrb[0].mxu0
        %v1366 = vadd.f32 %v1077, %v1365
        %v1367 = vpop.f32.mrb[0].mxu0
        %v1368 = vpop.f32.mrb[0].mxu0
        %v1369 = vadd.f32 %v1080, %v1368
        %v1370 = vpop.f32.mrb[0].mxu0
        %1371 = vmatprep.mubr.bf16.mxu0 %v540
        %1372 = vmatmul.mubr.bf16.gmra.mrb[0].mxu0 %v539
        %v1373 = vpop.f32.mrb[0].mxu0
        %v1374 = vadd.f32 %v1085, %v1373
        %v1375 = vpop.f32.mrb[0].mxu0
        %v1376 = vpop.f32.mrb[0].mxu0
        %v1377 = vadd.f32 %v1088, %v1376
        %v1378 = vpop.f32.mrb[0].mxu0
        %1379 = vmatprep.mubr.bf16.mxu0 %v544
        %1380 = vmatmul.mubr.bf16.gmra.mrb[0].mxu0 %v543
        %v1381 = vpop.f32.mrb[0].mxu0
        %v1382 = vadd.f32 %v1093, %v1381
        %v1383 = vpop.f32.mrb[0].mxu0
        %v1384 = vpop.f32.mrb[0].mxu0
        %v1385 = vadd.f32 %v1096, %v1384
        %v1386 = vpop.f32.mrb[0].mxu0
        %1387 = vmatprep.mubr.bf16.mxu0 %v548
        %1388 = vmatmul.mubr.bf16.gmra.mrb[0].mxu0 %v547
        %v1389 = vpop.f32.mrb[0].mxu0
        %v1390 = vadd.f32 %v1101, %v1389
        %v1391 = vpop.f32.mrb[0].mxu0
        %v1392 = vpop.f32.mrb[0].mxu0
        %v1393 = vadd.f32 %v1104, %v1392
        %v1394 = vpop.f32.mrb[0].mxu0
        %1395 = vmatprep.mubr.bf16.mxu0 %v552
        %1396 = vmatmul.mubr.bf16.gmra.mrb[0].mxu0 %v551
        %v1397 = vpop.f32.mrb[0].mxu0
        %v1398 = vadd.f32 %v1109, %v1397
        %v1399 = vpop.f32.mrb[0].mxu0
        %v1400 = vpop.f32.mrb[0].mxu0
        %v1401 = vadd.f32 %v1112, %v1400
        %v1402 = vpop.f32.mrb[0].mxu0
        %1403 = vmatprep.mubr.bf16.mxu0 %v556
        %1404 = vmatmul.mubr.bf16.gmra.mrb[0].mxu0 %v555
        %v1405 = vpop.f32.mrb[0].mxu0
        %v1406 = vadd.f32 %v1117, %v1405
        %v1407 = vpop.f32.mrb[0].mxu0
        %v1408 = vpop.f32.mrb[0].mxu0
        %v1409 = vadd.f32 %v1120, %v1408
        %v1410 = vpop.f32.mrb[0].mxu0
        %1411 = vmatprep.mubr.bf16.mxu0 %v560
        %1412 = vmatmul.mubr.bf16.gmra.mrb[0].mxu0 %v559
        %v1413 = vpop.f32.mrb[0].mxu0
        %v1414 = vadd.f32 %v1125, %v1413
        %v1415 = vpop.f32.mrb[0].mxu0
        %v1416 = vpop.f32.mrb[0].mxu0
        %v1417 = vadd.f32 %v1128, %v1416
        %v1418 = vpop.f32.mrb[0].mxu0
        %1419 = vmatprep.mubr.bf16.mxu0 %v564
        %1420 = vmatmul.mubr.bf16.gmra.mrb[0].mxu0 %v563
        %v1421 = vpop.f32.mrb[0].mxu0
        %v1422 = vadd.f32 %v1133, %v1421
        %v1423 = vpop.f32.mrb[0].mxu0
        %v1424 = vpop.f32.mrb[0].mxu0
        %v1425 = vadd.f32 %v1136, %v1424
        %v1426 = vpop.f32.mrb[0].mxu0
        %1427 = vmatprep.mubr.bf16.mxu0 %v568
        %1428 = vmatmul.mubr.bf16.gmra.mrb[0].mxu0 %v567
        %v1429 = vpop.f32.mrb[0].mxu0
        %v1430 = vadd.f32 %v1141, %v1429
        %v1431 = vpop.f32.mrb[0].mxu0
        %v1432 = vpop.f32.mrb[0].mxu0
        %v1433 = vadd.f32 %v1144, %v1432
        %v1434 = vpop.f32.mrb[0].mxu0
        %1435 = vmatprep.mubr.bf16.mxu0 %v572
        %1436 = vmatmul.mubr.bf16.gmra.mrb[0].mxu0 %v571
        %v1437 = vpop.f32.mrb[0].mxu0
        %v1438 = vadd.f32 %v1149, %v1437
        %v1439 = vpop.f32.mrb[0].mxu0
        %v1440 = vpop.f32.mrb[0].mxu0
        %v1441 = vadd.f32 %v1152, %v1440
        %v1442 = vpop.f32.mrb[0].mxu0
        %1443 = vmatprep.mubr.bf16.mxu0 %v576
        %1444 = vmatmul.mubr.bf16.gmra.mrb[0].mxu0 %v575
        %v1445 = vpop.f32.mrb[0].mxu0
        %v1446 = vadd.f32 %v1157, %v1445
        %v1447 = vpop.f32.mrb[0].mxu0
        %v1448 = vpop.f32.mrb[0].mxu0
        %v1449 = vadd.f32 %v1160, %v1448
        %v1450 = vpop.f32.mrb[0].mxu0
        %1451 = vmatprep.mubr.bf16.mxu0 %v580
        %1452 = vmatmul.mubr.bf16.gmra.mrb[0].mxu0 %v579
        %v1453 = vpop.f32.mrb[0].mxu0
        %v1454 = vadd.f32 %v1165, %v1453
        %v1455 = vpop.f32.mrb[0].mxu0
        %v1456 = vpop.f32.mrb[0].mxu0
        %v1457 = vadd.f32 %v1168, %v1456
        %v1458 = vpop.f32.mrb[0].mxu0
        %1459 = vmatprep.mubr.bf16.mxu0 %v584
        %1460 = vmatmul.mubr.bf16.gmra.mrb[0].mxu0 %v583
        %v1461 = vpop.f32.mrb[0].mxu0
        %v1462 = vadd.f32 %v1173, %v1461
        %v1463 = vpop.f32.mrb[0].mxu0
        %v1464 = vpop.f32.mrb[0].mxu0
        %v1465 = vadd.f32 %v1176, %v1464
        %v1466 = vpop.f32.mrb[0].mxu0
        %1467 = vmatprep.mubr.bf16.mxu0 %v588
        %1468 = vmatmul.mubr.bf16.gmra.mrb[0].mxu0 %v587
        %v1469 = vpop.f32.mrb[0].mxu0
        %v1470 = vadd.f32 %v1181, %v1469
        %v1471 = vpop.f32.mrb[0].mxu0
        %v1472 = vpop.f32.mrb[0].mxu0
        %v1473 = vadd.f32 %v1184, %v1472
        %v1474 = vpop.f32.mrb[0].mxu0
        %1475 = vmatprep.mubr.bf16.mxu0 %v592
        %1476 = vmatmul.mubr.bf16.gmra.mrb[0].mxu0 %v591
        %v1477 = vpop.f32.mrb[0].mxu0
        %v1478 = vadd.f32 %v1189, %v1477
        %v1479 = vpop.f32.mrb[0].mxu0
        %v1480 = vpop.f32.mrb[0].mxu0
        %v1481 = vadd.f32 %v1192, %v1480
        %v1482 = vpop.f32.mrb[0].mxu0
        %1483 = vmatprep.mubr.bf16.mxu0 %v596
        %1484 = vmatmul.mubr.bf16.gmra.mrb[0].mxu0 %v595
        %v1485 = vpop.f32.mrb[0].mxu0
        %v1486 = vadd.f32 %v1197, %v1485
        %v1487 = vpop.f32.mrb[0].mxu0
        %v1488 = vpop.f32.mrb[0].mxu0
        %v1489 = vadd.f32 %v1200, %v1488
        %v1490 = vpop.f32.mrb[0].mxu0
        %1491 = vmatprep.mubr.bf16.mxu0 %v600
        %1492 = vmatmul.mubr.bf16.gmra.mrb[0].mxu0 %v599
        %v1493 = vpop.f32.mrb[0].mxu0
        %v1494 = vadd.f32 %v1205, %v1493
        %v1495 = vpop.f32.mrb[0].mxu0
        %v1496 = vpop.f32.mrb[0].mxu0
        %v1497 = vadd.f32 %v1208, %v1496
        %v1498 = vpop.f32.mrb[0].mxu0
        %1499 = vmatprep.mubr.bf16.mxu0 %v604
        %1500 = vmatmul.mubr.bf16.gmra.mrb[0].mxu0 %v603
        %v1501 = vpop.f32.mrb[0].mxu0
        %v1502 = vadd.f32 %v1213, %v1501
        %v1503 = vpop.f32.mrb[0].mxu0
        %v1504 = vpop.f32.mrb[0].mxu0
        %v1505 = vadd.f32 %v1216, %v1504
        %v1506 = vpop.f32.mrb[0].mxu0
        %1507 = vdwg.mxu0
        %v1508 = vadd.f32 %v605, %v1254
        %v1509 = vadd.f32 %v606, %v1257
        %v1510 = vadd.f32 %v607, %v1262
        %v1511 = vadd.f32 %v608, %v1265
        %v1512 = vadd.f32 %v609, %v1270
        %v1513 = vadd.f32 %v610, %v1273
        %v1514 = vadd.f32 %v611, %v1278
        %v1515 = vadd.f32 %v612, %v1281
        %v1516 = vadd.f32 %v613, %v1286
        %v1517 = vadd.f32 %v614, %v1289
        %v1518 = vadd.f32 %v615, %v1294
        %v1519 = vadd.f32 %v616, %v1297
        %v1520 = vadd.f32 %v617, %v1302
        %v1521 = vadd.f32 %v618, %v1305
        %v1522 = vadd.f32 %v619, %v1310
        %v1523 = vadd.f32 %v620, %v1313
        %v1524 = vadd.f32 %v621, %v1318
        %v1525 = vadd.f32 %v622, %v1321
        %v1526 = vadd.f32 %v623, %v1326
        %v1527 = vadd.f32 %v624, %v1329
        %v1528 = vadd.f32 %v625, %v1334
        %v1529 = vadd.f32 %v626, %v1337
        %v1530 = vadd.f32 %v627, %v1342
        %v1531 = vadd.f32 %v628, %v1345
        %v1532 = vadd.f32 %v629, %v1350
        %v1533 = vadd.f32 %v630, %v1353
        %v1534 = vadd.f32 %v631, %v1358
        %v1535 = vadd.f32 %v632, %v1361
        %v1536 = vadd.f32 %v633, %v1366
        %v1537 = vadd.f32 %v634, %v1369
        %v1538 = vadd.f32 %v635, %v1374
        %v1539 = vadd.f32 %v636, %v1377
        %v1540 = vadd.f32 %v637, %v1382
        %v1541 = vadd.f32 %v638, %v1385
        %v1542 = vadd.f32 %v639, %v1390
        %v1543 = vadd.f32 %v640, %v1393
        %v1544 = vadd.f32 %v641, %v1398
        %v1545 = vadd.f32 %v642, %v1401
        %v1546 = vadd.f32 %v643, %v1406
        %v1547 = vadd.f32 %v644, %v1409
        %v1548 = vadd.f32 %v645, %v1414
        %v1549 = vadd.f32 %v646, %v1417
        %v1550 = vadd.f32 %v647, %v1422
        %v1551 = vadd.f32 %v648, %v1425
        %v1552 = vadd.f32 %v649, %v1430
        %v1553 = vadd.f32 %v650, %v1433
        %v1554 = vadd.f32 %v651, %v1438
        %v1555 = vadd.f32 %v652, %v1441
        %v1556 = vadd.f32 %v653, %v1446
        %v1557 = vadd.f32 %v654, %v1449
        %v1558 = vadd.f32 %v655, %v1454
        %v1559 = vadd.f32 %v656, %v1457
        %v1560 = vadd.f32 %v657, %v1462
        %v1561 = vadd.f32 %v658, %v1465
        %v1562 = vadd.f32 %v659, %v1470
        %v1563 = vadd.f32 %v660, %v1473
        %v1564 = vadd.f32 %v661, %v1478
        %v1565 = vadd.f32 %v662, %v1481
        %v1566 = vadd.f32 %v663, %v1486
        %v1567 = vadd.f32 %v664, %v1489
        %v1568 = vadd.f32 %v665, %v1494
        %v1569 = vadd.f32 %v666, %v1497
        %v1570 = vadd.f32 %v667, %v1502
        %v1571 = vadd.f32 %v668, %v1505
        %1572 = vst [vmem:[%s335] sm:$0xff] %v1508
        %1573 = vst [vmem:[%s335 + $0x8] sm:$0xff] %v1509
        %1574 = vst [vmem:[%s335 + $0x10] sm:$0xff] %v1510
        %1575 = vst [vmem:[%s335 + $0x18] sm:$0xff] %v1511
        %1576 = vst [vmem:[%s335 + $0x20] sm:$0xff] %v1512
        %1577 = vst [vmem:[%s335 + $0x28] sm:$0xff] %v1513
        %1578 = vst [vmem:[%s335 + $0x30] sm:$0xff] %v1514
        %1579 = vst [vmem:[%s335 + $0x38] sm:$0xff] %v1515
        %1580 = vst [vmem:[%s335 + $0x40] sm:$0xff] %v1516
        %1581 = vst [vmem:[%s335 + $0x48] sm:$0xff] %v1517
        %1582 = vst [vmem:[%s335 + $0x50] sm:$0xff] %v1518
        %1583 = vst [vmem:[%s335 + $0x58] sm:$0xff] %v1519
        %1584 = vst [vmem:[%s335 + $0x60] sm:$0xff] %v1520
        %1585 = vst [vmem:[%s335 + $0x68] sm:$0xff] %v1521
        %1586 = vst [vmem:[%s335 + $0x70] sm:$0xff] %v1522
        %1587 = vst [vmem:[%s335 + $0x78] sm:$0xff] %v1523
        %1588 = vst [vmem:[%s335 + $0x80] sm:$0xff] %v1524
        %1589 = vst [vmem:[%s335 + $0x88] sm:$0xff] %v1525
        %1590 = vst [vmem:[%s335 + $0x90] sm:$0xff] %v1526
        %1591 = vst [vmem:[%s335 + $0x98] sm:$0xff] %v1527
        %1592 = vst [vmem:[%s335 + $0xa0] sm:$0xff] %v1528
        %1593 = vst [vmem:[%s335 + $0xa8] sm:$0xff] %v1529
        %1594 = vst [vmem:[%s335 + $0xb0] sm:$0xff] %v1530
        %1595 = vst [vmem:[%s335 + $0xb8] sm:$0xff] %v1531
        %1596 = vst [vmem:[%s335 + $0xc0] sm:$0xff] %v1532
        %1597 = vst [vmem:[%s335 + $0xc8] sm:$0xff] %v1533
        %1598 = vst [vmem:[%s335 + $0xd0] sm:$0xff] %v1534
        %1599 = vst [vmem:[%s335 + $0xd8] sm:$0xff] %v1535
        %1600 = vst [vmem:[%s335 + $0xe0] sm:$0xff] %v1536
        %1601 = vst [vmem:[%s335 + $0xe8] sm:$0xff] %v1537
        %1602 = vst [vmem:[%s335 + $0xf0] sm:$0xff] %v1538
        %1603 = vst [vmem:[%s335 + $0xf8] sm:$0xff] %v1539
        %1604 = vst [vmem:[%s335 + $0x100] sm:$0xff] %v1540
        %1605 = vst [vmem:[%s335 + $0x108] sm:$0xff] %v1541
        %1606 = vst [vmem:[%s335 + $0x110] sm:$0xff] %v1542
        %1607 = vst [vmem:[%s335 + $0x118] sm:$0xff] %v1543
        %1608 = vst [vmem:[%s335 + $0x120] sm:$0xff] %v1544
        %1609 = vst [vmem:[%s335 + $0x128] sm:$0xff] %v1545
        %1610 = vst [vmem:[%s335 + $0x130] sm:$0xff] %v1546
        %1611 = vst [vmem:[%s335 + $0x138] sm:$0xff] %v1547
        %1612 = vst [vmem:[%s335 + $0x140] sm:$0xff] %v1548
        %1613 = vst [vmem:[%s335 + $0x148] sm:$0xff] %v1549
        %1614 = vst [vmem:[%s335 + $0x150] sm:$0xff] %v1550
        %1615 = vst [vmem:[%s335 + $0x158] sm:$0xff] %v1551
        %1616 = vst [vmem:[%s335 + $0x160] sm:$0xff] %v1552
        %1617 = vst [vmem:[%s335 + $0x168] sm:$0xff] %v1553
        %1618 = vst [vmem:[%s335 + $0x170] sm:$0xff] %v1554
        %1619 = vst [vmem:[%s335 + $0x178] sm:$0xff] %v1555
        %1620 = vst [vmem:[%s335 + $0x180] sm:$0xff] %v1556
        %1621 = vst [vmem:[%s335 + $0x188] sm:$0xff] %v1557
        %1622 = vst [vmem:[%s335 + $0x190] sm:$0xff] %v1558
        %1623 = vst [vmem:[%s335 + $0x198] sm:$0xff] %v1559
        %1624 = vst [vmem:[%s335 + $0x1a0] sm:$0xff] %v1560
        %1625 = vst [vmem:[%s335 + $0x1a8] sm:$0xff] %v1561
        %1626 = vst [vmem:[%s335 + $0x1b0] sm:$0xff] %v1562
        %1627 = vst [vmem:[%s335 + $0x1b8] sm:$0xff] %v1563
        %1628 = vst [vmem:[%s335 + $0x1c0] sm:$0xff] %v1564
        %1629 = vst [vmem:[%s335 + $0x1c8] sm:$0xff] %v1565
        %1630 = vst [vmem:[%s335 + $0x1d0] sm:$0xff] %v1566
        %1631 = vst [vmem:[%s335 + $0x1d8] sm:$0xff] %v1567
        %1632 = vst [vmem:[%s335 + $0x1e0] sm:$0xff] %v1568
        %1633 = vst [vmem:[%s335 + $0x1e8] sm:$0xff] %v1569
        %1634 = vst [vmem:[%s335 + $0x1f0] sm:$0xff] %v1570
        %1635 = vst [vmem:[%s335 + $0x1f8] sm:$0xff] %v1571
        %s1636 = smul.u32 64, %s18
        %p1637 = scmp.lt.s32.totalorder %s1636, 127
        %s1638 = scalar_select %p1637, %s1636, 127
        %s1639 = smul.addr %s1638, 8
        %s1640 = scalar_lea.vmem %s3, %s1639
        // Predicated region
        $region60: #{gcn_forward.3} parent=50 // pred_check
          %p1641 = pneg %p114
        $region61: #{gcn_forward.3} parent=50 // pred_check_branch
          %1643 = sbr.rel (%p1641) target = $region63
        $region62: #{gcn_forward.3} parent=50 // pred_region
          %s1644 = smul.u32 64, %s18
        $region63: #{gcn_forward.3} parent=50 // pred_fallthru
          _
      $region51: #{gcn_forward.3} parent=5 // pred_fallthru
        _
      %p1645 = scmp.le.s32.totalorder 2, %s9
      // Predicated region
      $region64: #{gcn_forward.3} parent=5 // pred_check
        %p1646 = pneg %p1645
      $region65: #{gcn_forward.3} parent=5 // pred_check_branch
        %1648 = sbr.rel (%p1646) target = $region67
      $region66: #{gcn_forward.3} parent=5 // pred_region
        %s1649 = ssub.s32 %s9, 2
        // Predicated region
        $region68: #{gcn_forward.3} parent=66 // pred_check
          %p1650 = pneg %p120
        $region69: #{gcn_forward.3} parent=66 // pred_check_branch
          %1652 = sbr.rel (%p1650) target = $region71
        $region70: #{gcn_forward.3} parent=66 // pred_region
          %s1653 = smul.u32 64, %s20
          %p1654 = scmp.lt.s32.totalorder %s1653, 127
          %s1655 = scalar_select %p1654, %s1653, 127
          %s1656 = smul.addr %s1655, 8
          %s1657 = scalar_lea.vmem %s3, %s1656
        $region71: #{gcn_forward.3} parent=66 // pred_fallthru
          _
      $region67: #{gcn_forward.3} parent=5 // pred_fallthru
        _
    $region6: #{gcn_forward.3} parent=1 // loop_footer
      %s13 = sadd.s32 1, %s9
    $region7: #{gcn_forward.3} parent=1 // loop_footer_branch
      %8 = sbr.rel target = $region3
    $region8: #{gcn_forward.3} parent=1 // loop_exit
      _

// kernel: gcn_forward.2
$region0: #{gcn_forward.2}
  #allocation0 [shape = 'u32[]', space=smem, size = 0x4, offset = 0x4, fixed_abs, tag = 'smem constant byte address 0x4 - core index']
  #allocation1 [shape = 'u32[144,128]{1,0:T(1,128)}', space=vmem, size = 0x12000, scoped, tag = 'internal scratch']
  #allocation2 [shape = 'f32[512,128]{1,0:T(8,128)}', space=vmem, size = 0x40000, scoped, tag = 'scratch operand']
  %s0 = inlined_call_operand.vmem [shape: s8[1024,1024], index: 0, kind: input, shape index: {}]
  %s1 = inlined_call_operand.vmem [shape: bf16[1024,128], index: 1, kind: input, shape index: {}]
  %s2 = inlined_call_operand.vmem [shape: f32[1,128], index: 2, kind: input, shape index: {}]
  %s3 = inlined_call_operand.vmem [shape: f32[128,128], index: 3, kind: input, shape index: {}]
  %s4 = inlined_call_operand.vmem [shape: bf16[1024,128], index: 4, kind: output, shape index: {}]
  %s5 = sld [smem:[#allocation0]]
  $region80: #{gcn_forward.2} parent=0
    _
  %s7 = ssub.s32 1, %s5
  %s8 = scalar_select 0, %s7, %s5
  $region1: #{gcn_forward.2} parent=0
    #allocation3 [shape = 'u8[524288]{0}', space=vmem, size = 0x80000, scoped, tag = 'input window, operand 0']
    loop: start=0, step=1, limit=6
    $region2: #{gcn_forward.2} parent=1 // loop_pre_header
      _
    $region3: #{gcn_forward.2} parent=1 // loop_header
      %s10 = sphi 0, %s14
      %p11 = scmp.ge.s32.totalorder %s10, 6
      %s17 = sphi 0, %s29
      %s18 = sphi 0, %s25
      %s19 = sphi 0, %s17
      %s20 = sphi 0, %s18
      %s21 = sphi 0, %s19
      %s22 = sphi 0, %s20
      %s34 = sphi 0, %s36
      %s37 = sphi 0, %s34
      %s38 = sphi 0, %s37
      %s54 = sphi 0, %s38
      %s58 = sphi 0, %s58
      %s60 = sphi 0, %s58
      %s61 = sphi 0, %s60
      %s75 = sphi 0, %s61
      %s79 = sphi 0, %s79
      %s81 = sphi 0, %s79
      %s82 = sphi 0, %s81
      %s96 = sphi 0, %s82
      %s100 = sphi 0, %s100
      %s102 = sphi 0, %s100
      %s103 = sphi 0, %s102
      %s117 = sphi 0, %s103
      %s123 = sphi 0, %s125
      %s126 = sphi 0, %s123
      %s127 = sphi 0, %s126
      %s143 = sphi 0, %s127
    $region4: #{gcn_forward.2} parent=1 // loop_header_branch
      %13 = sbr.rel (%p11) target = $region8
    $region5: #{gcn_forward.2} parent=1 // loop_body
      %s15 = ssub.s32 %s10, 1
      %s16 = ssub.s32 %s10, 2
      %s23 = sadd.s32 1, %s18
      %p24 = scmp.ge.s32.totalorder %s23, 2
      %s25 = scalar_select %p24, 0, %s23
      %s26 = sadd.s32 1, %s17
      %s27 = scalar_select %p24, %s26, %s17
      %p28 = scmp.ge.s32.totalorder %s27, 2
      %s29 = scalar_select %p28, 0, %s27
      %s30 = ssub.s32 %s17, %s29
      %s31 = ssub.s32 %s18, %s25
      %s32 = sor.u32 %s30, %s31
      %p33 = scmp.eq.s32.totalorder %s32, 0
      %s35 = sadd.s32 %s34, 1
      %s36 = scalar_select %p33, %s34, %s35
      %p39 = pneg %p33
      %p40 = scmp.eq.s32.totalorder %s10, 3
      %p41 = por %p39, %p40
      %p42 = scmp.ne.s32.totalorder %s34, %s37
      %p43 = scmp.eq.s32.totalorder %s10, 0
      %p44 = por %p42, %p43
      %p45 = scmp.ne.s32.totalorder %s34, %s37
      %p46 = scmp.eq.s32.totalorder %s15, 3
      %p47 = por %p45, %p46
      %p48 = scmp.ne.s32.totalorder %s37, %s38
      %p49 = scmp.eq.s32.totalorder %s15, 0
      %p50 = por %p48, %p49
      %p51 = scmp.ne.s32.totalorder %s37, %s38
      %p52 = scmp.eq.s32.totalorder %s16, 3
      %p53 = por %p51, %p52
      %p55 = scmp.ne.s32.totalorder %s38, %s54
      %p56 = scmp.eq.s32.totalorder %s16, 0
      %p57 = por %p55, %p56
      %s59 = sadd.s32 %s58, 1
      %p62 = scmp.eq.s32.totalorder %s10, 3
      %p63 = scmp.ne.s32.totalorder %s58, %s60
      %p64 = scmp.eq.s32.totalorder %s10, 0
      %p65 = por %p63, %p64
      %p66 = scmp.ne.s32.totalorder %s58, %s60
      %p67 = scmp.eq.s32.totalorder %s15, 3
      %p68 = por %p66, %p67
      %p69 = scmp.ne.s32.totalorder %s60, %s61
      %p70 = scmp.eq.s32.totalorder %s15, 0
      %p71 = por %p69, %p70
      %p72 = scmp.ne.s32.totalorder %s60, %s61
      %p73 = scmp.eq.s32.totalorder %s16, 3
      %p74 = por %p72, %p73
      %p76 = scmp.ne.s32.totalorder %s61, %s75
      %p77 = scmp.eq.s32.totalorder %s16, 0
      %p78 = por %p76, %p77
      %s80 = sadd.s32 %s79, 1
      %p83 = scmp.eq.s32.totalorder %s10, 3
      %p84 = scmp.ne.s32.totalorder %s79, %s81
      %p85 = scmp.eq.s32.totalorder %s10, 0
      %p86 = por %p84, %p85
      %p87 = scmp.ne.s32.totalorder %s79, %s81
      %p88 = scmp.eq.s32.totalorder %s15, 3
      %p89 = por %p87, %p88
      %p90 = scmp.ne.s32.totalorder %s81, %s82
      %p91 = scmp.eq.s32.totalorder %s15, 0
      %p92 = por %p90, %p91
      %p93 = scmp.ne.s32.totalorder %s81, %s82
      %p94 = scmp.eq.s32.totalorder %s16, 3
      %p95 = por %p93, %p94
      %p97 = scmp.ne.s32.totalorder %s82, %s96
      %p98 = scmp.eq.s32.totalorder %s16, 0
      %p99 = por %p97, %p98
      %s101 = sadd.s32 %s100, 1
      %p104 = scmp.eq.s32.totalorder %s10, 3
      %p105 = scmp.ne.s32.totalorder %s100, %s102
      %p106 = scmp.eq.s32.totalorder %s10, 0
      %p107 = por %p105, %p106
      %p108 = scmp.ne.s32.totalorder %s100, %s102
      %p109 = scmp.eq.s32.totalorder %s15, 3
      %p110 = por %p108, %p109
      %p111 = scmp.ne.s32.totalorder %s102, %s103
      %p112 = scmp.eq.s32.totalorder %s15, 0
      %p113 = por %p111, %p112
      %p114 = scmp.ne.s32.totalorder %s102, %s103
      %p115 = scmp.eq.s32.totalorder %s16, 3
      %p116 = por %p114, %p115
      %p118 = scmp.ne.s32.totalorder %s103, %s117
      %p119 = scmp.eq.s32.totalorder %s16, 0
      %p120 = por %p118, %p119
      %s121 = ssub.s32 %s17, %s29
      %p122 = scmp.eq.s32.totalorder %s121, 0
      %s124 = sadd.s32 %s123, 1
      %s125 = scalar_select %p122, %s123, %s124
      %p128 = pneg %p122
      %p129 = scmp.eq.s32.totalorder %s10, 3
      %p130 = por %p128, %p129
      %p131 = scmp.ne.s32.totalorder %s123, %s126
      %p132 = scmp.eq.s32.totalorder %s10, 0
      %p133 = por %p131, %p132
      %p134 = scmp.ne.s32.totalorder %s123, %s126
      %p135 = scmp.eq.s32.totalorder %s15, 3
      %p136 = por %p134, %p135
      %p137 = scmp.ne.s32.totalorder %s126, %s127
      %p138 = scmp.eq.s32.totalorder %s15, 0
      %p139 = por %p137, %p138
      %p140 = scmp.ne.s32.totalorder %s126, %s127
      %p141 = scmp.eq.s32.totalorder %s16, 3
      %p142 = por %p140, %p141
      %p144 = scmp.ne.s32.totalorder %s127, %s143
      %p145 = scmp.eq.s32.totalorder %s16, 0
      %p146 = por %p144, %p145
      %p147 = scmp.le.s32.totalorder 1, %s10
      %p148 = scmp.lt.s32.totalorder %s10, 5
      %p149 = pnand %p147, %p148
      %p150 = pneg %p149
      // Predicated region
      $region9: #{gcn_forward.2} parent=5 // pred_check
        _
      $region10: #{gcn_forward.2} parent=5 // pred_check_branch
        %152 = sbr.rel (%p149) target = $region12
      $region11: #{gcn_forward.2} parent=5 // pred_region
        %s153 = ssub.s32 %s10, 1
        // Predicated region
        $region13: #{gcn_forward.2} parent=11 // pred_check
          %p154 = pneg %p71
        $region14: #{gcn_forward.2} parent=11 // pred_check_branch
          %156 = sbr.rel (%p154) target = $region16
        $region15: #{gcn_forward.2} parent=11 // pred_region
          _
        $region16: #{gcn_forward.2} parent=11 // pred_fallthru
          _
        // Predicated region
        $region17: #{gcn_forward.2} parent=11 // pred_check
          %p157 = pneg %p92
        $region18: #{gcn_forward.2} parent=11 // pred_check_branch
          %159 = sbr.rel (%p157) target = $region20
        $region19: #{gcn_forward.2} parent=11 // pred_region
          _
        $region20: #{gcn_forward.2} parent=11 // pred_fallthru
          _
        // Predicated region
        $region21: #{gcn_forward.2} parent=11 // pred_check
          %p160 = pneg %p113
        $region22: #{gcn_forward.2} parent=11 // pred_check_branch
          %162 = sbr.rel (%p160) target = $region24
        $region23: #{gcn_forward.2} parent=11 // pred_region
          _
        $region24: #{gcn_forward.2} parent=11 // pred_fallthru
          _
      $region12: #{gcn_forward.2} parent=5 // pred_fallthru
        _
      %p163 = scmp.lt.s32.totalorder %s10, 4
      // Predicated region
      $region25: #{gcn_forward.2} parent=5 // pred_check
        %p164 = pneg %p163
      $region26: #{gcn_forward.2} parent=5 // pred_check_branch
        %166 = sbr.rel (%p164) target = $region28
      $region27: #{gcn_forward.2} parent=5 // pred_region
        // Predicated region
        $region29: #{gcn_forward.2} parent=27 // pred_check
          %p167 = pneg %p44
        $region30: #{gcn_forward.2} parent=27 // pred_check_branch
          %169 = sbr.rel (%p167) target = $region32
        $region31: #{gcn_forward.2} parent=27 // pred_region
          %s170 = sand.u32 %s34, 1
          %s171 = sand.u32 %s34, 1
          %s172 = smul.addr %s171, 512
          %s173 = scalar_lea.vmem [#allocation3], %s172
          %s174 = smul.u32 16, %s17
          %s175 = smul.u32 4, %s18
          %s176 = smul.addr %s174, 8
          %s177 = sadd.s32 %s175, %s176
          %s178 = smul.addr %s177, 8
          %s179 = scalar_lea.vmem %s0, %s178
          // Predicated region
          $region33: #{gcn_forward.2} parent=31 // pred_check
            _
          $region34: #{gcn_forward.2} parent=31 // pred_check_branch
            %181 = sbr.rel (0) target = $region36
          $region35: #{gcn_forward.2} parent=31 // pred_region
            // Predicated region
            $region37: #{gcn_forward.2} parent=35 // pred_check
              _
            $region38: #{gcn_forward.2} parent=35 // pred_check_branch
              %183 = sbr.rel (0) target = $region40
            $region39: #{gcn_forward.2} parent=35 // pred_region
              loop: start=0, step=1, limit=1
              $region41: #{gcn_forward.2} parent=39 // loop_pre_header
                _
              $region42: #{gcn_forward.2} parent=39 // loop_header
                %s185 = sphi 0, %s189
                %p186 = scmp.ge.s32.totalorder %s185, 1
                %s190 = sphi %s179, %s179
                %s191 = sphi %s173, %s173
              $region43: #{gcn_forward.2} parent=39 // loop_header_branch
                %188 = sbr.rel (%p186) target = $region47
              $region44: #{gcn_forward.2} parent=39 // loop_body
                %v192 = vld [vmem:[%s190] sm:$0xff]
                %193 = vst [vmem:[%s191] sm:$0xff] %v192
                %v194 = vld [vmem:[%s190 + $0x8] sm:$0xff]
                %195 = vst [vmem:[%s191 + $0x8] sm:$0xff] %v194
                %v196 = vld [vmem:[%s190 + $0x10] sm:$0xff]
                %197 = vst [vmem:[%s191 + $0x10] sm:$0xff] %v196
                %v198 = vld [vmem:[%s190 + $0x18] sm:$0xff]
                %199 = vst [vmem:[%s191 + $0x18] sm:$0xff] %v198
                %v200 = vld [vmem:[%s190 + $0x40] sm:$0xff]
                %201 = vst [vmem:[%s191 + $0x20] sm:$0xff] %v200
                %v202 = vld [vmem:[%s190 + $0x48] sm:$0xff]
                %203 = vst [vmem:[%s191 + $0x28] sm:$0xff] %v202
                %v204 = vld [vmem:[%s190 + $0x50] sm:$0xff]
                %205 = vst [vmem:[%s191 + $0x30] sm:$0xff] %v204
                %v206 = vld [vmem:[%s190 + $0x58] sm:$0xff]
                %207 = vst [vmem:[%s191 + $0x38] sm:$0xff] %v206
                %v208 = vld [vmem:[%s190 + $0x80] sm:$0xff]
                %209 = vst [vmem:[%s191 + $0x40] sm:$0xff] %v208
                %v210 = vld [vmem:[%s190 + $0x88] sm:$0xff]
                %211 = vst [vmem:[%s191 + $0x48] sm:$0xff] %v210
                %v212 = vld [vmem:[%s190 + $0x90] sm:$0xff]
                %213 = vst [vmem:[%s191 + $0x50] sm:$0xff] %v212
                %v214 = vld [vmem:[%s190 + $0x98] sm:$0xff]
                %215 = vst [vmem:[%s191 + $0x58] sm:$0xff] %v214
                %v216 = vld [vmem:[%s190 + $0xc0] sm:$0xff]
                %217 = vst [vmem:[%s191 + $0x60] sm:$0xff] %v216
                %v218 = vld [vmem:[%s190 + $0xc8] sm:$0xff]
                %219 = vst [vmem:[%s191 + $0x68] sm:$0xff] %v218
                %v220 = vld [vmem:[%s190 + $0xd0] sm:$0xff]
                %221 = vst [vmem:[%s191 + $0x70] sm:$0xff] %v220
                %v222 = vld [vmem:[%s190 + $0xd8] sm:$0xff]
                %223 = vst [vmem:[%s191 + $0x78] sm:$0xff] %v222
                %v224 = vld [vmem:[%s190 + $0x100] sm:$0xff]
                %225 = vst [vmem:[%s191 + $0x80] sm:$0xff] %v224
                %v226 = vld [vmem:[%s190 + $0x108] sm:$0xff]
                %227 = vst [vmem:[%s191 + $0x88] sm:$0xff] %v226
                %v228 = vld [vmem:[%s190 + $0x110] sm:$0xff]
                %229 = vst [vmem:[%s191 + $0x90] sm:$0xff] %v228
                %v230 = vld [vmem:[%s190 + $0x118] sm:$0xff]
                %231 = vst [vmem:[%s191 + $0x98] sm:$0xff] %v230
                %v232 = vld [vmem:[%s190 + $0x140] sm:$0xff]
                %233 = vst [vmem:[%s191 + $0xa0] sm:$0xff] %v232
                %v234 = vld [vmem:[%s190 + $0x148] sm:$0xff]
                %235 = vst [vmem:[%s191 + $0xa8] sm:$0xff] %v234
                %v236 = vld [vmem:[%s190 + $0x150] sm:$0xff]
                %237 = vst [vmem:[%s191 + $0xb0] sm:$0xff] %v236
                %v238 = vld [vmem:[%s190 + $0x158] sm:$0xff]
                %239 = vst [vmem:[%s191 + $0xb8] sm:$0xff] %v238
                %v240 = vld [vmem:[%s190 + $0x180] sm:$0xff]
                %241 = vst [vmem:[%s191 + $0xc0] sm:$0xff] %v240
                %v242 = vld [vmem:[%s190 + $0x188] sm:$0xff]
                %243 = vst [vmem:[%s191 + $0xc8] sm:$0xff] %v242
                %v244 = vld [vmem:[%s190 + $0x190] sm:$0xff]
                %245 = vst [vmem:[%s191 + $0xd0] sm:$0xff] %v244
                %v246 = vld [vmem:[%s190 + $0x198] sm:$0xff]
                %247 = vst [vmem:[%s191 + $0xd8] sm:$0xff] %v246
                %v248 = vld [vmem:[%s190 + $0x1c0] sm:$0xff]
                %249 = vst [vmem:[%s191 + $0xe0] sm:$0xff] %v248
                %v250 = vld [vmem:[%s190 + $0x1c8] sm:$0xff]
                %251 = vst [vmem:[%s191 + $0xe8] sm:$0xff] %v250
                %v252 = vld [vmem:[%s190 + $0x1d0] sm:$0xff]
                %253 = vst [vmem:[%s191 + $0xf0] sm:$0xff] %v252
                %v254 = vld [vmem:[%s190 + $0x1d8] sm:$0xff]
                %255 = vst [vmem:[%s191 + $0xf8] sm:$0xff] %v254
                %v256 = vld [vmem:[%s190 + $0x200] sm:$0xff]
                %257 = vst [vmem:[%s191 + $0x100] sm:$0xff] %v256
                %v258 = vld [vmem:[%s190 + $0x208] sm:$0xff]
                %259 = vst [vmem:[%s191 + $0x108] sm:$0xff] %v258
                %v260 = vld [vmem:[%s190 + $0x210] sm:$0xff]
                %261 = vst [vmem:[%s191 + $0x110] sm:$0xff] %v260
                %v262 = vld [vmem:[%s190 + $0x218] sm:$0xff]
                %263 = vst [vmem:[%s191 + $0x118] sm:$0xff] %v262
                %v264 = vld [vmem:[%s190 + $0x240] sm:$0xff]
                %265 = vst [vmem:[%s191 + $0x120] sm:$0xff] %v264
                %v266 = vld [vmem:[%s190 + $0x248] sm:$0xff]
                %267 = vst [vmem:[%s191 + $0x128] sm:$0xff] %v266
                %v268 = vld [vmem:[%s190 + $0x250] sm:$0xff]
                %269 = vst [vmem:[%s191 + $0x130] sm:$0xff] %v268
                %v270 = vld [vmem:[%s190 + $0x258] sm:$0xff]
                %271 = vst [vmem:[%s191 + $0x138] sm:$0xff] %v270
                %v272 = vld [vmem:[%s190 + $0x280] sm:$0xff]
                %273 = vst [vmem:[%s191 + $0x140] sm:$0xff] %v272
                %v274 = vld [vmem:[%s190 + $0x288] sm:$0xff]
                %275 = vst [vmem:[%s191 + $0x148] sm:$0xff] %v274
                %v276 = vld [vmem:[%s190 + $0x290] sm:$0xff]
                %277 = vst [vmem:[%s191 + $0x150] sm:$0xff] %v276
                %v278 = vld [vmem:[%s190 + $0x298] sm:$0xff]
                %279 = vst [vmem:[%s191 + $0x158] sm:$0xff] %v278
                %v280 = vld [vmem:[%s190 + $0x2c0] sm:$0xff]
                %281 = vst [vmem:[%s191 + $0x160] sm:$0xff] %v280
                %v282 = vld [vmem:[%s190 + $0x2c8] sm:$0xff]
                %283 = vst [vmem:[%s191 + $0x168] sm:$0xff] %v282
                %v284 = vld [vmem:[%s190 + $0x2d0] sm:$0xff]
                %285 = vst [vmem:[%s191 + $0x170] sm:$0xff] %v284
                %v286 = vld [vmem:[%s190 + $0x2d8] sm:$0xff]
                %287 = vst [vmem:[%s191 + $0x178] sm:$0xff] %v286
                %v288 = vld [vmem:[%s190 + $0x300] sm:$0xff]
                %289 = vst [vmem:[%s191 + $0x180] sm:$0xff] %v288
                %v290 = vld [vmem:[%s190 + $0x308] sm:$0xff]
                %291 = vst [vmem:[%s191 + $0x188] sm:$0xff] %v290
                %v292 = vld [vmem:[%s190 + $0x310] sm:$0xff]
                %293 = vst [vmem:[%s191 + $0x190] sm:$0xff] %v292
                %v294 = vld [vmem:[%s190 + $0x318] sm:$0xff]
                %295 = vst [vmem:[%s191 + $0x198] sm:$0xff] %v294
                %v296 = vld [vmem:[%s190 + $0x340] sm:$0xff]
                %297 = vst [vmem:[%s191 + $0x1a0] sm:$0xff] %v296
                %v298 = vld [vmem:[%s190 + $0x348] sm:$0xff]
                %299 = vst [vmem:[%s191 + $0x1a8] sm:$0xff] %v298
                %v300 = vld [vmem:[%s190 + $0x350] sm:$0xff]
                %301 = vst [vmem:[%s191 + $0x1b0] sm:$0xff] %v300
                %v302 = vld [vmem:[%s190 + $0x358] sm:$0xff]
                %303 = vst [vmem:[%s191 + $0x1b8] sm:$0xff] %v302
                %v304 = vld [vmem:[%s190 + $0x380] sm:$0xff]
                %305 = vst [vmem:[%s191 + $0x1c0] sm:$0xff] %v304
                %v306 = vld [vmem:[%s190 + $0x388] sm:$0xff]
                %307 = vst [vmem:[%s191 + $0x1c8] sm:$0xff] %v306
                %v308 = vld [vmem:[%s190 + $0x390] sm:$0xff]
                %309 = vst [vmem:[%s191 + $0x1d0] sm:$0xff] %v308
                %v310 = vld [vmem:[%s190 + $0x398] sm:$0xff]
                %311 = vst [vmem:[%s191 + $0x1d8] sm:$0xff] %v310
                %v312 = vld [vmem:[%s190 + $0x3c0] sm:$0xff]
                %313 = vst [vmem:[%s191 + $0x1e0] sm:$0xff] %v312
                %v314 = vld [vmem:[%s190 + $0x3c8] sm:$0xff]
                %315 = vst [vmem:[%s191 + $0x1e8] sm:$0xff] %v314
                %v316 = vld [vmem:[%s190 + $0x3d0] sm:$0xff]
                %317 = vst [vmem:[%s191 + $0x1f0] sm:$0xff] %v316
                %v318 = vld [vmem:[%s190 + $0x3d8] sm:$0xff]
                %319 = vst [vmem:[%s191 + $0x1f8] sm:$0xff] %v318
              $region45: #{gcn_forward.2} parent=39 // loop_footer
                %s189 = sadd.s32 1, %s185
              $region46: #{gcn_forward.2} parent=39 // loop_footer_branch
                %184 = sbr.rel target = $region42
              $region47: #{gcn_forward.2} parent=39 // loop_exit
                _
            $region40: #{gcn_forward.2} parent=35 // pred_fallthru
              _
            // Predicated region
            $region48: #{gcn_forward.2} parent=35 // pred_check
              _
            $region49: #{gcn_forward.2} parent=35 // pred_check_branch
              %321 = sbr.rel target = $region51
            $region50: #{gcn_forward.2} parent=35 // pred_region
              _
            $region51: #{gcn_forward.2} parent=35 // pred_fallthru
              _
          $region36: #{gcn_forward.2} parent=31 // pred_fallthru
            _
          %322 = vnop
        $region32: #{gcn_forward.2} parent=27 // pred_fallthru
          _
      $region28: #{gcn_forward.2} parent=5 // pred_fallthru
        _
      %p323 = scmp.le.s32.totalorder 1, %s10
      %p324 = scmp.lt.s32.totalorder %s10, 5
      %p325 = pnand %p323, %p324
      %p326 = pneg %p325
      // Predicated region
      $region52: #{gcn_forward.2} parent=5 // pred_check
        _
      $region53: #{gcn_forward.2} parent=5 // pred_check_branch
        %328 = sbr.rel (%p325) target = $region55
      $region54: #{gcn_forward.2} parent=5 // pred_region
        %s329 = ssub.s32 %s10, 1
        %s330 = sand.u32 %s37, 1
        %s331 = sand.u32 %s37, 1
        %s332 = smul.addr %s331, 512
        %s333 = scalar_lea.vmem [#allocation3], %s332
        // Predicated region
        $region56: #{gcn_forward.2} parent=54 // pred_check
          %p334 = pneg %p50
        $region57: #{gcn_forward.2} parent=54 // pred_check_branch
          %336 = sbr.rel (%p334) target = $region59
        $region58: #{gcn_forward.2} parent=54 // pred_region
          _
        $region59: #{gcn_forward.2} parent=54 // pred_fallthru
          _
        %s337 = sand.u32 %s37, 1
        %s338 = sand.u32 %s37, 1
        %s339 = smul.addr %s338, 512
        %s340 = scalar_lea.vmem [#allocation3], %s339
        %p341 = pneg %p50
        %p342 = pneg %p47
        %p343 = pneg %p71
        %p344 = pneg %p68
        %p345 = pneg %p92
        %p346 = pneg %p89
        %p347 = pneg %p113
        %p348 = pneg %p110
        %p349 = pneg %p139
        %p350 = pneg %p136
        %s351 = smul.u32 64, %s19
        %p352 = scmp.lt.s32.totalorder %s351, 127
        %s353 = scalar_select %p352, %s351, 127
        %s354 = smul.addr %s353, 4
        %s355 = scalar_lea.vmem %s4, %s354
        %s356 = smul.u32 16, %s19
        %s357 = smul.u32 4, %s20
        %s358 = smul.u32 64, %s19
        %p359 = scmp.lt.s32.totalorder %s358, 127
        %s360 = scalar_select %p359, %s358, 127
        %s361 = smul.addr %s360, 4
        %s362 = scalar_lea.vmem %s4, %s361
        %s363 = smul.u32 64, %s19
        %p365 = scmp.eq.s32.totalorder %s20, 0
        // Predicated region
        $region60: #{gcn_forward.2} parent=54 // pred_check
          %p366 = pneg %p365
        $region61: #{gcn_forward.2} parent=54 // pred_check_branch
          %368 = sbr.rel (%p366) target = $region63
        $region62: #{gcn_forward.2} parent=54 // pred_region
          %369 = vst [vmem:[#allocation2] sm:$0xff] 0.0
          %370 = vst [vmem:[#allocation2 + $0x8] sm:$0xff] 0.0
          %371 = vst [vmem:[#allocation2 + $0x10] sm:$0xff] 0.0
          %372 = vst [vmem:[#allocation2 + $0x18] sm:$0xff] 0.0
          %373 = vst [vmem:[#allocation2 + $0x20] sm:$0xff] 0.0
          %374 = vst [vmem:[#allocation2 + $0x28] sm:$0xff] 0.0
          %375 = vst [vmem:[#allocation2 + $0x30] sm:$0xff] 0.0
          %376 = vst [vmem:[#allocation2 + $0x38] sm:$0xff] 0.0
          %377 = vst [vmem:[#allocation2 + $0x40] sm:$0xff] 0.0
          %378 = vst [vmem:[#allocation2 + $0x48] sm:$0xff] 0.0
          %379 = vst [vmem:[#allocation2 + $0x50] sm:$0xff] 0.0
          %380 = vst [vmem:[#allocation2 + $0x58] sm:$0xff] 0.0
          %381 = vst [vmem:[#allocation2 + $0x60] sm:$0xff] 0.0
          %382 = vst [vmem:[#allocation2 + $0x68] sm:$0xff] 0.0
          %383 = vst [vmem:[#allocation2 + $0x70] sm:$0xff] 0.0
          %384 = vst [vmem:[#allocation2 + $0x78] sm:$0xff] 0.0
          %385 = vst [vmem:[#allocation2 + $0x80] sm:$0xff] 0.0
          %386 = vst [vmem:[#allocation2 + $0x88] sm:$0xff] 0.0
          %387 = vst [vmem:[#allocation2 + $0x90] sm:$0xff] 0.0
          %388 = vst [vmem:[#allocation2 + $0x98] sm:$0xff] 0.0
          %389 = vst [vmem:[#allocation2 + $0xa0] sm:$0xff] 0.0
          %390 = vst [vmem:[#allocation2 + $0xa8] sm:$0xff] 0.0
          %391 = vst [vmem:[#allocation2 + $0xb0] sm:$0xff] 0.0
          %392 = vst [vmem:[#allocation2 + $0xb8] sm:$0xff] 0.0
          %393 = vst [vmem:[#allocation2 + $0xc0] sm:$0xff] 0.0
          %394 = vst [vmem:[#allocation2 + $0xc8] sm:$0xff] 0.0
          %395 = vst [vmem:[#allocation2 + $0xd0] sm:$0xff] 0.0
          %396 = vst [vmem:[#allocation2 + $0xd8] sm:$0xff] 0.0
          %397 = vst [vmem:[#allocation2 + $0xe0] sm:$0xff] 0.0
          %398 = vst [vmem:[#allocation2 + $0xe8] sm:$0xff] 0.0
          %399 = vst [vmem:[#allocation2 + $0xf0] sm:$0xff] 0.0
          %400 = vst [vmem:[#allocation2 + $0xf8] sm:$0xff] 0.0
          %401 = vst [vmem:[#allocation2 + $0x100] sm:$0xff] 0.0
          %402 = vst [vmem:[#allocation2 + $0x108] sm:$0xff] 0.0
          %403 = vst [vmem:[#allocation2 + $0x110] sm:$0xff] 0.0
          %404 = vst [vmem:[#allocation2 + $0x118] sm:$0xff] 0.0
          %405 = vst [vmem:[#allocation2 + $0x120] sm:$0xff] 0.0
          %406 = vst [vmem:[#allocation2 + $0x128] sm:$0xff] 0.0
          %407 = vst [vmem:[#allocation2 + $0x130] sm:$0xff] 0.0
          %408 = vst [vmem:[#allocation2 + $0x138] sm:$0xff] 0.0
          %409 = vst [vmem:[#allocation2 + $0x140] sm:$0xff] 0.0
          %410 = vst [vmem:[#allocation2 + $0x148] sm:$0xff] 0.0
          %411 = vst [vmem:[#allocation2 + $0x150] sm:$0xff] 0.0
          %412 = vst [vmem:[#allocation2 + $0x158] sm:$0xff] 0.0
          %413 = vst [vmem:[#allocation2 + $0x160] sm:$0xff] 0.0
          %414 = vst [vmem:[#allocation2 + $0x168] sm:$0xff] 0.0
          %415 = vst [vmem:[#allocation2 + $0x170] sm:$0xff] 0.0
          %416 = vst [vmem:[#allocation2 + $0x178] sm:$0xff] 0.0
          %417 = vst [vmem:[#allocation2 + $0x180] sm:$0xff] 0.0
          %418 = vst [vmem:[#allocation2 + $0x188] sm:$0xff] 0.0
          %419 = vst [vmem:[#allocation2 + $0x190] sm:$0xff] 0.0
          %420 = vst [vmem:[#allocation2 + $0x198] sm:$0xff] 0.0
          %421 = vst [vmem:[#allocation2 + $0x1a0] sm:$0xff] 0.0
          %422 = vst [vmem:[#allocation2 + $0x1a8] sm:$0xff] 0.0
          %423 = vst [vmem:[#allocation2 + $0x1b0] sm:$0xff] 0.0
          %424 = vst [vmem:[#allocation2 + $0x1b8] sm:$0xff] 0.0
          %425 = vst [vmem:[#allocation2 + $0x1c0] sm:$0xff] 0.0
          %426 = vst [vmem:[#allocation2 + $0x1c8] sm:$0xff] 0.0
          %427 = vst [vmem:[#allocation2 + $0x1d0] sm:$0xff] 0.0
          %428 = vst [vmem:[#allocation2 + $0x1d8] sm:$0xff] 0.0
          %429 = vst [vmem:[#allocation2 + $0x1e0] sm:$0xff] 0.0
          %430 = vst [vmem:[#allocation2 + $0x1e8] sm:$0xff] 0.0
          %431 = vst [vmem:[#allocation2 + $0x1f0] sm:$0xff] 0.0
          %432 = vst [vmem:[#allocation2 + $0x1f8] sm:$0xff] 0.0
        $region63: #{gcn_forward.2} parent=54 // pred_fallthru
          _
        %v433 = vld [vmem:[%s333] sm:$0xff]
        %v434 = vld [vmem:[%s333 + $0x8] sm:$0xff]
        %v435 = vld [vmem:[%s333 + $0x10] sm:$0xff]
        %v436 = vld [vmem:[%s333 + $0x18] sm:$0xff]
        %v437 = vld [vmem:[%s333 + $0x20] sm:$0xff]
        %v438 = vld [vmem:[%s333 + $0x28] sm:$0xff]
        %v439 = vld [vmem:[%s333 + $0x30] sm:$0xff]
        %v440 = vld [vmem:[%s333 + $0x38] sm:$0xff]
        %v441 = vld [vmem:[%s333 + $0x40] sm:$0xff]
        %v442 = vld [vmem:[%s333 + $0x48] sm:$0xff]
        %v443 = vld [vmem:[%s333 + $0x50] sm:$0xff]
        %v444 = vld [vmem:[%s333 + $0x58] sm:$0xff]
        %v445 = vld [vmem:[%s333 + $0x60] sm:$0xff]
        %v446 = vld [vmem:[%s333 + $0x68] sm:$0xff]
        %v447 = vld [vmem:[%s333 + $0x70] sm:$0xff]
        %v448 = vld [vmem:[%s333 + $0x78] sm:$0xff]
        %v449 = vld [vmem:[%s333 + $0x80] sm:$0xff]
        %v450 = vld [vmem:[%s333 + $0x88] sm:$0xff]
        %v451 = vld [vmem:[%s333 + $0x90] sm:$0xff]
        %v452 = vld [vmem:[%s333 + $0x98] sm:$0xff]
        %v453 = vld [vmem:[%s333 + $0xa0] sm:$0xff]
        %v454 = vld [vmem:[%s333 + $0xa8] sm:$0xff]
        %v455 = vld [vmem:[%s333 + $0xb0] sm:$0xff]
        %v456 = vld [vmem:[%s333 + $0xb8] sm:$0xff]
        %v457 = vld [vmem:[%s333 + $0xc0] sm:$0xff]
        %v458 = vld [vmem:[%s333 + $0xc8] sm:$0xff]
        %v459 = vld [vmem:[%s333 + $0xd0] sm:$0xff]
        %v460 = vld [vmem:[%s333 + $0xd8] sm:$0xff]
        %v461 = vld [vmem:[%s333 + $0xe0] sm:$0xff]
        %v462 = vld [vmem:[%s333 + $0xe8] sm:$0xff]
        %v463 = vld [vmem:[%s333 + $0xf0] sm:$0xff]
        %v464 = vld [vmem:[%s333 + $0xf8] sm:$0xff]
        %v465 = vld [vmem:[%s333 + $0x100] sm:$0xff]
        %v466 = vld [vmem:[%s333 + $0x108] sm:$0xff]
        %v467 = vld [vmem:[%s333 + $0x110] sm:$0xff]
        %v468 = vld [vmem:[%s333 + $0x118] sm:$0xff]
        %v469 = vld [vmem:[%s333 + $0x120] sm:$0xff]
        %v470 = vld [vmem:[%s333 + $0x128] sm:$0xff]
        %v471 = vld [vmem:[%s333 + $0x130] sm:$0xff]
        %v472 = vld [vmem:[%s333 + $0x138] sm:$0xff]
        %v473 = vld [vmem:[%s333 + $0x140] sm:$0xff]
        %v474 = vld [vmem:[%s333 + $0x148] sm:$0xff]
        %v475 = vld [vmem:[%s333 + $0x150] sm:$0xff]
        %v476 = vld [vmem:[%s333 + $0x158] sm:$0xff]
        %v477 = vld [vmem:[%s333 + $0x160] sm:$0xff]
        %v478 = vld [vmem:[%s333 + $0x168] sm:$0xff]
        %v479 = vld [vmem:[%s333 + $0x170] sm:$0xff]
        %v480 = vld [vmem:[%s333 + $0x178] sm:$0xff]
        %v481 = vld [vmem:[%s333 + $0x180] sm:$0xff]
        %v482 = vld [vmem:[%s333 + $0x188] sm:$0xff]
        %v483 = vld [vmem:[%s333 + $0x190] sm:$0xff]
        %v484 = vld [vmem:[%s333 + $0x198] sm:$0xff]
        %v485 = vld [vmem:[%s333 + $0x1a0] sm:$0xff]
        %v486 = vld [vmem:[%s333 + $0x1a8] sm:$0xff]
        %v487 = vld [vmem:[%s333 + $0x1b0] sm:$0xff]
        %v488 = vld [vmem:[%s333 + $0x1b8] sm:$0xff]
        %v489 = vld [vmem:[%s333 + $0x1c0] sm:$0xff]
        %v490 = vld [vmem:[%s333 + $0x1c8] sm:$0xff]
        %v491 = vld [vmem:[%s333 + $0x1d0] sm:$0xff]
        %v492 = vld [vmem:[%s333 + $0x1d8] sm:$0xff]
        %v493 = vld [vmem:[%s333 + $0x1e0] sm:$0xff]
        %v494 = vld [vmem:[%s333 + $0x1e8] sm:$0xff]
        %v495 = vld [vmem:[%s333 + $0x1f0] sm:$0xff]
        %v496 = vld [vmem:[%s333 + $0x1f8] sm:$0xff]
        %v497 = vunpack.c.l.s8.bf16 %v433
        %v498 = vunpack.c.l.s8.bf16 %v434
        %v499 = vunpack.c.l.s8.bf16 %v435
        %v500 = vunpack.c.l.s8.bf16 %v436
        %v501 = vunpack.c.h.s8.bf16 %v433
        %v502 = vunpack.c.h.s8.bf16 %v434
        %v503 = vunpack.c.h.s8.bf16 %v435
        %v504 = vunpack.c.h.s8.bf16 %v436
        %v505 = vunpack.c.l.s8.bf16 %v437
        %v506 = vunpack.c.l.s8.bf16 %v438
        %v507 = vunpack.c.l.s8.bf16 %v439
        %v508 = vunpack.c.l.s8.bf16 %v440
        %v509 = vunpack.c.h.s8.bf16 %v437
        %v510 = vunpack.c.h.s8.bf16 %v438
        %v511 = vunpack.c.h.s8.bf16 %v439
        %v512 = vunpack.c.h.s8.bf16 %v440
        %v513 = vunpack.c.l.s8.bf16 %v441
        %v514 = vunpack.c.l.s8.bf16 %v442
        %v515 = vunpack.c.l.s8.bf16 %v443
        %v516 = vunpack.c.l.s8.bf16 %v444
        %v517 = vunpack.c.h.s8.bf16 %v441
        %v518 = vunpack.c.h.s8.bf16 %v442
        %v519 = vunpack.c.h.s8.bf16 %v443
        %v520 = vunpack.c.h.s8.bf16 %v444
        %v521 = vunpack.c.l.s8.bf16 %v445
        %v522 = vunpack.c.l.s8.bf16 %v446
        %v523 = vunpack.c.l.s8.bf16 %v447
        %v524 = vunpack.c.l.s8.bf16 %v448
        %v525 = vunpack.c.h.s8.bf16 %v445
        %v526 = vunpack.c.h.s8.bf16 %v446
        %v527 = vunpack.c.h.s8.bf16 %v447
        %v528 = vunpack.c.h.s8.bf16 %v448
        %v529 = vunpack.c.l.s8.bf16 %v449
        %v530 = vunpack.c.l.s8.bf16 %v450
        %v531 = vunpack.c.l.s8.bf16 %v451
        %v532 = vunpack.c.l.s8.bf16 %v452
        %v533 = vunpack.c.h.s8.bf16 %v449
        %v534 = vunpack.c.h.s8.bf16 %v450
        %v535 = vunpack.c.h.s8.bf16 %v451
        %v536 = vunpack.c.h.s8.bf16 %v452
        %v537 = vunpack.c.l.s8.bf16 %v453
        %v538 = vunpack.c.l.s8.bf16 %v454
        %v539 = vunpack.c.l.s8.bf16 %v455
        %v540 = vunpack.c.l.s8.bf16 %v456
        %v541 = vunpack.c.h.s8.bf16 %v453
        %v542 = vunpack.c.h.s8.bf16 %v454
        %v543 = vunpack.c.h.s8.bf16 %v455
        %v544 = vunpack.c.h.s8.bf16 %v456
        %v545 = vunpack.c.l.s8.bf16 %v457
        %v546 = vunpack.c.l.s8.bf16 %v458
        %v547 = vunpack.c.l.s8.bf16 %v459
        %v548 = vunpack.c.l.s8.bf16 %v460
        %v549 = vunpack.c.h.s8.bf16 %v457
        %v550 = vunpack.c.h.s8.bf16 %v458
        %v551 = vunpack.c.h.s8.bf16 %v459
        %v552 = vunpack.c.h.s8.bf16 %v460
        %v553 = vunpack.c.l.s8.bf16 %v461
        %v554 = vunpack.c.l.s8.bf16 %v462
        %v555 = vunpack.c.l.s8.bf16 %v463
        %v556 = vunpack.c.l.s8.bf16 %v464
        %v557 = vunpack.c.h.s8.bf16 %v461
        %v558 = vunpack.c.h.s8.bf16 %v462
        %v559 = vunpack.c.h.s8.bf16 %v463
        %v560 = vunpack.c.h.s8.bf16 %v464
        %v561 = vunpack.c.l.s8.bf16 %v465
        %v562 = vunpack.c.l.s8.bf16 %v466
        %v563 = vunpack.c.l.s8.bf16 %v467
        %v564 = vunpack.c.l.s8.bf16 %v468
        %v565 = vunpack.c.h.s8.bf16 %v465
        %v566 = vunpack.c.h.s8.bf16 %v466
        %v567 = vunpack.c.h.s8.bf16 %v467
        %v568 = vunpack.c.h.s8.bf16 %v468
        %v569 = vunpack.c.l.s8.bf16 %v469
        %v570 = vunpack.c.l.s8.bf16 %v470
        %v571 = vunpack.c.l.s8.bf16 %v471
        %v572 = vunpack.c.l.s8.bf16 %v472
        %v573 = vunpack.c.h.s8.bf16 %v469
        %v574 = vunpack.c.h.s8.bf16 %v470
        %v575 = vunpack.c.h.s8.bf16 %v471
        %v576 = vunpack.c.h.s8.bf16 %v472
        %v577 = vunpack.c.l.s8.bf16 %v473
        %v578 = vunpack.c.l.s8.bf16 %v474
        %v579 = vunpack.c.l.s8.bf16 %v475
        %v580 = vunpack.c.l.s8.bf16 %v476
        %v581 = vunpack.c.h.s8.bf16 %v473
        %v582 = vunpack.c.h.s8.bf16 %v474
        %v583 = vunpack.c.h.s8.bf16 %v475
        %v584 = vunpack.c.h.s8.bf16 %v476
        %v585 = vunpack.c.l.s8.bf16 %v477
        %v586 = vunpack.c.l.s8.bf16 %v478
        %v587 = vunpack.c.l.s8.bf16 %v479
        %v588 = vunpack.c.l.s8.bf16 %v480
        %v589 = vunpack.c.h.s8.bf16 %v477
        %v590 = vunpack.c.h.s8.bf16 %v478
        %v591 = vunpack.c.h.s8.bf16 %v479
        %v592 = vunpack.c.h.s8.bf16 %v480
        %v593 = vunpack.c.l.s8.bf16 %v481
        %v594 = vunpack.c.l.s8.bf16 %v482
        %v595 = vunpack.c.l.s8.bf16 %v483
        %v596 = vunpack.c.l.s8.bf16 %v484
        %v597 = vunpack.c.h.s8.bf16 %v481
        %v598 = vunpack.c.h.s8.bf16 %v482
        %v599 = vunpack.c.h.s8.bf16 %v483
        %v600 = vunpack.c.h.s8.bf16 %v484
        %v601 = vunpack.c.l.s8.bf16 %v485
        %v602 = vunpack.c.l.s8.bf16 %v486
        %v603 = vunpack.c.l.s8.bf16 %v487
        %v604 = vunpack.c.l.s8.bf16 %v488
        %v605 = vunpack.c.h.s8.bf16 %v485
        %v606 = vunpack.c.h.s8.bf16 %v486
        %v607 = vunpack.c.h.s8.bf16 %v487
        %v608 = vunpack.c.h.s8.bf16 %v488
        %v609 = vunpack.c.l.s8.bf16 %v489
        %v610 = vunpack.c.l.s8.bf16 %v490
        %v611 = vunpack.c.l.s8.bf16 %v491
        %v612 = vunpack.c.l.s8.bf16 %v492
        %v613 = vunpack.c.h.s8.bf16 %v489
        %v614 = vunpack.c.h.s8.bf16 %v490
        %v615 = vunpack.c.h.s8.bf16 %v491
        %v616 = vunpack.c.h.s8.bf16 %v492
        %v617 = vunpack.c.l.s8.bf16 %v493
        %v618 = vunpack.c.l.s8.bf16 %v494
        %v619 = vunpack.c.l.s8.bf16 %v495
        %v620 = vunpack.c.l.s8.bf16 %v496
        %v621 = vunpack.c.h.s8.bf16 %v493
        %v622 = vunpack.c.h.s8.bf16 %v494
        %v623 = vunpack.c.h.s8.bf16 %v495
        %v624 = vunpack.c.h.s8.bf16 %v496
        %v625 = vld [vmem:[#allocation2] sm:$0xff]
        %v626 = vld [vmem:[#allocation2 + $0x8] sm:$0xff]
        %v627 = vld [vmem:[#allocation2 + $0x10] sm:$0xff]
        %v628 = vld [vmem:[#allocation2 + $0x18] sm:$0xff]
        %v629 = vld [vmem:[#allocation2 + $0x20] sm:$0xff]
        %v630 = vld [vmem:[#allocation2 + $0x28] sm:$0xff]
        %v631 = vld [vmem:[#allocation2 + $0x30] sm:$0xff]
        %v632 = vld [vmem:[#allocation2 + $0x38] sm:$0xff]
        %v633 = vld [vmem:[#allocation2 + $0x40] sm:$0xff]
        %v634 = vld [vmem:[#allocation2 + $0x48] sm:$0xff]
        %v635 = vld [vmem:[#allocation2 + $0x50] sm:$0xff]
        %v636 = vld [vmem:[#allocation2 + $0x58] sm:$0xff]
        %v637 = vld [vmem:[#allocation2 + $0x60] sm:$0xff]
        %v638 = vld [vmem:[#allocation2 + $0x68] sm:$0xff]
        %v639 = vld [vmem:[#allocation2 + $0x70] sm:$0xff]
        %v640 = vld [vmem:[#allocation2 + $0x78] sm:$0xff]
        %v641 = vld [vmem:[#allocation2 + $0x80] sm:$0xff]
        %v642 = vld [vmem:[#allocation2 + $0x88] sm:$0xff]
        %v643 = vld [vmem:[#allocation2 + $0x90] sm:$0xff]
        %v644 = vld [vmem:[#allocation2 + $0x98] sm:$0xff]
        %v645 = vld [vmem:[#allocation2 + $0xa0] sm:$0xff]
        %v646 = vld [vmem:[#allocation2 + $0xa8] sm:$0xff]
        %v647 = vld [vmem:[#allocation2 + $0xb0] sm:$0xff]
        %v648 = vld [vmem:[#allocation2 + $0xb8] sm:$0xff]
        %v649 = vld [vmem:[#allocation2 + $0xc0] sm:$0xff]
        %v650 = vld [vmem:[#allocation2 + $0xc8] sm:$0xff]
        %v651 = vld [vmem:[#allocation2 + $0xd0] sm:$0xff]
        %v652 = vld [vmem:[#allocation2 + $0xd8] sm:$0xff]
        %v653 = vld [vmem:[#allocation2 + $0xe0] sm:$0xff]
        %v654 = vld [vmem:[#allocation2 + $0xe8] sm:$0xff]
        %v655 = vld [vmem:[#allocation2 + $0xf0] sm:$0xff]
        %v656 = vld [vmem:[#allocation2 + $0xf8] sm:$0xff]
        %v657 = vld [vmem:[#allocation2 + $0x100] sm:$0xff]
        %v658 = vld [vmem:[#allocation2 + $0x108] sm:$0xff]
        %v659 = vld [vmem:[#allocation2 + $0x110] sm:$0xff]
        %v660 = vld [vmem:[#allocation2 + $0x118] sm:$0xff]
        %v661 = vld [vmem:[#allocation2 + $0x120] sm:$0xff]
        %v662 = vld [vmem:[#allocation2 + $0x128] sm:$0xff]
        %v663 = vld [vmem:[#allocation2 + $0x130] sm:$0xff]
        %v664 = vld [vmem:[#allocation2 + $0x138] sm:$0xff]
        %v665 = vld [vmem:[#allocation2 + $0x140] sm:$0xff]
        %v666 = vld [vmem:[#allocation2 + $0x148] sm:$0xff]
        %v667 = vld [vmem:[#allocation2 + $0x150] sm:$0xff]
        %v668 = vld [vmem:[#allocation2 + $0x158] sm:$0xff]
        %v669 = vld [vmem:[#allocation2 + $0x160] sm:$0xff]
        %v670 = vld [vmem:[#allocation2 + $0x168] sm:$0xff]
        %v671 = vld [vmem:[#allocation2 + $0x170] sm:$0xff]
        %v672 = vld [vmem:[#allocation2 + $0x178] sm:$0xff]
        %v673 = vld [vmem:[#allocation2 + $0x180] sm:$0xff]
        %v674 = vld [vmem:[#allocation2 + $0x188] sm:$0xff]
        %v675 = vld [vmem:[#allocation2 + $0x190] sm:$0xff]
        %v676 = vld [vmem:[#allocation2 + $0x198] sm:$0xff]
        %v677 = vld [vmem:[#allocation2 + $0x1a0] sm:$0xff]
        %v678 = vld [vmem:[#allocation2 + $0x1a8] sm:$0xff]
        %v679 = vld [vmem:[#allocation2 + $0x1b0] sm:$0xff]
        %v680 = vld [vmem:[#allocation2 + $0x1b8] sm:$0xff]
        %v681 = vld [vmem:[#allocation2 + $0x1c0] sm:$0xff]
        %v682 = vld [vmem:[#allocation2 + $0x1c8] sm:$0xff]
        %v683 = vld [vmem:[#allocation2 + $0x1d0] sm:$0xff]
        %v684 = vld [vmem:[#allocation2 + $0x1d8] sm:$0xff]
        %v685 = vld [vmem:[#allocation2 + $0x1e0] sm:$0xff]
        %v686 = vld [vmem:[#allocation2 + $0x1e8] sm:$0xff]
        %v687 = vld [vmem:[#allocation2 + $0x1f0] sm:$0xff]
        %v688 = vld [vmem:[#allocation2 + $0x1f8] sm:$0xff]
        %s689 = smul.u32 %s20, 512
        %s690 = sshra.s32 %s689, 3
        %s691 = sand.u32 %s689, 7
        %s692 = smul.addr %s690, 4
        %s693 = scalar_lea.vmem %s1, %s692
        %v694 = vld [vmem:[%s693] sm:$0xf]
        %v695 = vld [vmem:[%s693 + $0x4] sm:$0xf]
        %v696 = vld [vmem:[%s693 + $0x8] sm:$0xf]
        %v697 = vld [vmem:[%s693 + $0xc] sm:$0xf]
        %v698 = vld [vmem:[%s693 + $0x10] sm:$0xf]
        %v699 = vld [vmem:[%s693 + $0x14] sm:$0xf]
        %v700 = vld [vmem:[%s693 + $0x18] sm:$0xf]
        %v701 = vld [vmem:[%s693 + $0x1c] sm:$0xf]
        %v702 = vld [vmem:[%s693 + $0x20] sm:$0xf]
        %v703 = vld [vmem:[%s693 + $0x24] sm:$0xf]
        %v704 = vld [vmem:[%s693 + $0x28] sm:$0xf]
        %v705 = vld [vmem:[%s693 + $0x2c] sm:$0xf]
        %v706 = vld [vmem:[%s693 + $0x30] sm:$0xf]
        %v707 = vld [vmem:[%s693 + $0x34] sm:$0xf]
        %v708 = vld [vmem:[%s693 + $0x38] sm:$0xf]
        %v709 = vld [vmem:[%s693 + $0x3c] sm:$0xf]
        %v710 = vld [vmem:[%s693 + $0x40] sm:$0xf]
        %v711 = vld [vmem:[%s693 + $0x44] sm:$0xf]
        %v712 = vld [vmem:[%s693 + $0x48] sm:$0xf]
        %v713 = vld [vmem:[%s693 + $0x4c] sm:$0xf]
        %v714 = vld [vmem:[%s693 + $0x50] sm:$0xf]
        %v715 = vld [vmem:[%s693 + $0x54] sm:$0xf]
        %v716 = vld [vmem:[%s693 + $0x58] sm:$0xf]
        %v717 = vld [vmem:[%s693 + $0x5c] sm:$0xf]
        %v718 = vld [vmem:[%s693 + $0x60] sm:$0xf]
        %v719 = vld [vmem:[%s693 + $0x64] sm:$0xf]
        %v720 = vld [vmem:[%s693 + $0x68] sm:$0xf]
        %v721 = vld [vmem:[%s693 + $0x6c] sm:$0xf]
        %v722 = vld [vmem:[%s693 + $0x70] sm:$0xf]
        %v723 = vld [vmem:[%s693 + $0x74] sm:$0xf]
        %v724 = vld [vmem:[%s693 + $0x78] sm:$0xf]
        %v725 = vld [vmem:[%s693 + $0x7c] sm:$0xf]
        %v726 = vld [vmem:[%s693 + $0x80] sm:$0xf]
        %v727 = vld [vmem:[%s693 + $0x84] sm:$0xf]
        %v728 = vld [vmem:[%s693 + $0x88] sm:$0xf]
        %v729 = vld [vmem:[%s693 + $0x8c] sm:$0xf]
        %v730 = vld [vmem:[%s693 + $0x90] sm:$0xf]
        %v731 = vld [vmem:[%s693 + $0x94] sm:$0xf]
        %v732 = vld [vmem:[%s693 + $0x98] sm:$0xf]
        %v733 = vld [vmem:[%s693 + $0x9c] sm:$0xf]
        %v734 = vld [vmem:[%s693 + $0xa0] sm:$0xf]
        %v735 = vld [vmem:[%s693 + $0xa4] sm:$0xf]
        %v736 = vld [vmem:[%s693 + $0xa8] sm:$0xf]
        %v737 = vld [vmem:[%s693 + $0xac] sm:$0xf]
        %v738 = vld [vmem:[%s693 + $0xb0] sm:$0xf]
        %v739 = vld [vmem:[%s693 + $0xb4] sm:$0xf]
        %v740 = vld [vmem:[%s693 + $0xb8] sm:$0xf]
        %v741 = vld [vmem:[%s693 + $0xbc] sm:$0xf]
        %v742 = vld [vmem:[%s693 + $0xc0] sm:$0xf]
        %v743 = vld [vmem:[%s693 + $0xc4] sm:$0xf]
        %v744 = vld [vmem:[%s693 + $0xc8] sm:$0xf]
        %v745 = vld [vmem:[%s693 + $0xcc] sm:$0xf]
        %v746 = vld [vmem:[%s693 + $0xd0] sm:$0xf]
        %v747 = vld [vmem:[%s693 + $0xd4] sm:$0xf]
        %v748 = vld [vmem:[%s693 + $0xd8] sm:$0xf]
        %v749 = vld [vmem:[%s693 + $0xdc] sm:$0xf]
        %v750 = vld [vmem:[%s693 + $0xe0] sm:$0xf]
        %v751 = vld [vmem:[%s693 + $0xe4] sm:$0xf]
        %v752 = vld [vmem:[%s693 + $0xe8] sm:$0xf]
        %v753 = vld [vmem:[%s693 + $0xec] sm:$0xf]
        %v754 = vld [vmem:[%s693 + $0xf0] sm:$0xf]
        %v755 = vld [vmem:[%s693 + $0xf4] sm:$0xf]
        %v756 = vld [vmem:[%s693 + $0xf8] sm:$0xf]
        %v757 = vld [vmem:[%s693 + $0xfc] sm:$0xf]
        %v822 = vunpack.c.l.b16 %v694
        %v823 = vunpack.c.l.b16 %v695
        %v824 = vunpack.c.l.b16 %v696
        %v825 = vunpack.c.l.b16 %v697
        %v826 = vunpack.c.l.b16 %v698
        %v827 = vunpack.c.l.b16 %v699
        %v828 = vunpack.c.l.b16 %v700
        %v829 = vunpack.c.l.b16 %v701
        %v830 = vunpack.c.l.b16 %v702
        %v831 = vunpack.c.l.b16 %v703
        %v832 = vunpack.c.l.b16 %v704
        %v833 = vunpack.c.l.b16 %v705
        %v834 = vunpack.c.l.b16 %v706
        %v835 = vunpack.c.l.b16 %v707
        %v836 = vunpack.c.l.b16 %v708
        %v837 = vunpack.c.l.b16 %v709
        %v838 = vunpack.c.l.b16 %v710
        %v839 = vunpack.c.l.b16 %v711
        %v840 = vunpack.c.l.b16 %v712
        %v841 = vunpack.c.l.b16 %v713
        %v842 = vunpack.c.l.b16 %v714
        %v843 = vunpack.c.l.b16 %v715
        %v844 = vunpack.c.l.b16 %v716
        %v845 = vunpack.c.l.b16 %v717
        %v846 = vunpack.c.l.b16 %v718
        %v847 = vunpack.c.l.b16 %v719
        %v848 = vunpack.c.l.b16 %v720
        %v849 = vunpack.c.l.b16 %v721
        %v850 = vunpack.c.l.b16 %v722
        %v851 = vunpack.c.l.b16 %v723
        %v852 = vunpack.c.l.b16 %v724
        %v853 = vunpack.c.l.b16 %v725
        %v854 = vunpack.c.l.b16 %v726
        %v855 = vunpack.c.l.b16 %v727
        %v856 = vunpack.c.l.b16 %v728
        %v857 = vunpack.c.l.b16 %v729
        %v858 = vunpack.c.l.b16 %v730
        %v859 = vunpack.c.l.b16 %v731
        %v860 = vunpack.c.l.b16 %v732
        %v861 = vunpack.c.l.b16 %v733
        %v862 = vunpack.c.l.b16 %v734
        %v863 = vunpack.c.l.b16 %v735
        %v864 = vunpack.c.l.b16 %v736
        %v865 = vunpack.c.l.b16 %v737
        %v866 = vunpack.c.l.b16 %v738
        %v867 = vunpack.c.l.b16 %v739
        %v868 = vunpack.c.l.b16 %v740
        %v869 = vunpack.c.l.b16 %v741
        %v870 = vunpack.c.l.b16 %v742
        %v871 = vunpack.c.l.b16 %v743
        %v872 = vunpack.c.l.b16 %v744
        %v873 = vunpack.c.l.b16 %v745
        %v874 = vunpack.c.l.b16 %v746
        %v875 = vunpack.c.l.b16 %v747
        %v876 = vunpack.c.l.b16 %v748
        %v877 = vunpack.c.l.b16 %v749
        %v878 = vunpack.c.l.b16 %v750
        %v879 = vunpack.c.l.b16 %v751
        %v880 = vunpack.c.l.b16 %v752
        %v881 = vunpack.c.l.b16 %v753
        %v882 = vunpack.c.l.b16 %v754
        %v883 = vunpack.c.l.b16 %v755
        %v884 = vunpack.c.l.b16 %v756
        %v885 = vunpack.c.l.b16 %v757
        %v886 = vpack.c.b16 %v823, %v822
        %v887 = vpack.c.b16 %v825, %v824
        %v888 = vpack.c.b16 %v827, %v826
        %v889 = vpack.c.b16 %v829, %v828
        %v890 = vpack.c.b16 %v831, %v830
        %v891 = vpack.c.b16 %v833, %v832
        %v892 = vpack.c.b16 %v835, %v834
        %v893 = vpack.c.b16 %v837, %v836
        %v894 = vpack.c.b16 %v839, %v838
        %v895 = vpack.c.b16 %v841, %v840
        %v896 = vpack.c.b16 %v843, %v842
        %v897 = vpack.c.b16 %v845, %v844
        %v898 = vpack.c.b16 %v847, %v846
        %v899 = vpack.c.b16 %v849, %v848
        %v900 = vpack.c.b16 %v851, %v850
        %v901 = vpack.c.b16 %v853, %v852
        %v902 = vpack.c.b16 %v855, %v854
        %v903 = vpack.c.b16 %v857, %v856
        %v904 = vpack.c.b16 %v859, %v858
        %v905 = vpack.c.b16 %v861, %v860
        %v906 = vpack.c.b16 %v863, %v862
        %v907 = vpack.c.b16 %v865, %v864
        %v908 = vpack.c.b16 %v867, %v866
        %v909 = vpack.c.b16 %v869, %v868
        %v910 = vpack.c.b16 %v871, %v870
        %v911 = vpack.c.b16 %v873, %v872
        %v912 = vpack.c.b16 %v875, %v874
        %v913 = vpack.c.b16 %v877, %v876
        %v914 = vpack.c.b16 %v879, %v878
        %v915 = vpack.c.b16 %v881, %v880
        %v916 = vpack.c.b16 %v883, %v882
        %v917 = vpack.c.b16 %v885, %v884
        %950 = vmatprep.subr.bf16.mxu0 0
        %951 = vmatpush1.bf16.msra.mxu0 %v886
        %952 = vmatprep.subr.bf16.mxu0 0
        %953 = vmatpush1.bf16.msra.mxu0 %v887
        %954 = vmatprep.subr.bf16.mxu0 0
        %955 = vmatpush1.bf16.msra.mxu0 %v888
        %956 = vmatprep.subr.bf16.mxu0 0
        %957 = vmatpush1.bf16.msra.mxu0 %v889
        %958 = vmatprep.subr.bf16.mxu0 0
        %959 = vmatpush1.bf16.msra.mxu0 %v890
        %960 = vmatprep.subr.bf16.mxu0 0
        %961 = vmatpush1.bf16.msra.mxu0 %v891
        %962 = vmatprep.subr.bf16.mxu0 0
        %963 = vmatpush1.bf16.msra.mxu0 %v892
        %964 = vmatprep.subr.bf16.mxu0 0
        %965 = vmatpush1.bf16.msra.mxu0 %v893
        %966 = vmatprep.subr.bf16.mxu0 0
        %967 = vmatpush1.bf16.msra.mxu0 %v894
        %968 = vmatprep.subr.bf16.mxu0 0
        %969 = vmatpush1.bf16.msra.mxu0 %v895
        %970 = vmatprep.subr.bf16.mxu0 0
        %971 = vmatpush1.bf16.msra.mxu0 %v896
        %972 = vmatprep.subr.bf16.mxu0 0
        %973 = vmatpush1.bf16.msra.mxu0 %v897
        %974 = vmatprep.subr.bf16.mxu0 0
        %975 = vmatpush1.bf16.msra.mxu0 %v898
        %976 = vmatprep.subr.bf16.mxu0 0
        %977 = vmatpush1.bf16.msra.mxu0 %v899
        %978 = vmatprep.subr.bf16.mxu0 0
        %979 = vmatpush1.bf16.msra.mxu0 %v900
        %980 = vmatprep.subr.bf16.mxu0 0
        %981 = vmatpush1.bf16.msra.mxu0 %v901
        %982 = vmatprep.mubr.bf16.mxu0 %v498
        %983 = vmatmul.mubr.bf16.gmra.mrb[0].mxu0 %v497
        %v984 = vpop.f32.mrb[0].mxu0
        %v985 = vadd.f32 0.0, %v984
        %v986 = vpop.f32.mrb[0].mxu0
        %v987 = vpop.f32.mrb[0].mxu0
        %v988 = vadd.f32 0.0, %v987
        %v989 = vpop.f32.mrb[0].mxu0
        %990 = vmatprep.mubr.bf16.mxu0 %v502
        %991 = vmatmul.mubr.bf16.gmra.mrb[0].mxu0 %v501
        %v992 = vpop.f32.mrb[0].mxu0
        %v993 = vadd.f32 0.0, %v992
        %v994 = vpop.f32.mrb[0].mxu0
        %v995 = vpop.f32.mrb[0].mxu0
        %v996 = vadd.f32 0.0, %v995
        %v997 = vpop.f32.mrb[0].mxu0
        %998 = vmatprep.mubr.bf16.mxu0 %v506
        %999 = vmatmul.mubr.bf16.gmra.mrb[0].mxu0 %v505
        %v1000 = vpop.f32.mrb[0].mxu0
        %v1001 = vadd.f32 0.0, %v1000
        %v1002 = vpop.f32.mrb[0].mxu0
        %v1003 = vpop.f32.mrb[0].mxu0
        %v1004 = vadd.f32 0.0, %v1003
        %v1005 = vpop.f32.mrb[0].mxu0
        %1006 = vmatprep.mubr.bf16.mxu0 %v510
        %1007 = vmatmul.mubr.bf16.gmra.mrb[0].mxu0 %v509
        %v1008 = vpop.f32.mrb[0].mxu0
        %v1009 = vadd.f32 0.0, %v1008
        %v1010 = vpop.f32.mrb[0].mxu0
        %v1011 = vpop.f32.mrb[0].mxu0
        %v1012 = vadd.f32 0.0, %v1011
        %v1013 = vpop.f32.mrb[0].mxu0
        %1014 = vmatprep.mubr.bf16.mxu0 %v514
        %1015 = vmatmul.mubr.bf16.gmra.mrb[0].mxu0 %v513
        %v1016 = vpop.f32.mrb[0].mxu0
        %v1017 = vadd.f32 0.0, %v1016
        %v1018 = vpop.f32.mrb[0].mxu0
        %v1019 = vpop.f32.mrb[0].mxu0
        %v1020 = vadd.f32 0.0, %v1019
        %v1021 = vpop.f32.mrb[0].mxu0
        %1022 = vmatprep.mubr.bf16.mxu0 %v518
        %1023 = vmatmul.mubr.bf16.gmra.mrb[0].mxu0 %v517
        %v1024 = vpop.f32.mrb[0].mxu0
        %v1025 = vadd.f32 0.0, %v1024
        %v1026 = vpop.f32.mrb[0].mxu0
        %v1027 = vpop.f32.mrb[0].mxu0
        %v1028 = vadd.f32 0.0, %v1027
        %v1029 = vpop.f32.mrb[0].mxu0
        %1030 = vmatprep.mubr.bf16.mxu0 %v522
        %1031 = vmatmul.mubr.bf16.gmra.mrb[0].mxu0 %v521
        %v1032 = vpop.f32.mrb[0].mxu0
        %v1033 = vadd.f32 0.0, %v1032
        %v1034 = vpop.f32.mrb[0].mxu0
        %v1035 = vpop.f32.mrb[0].mxu0
        %v1036 = vadd.f32 0.0, %v1035
        %v1037 = vpop.f32.mrb[0].mxu0
        %1038 = vmatprep.mubr.bf16.mxu0 %v526
        %1039 = vmatmul.mubr.bf16.gmra.mrb[0].mxu0 %v525
        %v1040 = vpop.f32.mrb[0].mxu0
        %v1041 = vadd.f32 0.0, %v1040
        %v1042 = vpop.f32.mrb[0].mxu0
        %v1043 = vpop.f32.mrb[0].mxu0
        %v1044 = vadd.f32 0.0, %v1043
        %v1045 = vpop.f32.mrb[0].mxu0
        %1046 = vmatprep.mubr.bf16.mxu0 %v530
        %1047 = vmatmul.mubr.bf16.gmra.mrb[0].mxu0 %v529
        %v1048 = vpop.f32.mrb[0].mxu0
        %v1049 = vadd.f32 0.0, %v1048
        %v1050 = vpop.f32.mrb[0].mxu0
        %v1051 = vpop.f32.mrb[0].mxu0
        %v1052 = vadd.f32 0.0, %v1051
        %v1053 = vpop.f32.mrb[0].mxu0
        %1054 = vmatprep.mubr.bf16.mxu0 %v534
        %1055 = vmatmul.mubr.bf16.gmra.mrb[0].mxu0 %v533
        %v1056 = vpop.f32.mrb[0].mxu0
        %v1057 = vadd.f32 0.0, %v1056
        %v1058 = vpop.f32.mrb[0].mxu0
        %v1059 = vpop.f32.mrb[0].mxu0
        %v1060 = vadd.f32 0.0, %v1059
        %v1061 = vpop.f32.mrb[0].mxu0
        %1062 = vmatprep.mubr.bf16.mxu0 %v538
        %1063 = vmatmul.mubr.bf16.gmra.mrb[0].mxu0 %v537
        %v1064 = vpop.f32.mrb[0].mxu0
        %v1065 = vadd.f32 0.0, %v1064
        %v1066 = vpop.f32.mrb[0].mxu0
        %v1067 = vpop.f32.mrb[0].mxu0
        %v1068 = vadd.f32 0.0, %v1067
        %v1069 = vpop.f32.mrb[0].mxu0
        %1070 = vmatprep.mubr.bf16.mxu0 %v542
        %1071 = vmatmul.mubr.bf16.gmra.mrb[0].mxu0 %v541
        %v1072 = vpop.f32.mrb[0].mxu0
        %v1073 = vadd.f32 0.0, %v1072
        %v1074 = vpop.f32.mrb[0].mxu0
        %v1075 = vpop.f32.mrb[0].mxu0
        %v1076 = vadd.f32 0.0, %v1075
        %v1077 = vpop.f32.mrb[0].mxu0
        %1078 = vmatprep.mubr.bf16.mxu0 %v546
        %1079 = vmatmul.mubr.bf16.gmra.mrb[0].mxu0 %v545
        %v1080 = vpop.f32.mrb[0].mxu0
        %v1081 = vadd.f32 0.0, %v1080
        %v1082 = vpop.f32.mrb[0].mxu0
        %v1083 = vpop.f32.mrb[0].mxu0
        %v1084 = vadd.f32 0.0, %v1083
        %v1085 = vpop.f32.mrb[0].mxu0
        %1086 = vmatprep.mubr.bf16.mxu0 %v550
        %1087 = vmatmul.mubr.bf16.gmra.mrb[0].mxu0 %v549
        %v1088 = vpop.f32.mrb[0].mxu0
        %v1089 = vadd.f32 0.0, %v1088
        %v1090 = vpop.f32.mrb[0].mxu0
        %v1091 = vpop.f32.mrb[0].mxu0
        %v1092 = vadd.f32 0.0, %v1091
        %v1093 = vpop.f32.mrb[0].mxu0
        %1094 = vmatprep.mubr.bf16.mxu0 %v554
        %1095 = vmatmul.mubr.bf16.gmra.mrb[0].mxu0 %v553
        %v1096 = vpop.f32.mrb[0].mxu0
        %v1097 = vadd.f32 0.0, %v1096
        %v1098 = vpop.f32.mrb[0].mxu0
        %v1099 = vpop.f32.mrb[0].mxu0
        %v1100 = vadd.f32 0.0, %v1099
        %v1101 = vpop.f32.mrb[0].mxu0
        %1102 = vmatprep.mubr.bf16.mxu0 %v558
        %1103 = vmatmul.mubr.bf16.gmra.mrb[0].mxu0 %v557
        %v1104 = vpop.f32.mrb[0].mxu0
        %v1105 = vadd.f32 0.0, %v1104
        %v1106 = vpop.f32.mrb[0].mxu0
        %v1107 = vpop.f32.mrb[0].mxu0
        %v1108 = vadd.f32 0.0, %v1107
        %v1109 = vpop.f32.mrb[0].mxu0
        %1110 = vmatprep.mubr.bf16.mxu0 %v562
        %1111 = vmatmul.mubr.bf16.gmra.mrb[0].mxu0 %v561
        %v1112 = vpop.f32.mrb[0].mxu0
        %v1113 = vadd.f32 0.0, %v1112
        %v1114 = vpop.f32.mrb[0].mxu0
        %v1115 = vpop.f32.mrb[0].mxu0
        %v1116 = vadd.f32 0.0, %v1115
        %v1117 = vpop.f32.mrb[0].mxu0
        %1118 = vmatprep.mubr.bf16.mxu0 %v566
        %1119 = vmatmul.mubr.bf16.gmra.mrb[0].mxu0 %v565
        %v1120 = vpop.f32.mrb[0].mxu0
        %v1121 = vadd.f32 0.0, %v1120
        %v1122 = vpop.f32.mrb[0].mxu0
        %v1123 = vpop.f32.mrb[0].mxu0
        %v1124 = vadd.f32 0.0, %v1123
        %v1125 = vpop.f32.mrb[0].mxu0
        %1126 = vmatprep.mubr.bf16.mxu0 %v570
        %1127 = vmatmul.mubr.bf16.gmra.mrb[0].mxu0 %v569
        %v1128 = vpop.f32.mrb[0].mxu0
        %v1129 = vadd.f32 0.0, %v1128
        %v1130 = vpop.f32.mrb[0].mxu0
        %v1131 = vpop.f32.mrb[0].mxu0
        %v1132 = vadd.f32 0.0, %v1131
        %v1133 = vpop.f32.mrb[0].mxu0
        %1134 = vmatprep.mubr.bf16.mxu0 %v574
        %1135 = vmatmul.mubr.bf16.gmra.mrb[0].mxu0 %v573
        %v1136 = vpop.f32.mrb[0].mxu0
        %v1137 = vadd.f32 0.0, %v1136
        %v1138 = vpop.f32.mrb[0].mxu0
        %v1139 = vpop.f32.mrb[0].mxu0
        %v1140 = vadd.f32 0.0, %v1139
        %v1141 = vpop.f32.mrb[0].mxu0
        %1142 = vmatprep.mubr.bf16.mxu0 %v578
        %1143 = vmatmul.mubr.bf16.gmra.mrb[0].mxu0 %v577
        %v1144 = vpop.f32.mrb[0].mxu0
        %v1145 = vadd.f32 0.0, %v1144
        %v1146 = vpop.f32.mrb[0].mxu0
        %v1147 = vpop.f32.mrb[0].mxu0
        %v1148 = vadd.f32 0.0, %v1147
        %v1149 = vpop.f32.mrb[0].mxu0
        %1150 = vmatprep.mubr.bf16.mxu0 %v582
        %1151 = vmatmul.mubr.bf16.gmra.mrb[0].mxu0 %v581
        %v1152 = vpop.f32.mrb[0].mxu0
        %v1153 = vadd.f32 0.0, %v1152
        %v1154 = vpop.f32.mrb[0].mxu0
        %v1155 = vpop.f32.mrb[0].mxu0
        %v1156 = vadd.f32 0.0, %v1155
        %v1157 = vpop.f32.mrb[0].mxu0
        %1158 = vmatprep.mubr.bf16.mxu0 %v586
        %1159 = vmatmul.mubr.bf16.gmra.mrb[0].mxu0 %v585
        %v1160 = vpop.f32.mrb[0].mxu0
        %v1161 = vadd.f32 0.0, %v1160
        %v1162 = vpop.f32.mrb[0].mxu0
        %v1163 = vpop.f32.mrb[0].mxu0
        %v1164 = vadd.f32 0.0, %v1163
        %v1165 = vpop.f32.mrb[0].mxu0
        %1166 = vmatprep.mubr.bf16.mxu0 %v590
        %1167 = vmatmul.mubr.bf16.gmra.mrb[0].mxu0 %v589
        %v1168 = vpop.f32.mrb[0].mxu0
        %v1169 = vadd.f32 0.0, %v1168
        %v1170 = vpop.f32.mrb[0].mxu0
        %v1171 = vpop.f32.mrb[0].mxu0
        %v1172 = vadd.f32 0.0, %v1171
        %v1173 = vpop.f32.mrb[0].mxu0
        %1174 = vmatprep.mubr.bf16.mxu0 %v594
        %1175 = vmatmul.mubr.bf16.gmra.mrb[0].mxu0 %v593
        %v1176 = vpop.f32.mrb[0].mxu0
        %v1177 = vadd.f32 0.0, %v1176
        %v1178 = vpop.f32.mrb[0].mxu0
        %v1179 = vpop.f32.mrb[0].mxu0
        %v1180 = vadd.f32 0.0, %v1179
        %v1181 = vpop.f32.mrb[0].mxu0
        %1182 = vmatprep.mubr.bf16.mxu0 %v598
        %1183 = vmatmul.mubr.bf16.gmra.mrb[0].mxu0 %v597
        %v1184 = vpop.f32.mrb[0].mxu0
        %v1185 = vadd.f32 0.0, %v1184
        %v1186 = vpop.f32.mrb[0].mxu0
        %v1187 = vpop.f32.mrb[0].mxu0
        %v1188 = vadd.f32 0.0, %v1187
        %v1189 = vpop.f32.mrb[0].mxu0
        %1190 = vmatprep.mubr.bf16.mxu0 %v602
        %1191 = vmatmul.mubr.bf16.gmra.mrb[0].mxu0 %v601
        %v1192 = vpop.f32.mrb[0].mxu0
        %v1193 = vadd.f32 0.0, %v1192
        %v1194 = vpop.f32.mrb[0].mxu0
        %v1195 = vpop.f32.mrb[0].mxu0
        %v1196 = vadd.f32 0.0, %v1195
        %v1197 = vpop.f32.mrb[0].mxu0
        %1198 = vmatprep.mubr.bf16.mxu0 %v606
        %1199 = vmatmul.mubr.bf16.gmra.mrb[0].mxu0 %v605
        %v1200 = vpop.f32.mrb[0].mxu0
        %v1201 = vadd.f32 0.0, %v1200
        %v1202 = vpop.f32.mrb[0].mxu0
        %v1203 = vpop.f32.mrb[0].mxu0
        %v1204 = vadd.f32 0.0, %v1203
        %v1205 = vpop.f32.mrb[0].mxu0
        %1206 = vmatprep.mubr.bf16.mxu0 %v610
        %1207 = vmatmul.mubr.bf16.gmra.mrb[0].mxu0 %v609
        %v1208 = vpop.f32.mrb[0].mxu0
        %v1209 = vadd.f32 0.0, %v1208
        %v1210 = vpop.f32.mrb[0].mxu0
        %v1211 = vpop.f32.mrb[0].mxu0
        %v1212 = vadd.f32 0.0, %v1211
        %v1213 = vpop.f32.mrb[0].mxu0
        %1214 = vmatprep.mubr.bf16.mxu0 %v614
        %1215 = vmatmul.mubr.bf16.gmra.mrb[0].mxu0 %v613
        %v1216 = vpop.f32.mrb[0].mxu0
        %v1217 = vadd.f32 0.0, %v1216
        %v1218 = vpop.f32.mrb[0].mxu0
        %v1219 = vpop.f32.mrb[0].mxu0
        %v1220 = vadd.f32 0.0, %v1219
        %v1221 = vpop.f32.mrb[0].mxu0
        %1222 = vmatprep.mubr.bf16.mxu0 %v618
        %1223 = vmatmul.mubr.bf16.gmra.mrb[0].mxu0 %v617
        %v1224 = vpop.f32.mrb[0].mxu0
        %v1225 = vadd.f32 0.0, %v1224
        %v1226 = vpop.f32.mrb[0].mxu0
        %v1227 = vpop.f32.mrb[0].mxu0
        %v1228 = vadd.f32 0.0, %v1227
        %v1229 = vpop.f32.mrb[0].mxu0
        %1230 = vmatprep.mubr.bf16.mxu0 %v622
        %1231 = vmatmul.mubr.bf16.gmra.mrb[0].mxu0 %v621
        %v1232 = vpop.f32.mrb[0].mxu0
        %v1233 = vadd.f32 0.0, %v1232
        %v1234 = vpop.f32.mrb[0].mxu0
        %v1235 = vpop.f32.mrb[0].mxu0
        %v1236 = vadd.f32 0.0, %v1235
        %v1237 = vpop.f32.mrb[0].mxu0
        %1238 = vdwg.mxu0
        %1239 = vmatprep.subr.bf16.mxu0 0
        %1240 = vmatpush1.bf16.msra.mxu0 %v902
        %1241 = vmatprep.subr.bf16.mxu0 0
        %1242 = vmatpush1.bf16.msra.mxu0 %v903
        %1243 = vmatprep.subr.bf16.mxu0 0
        %1244 = vmatpush1.bf16.msra.mxu0 %v904
        %1245 = vmatprep.subr.bf16.mxu0 0
        %1246 = vmatpush1.bf16.msra.mxu0 %v905
        %1247 = vmatprep.subr.bf16.mxu0 0
        %1248 = vmatpush1.bf16.msra.mxu0 %v906
        %1249 = vmatprep.subr.bf16.mxu0 0
        %1250 = vmatpush1.bf16.msra.mxu0 %v907
        %1251 = vmatprep.subr.bf16.mxu0 0
        %1252 = vmatpush1.bf16.msra.mxu0 %v908
        %1253 = vmatprep.subr.bf16.mxu0 0
        %1254 = vmatpush1.bf16.msra.mxu0 %v909
        %1255 = vmatprep.subr.bf16.mxu0 0
        %1256 = vmatpush1.bf16.msra.mxu0 %v910
        %1257 = vmatprep.subr.bf16.mxu0 0
        %1258 = vmatpush1.bf16.msra.mxu0 %v911
        %1259 = vmatprep.subr.bf16.mxu0 0
        %1260 = vmatpush1.bf16.msra.mxu0 %v912
        %1261 = vmatprep.subr.bf16.mxu0 0
        %1262 = vmatpush1.bf16.msra.mxu0 %v913
        %1263 = vmatprep.subr.bf16.mxu0 0
        %1264 = vmatpush1.bf16.msra.mxu0 %v914
        %1265 = vmatprep.subr.bf16.mxu0 0
        %1266 = vmatpush1.bf16.msra.mxu0 %v915
        %1267 = vmatprep.subr.bf16.mxu0 0
        %1268 = vmatpush1.bf16.msra.mxu0 %v916
        %1269 = vmatprep.subr.bf16.mxu0 0
        %1270 = vmatpush1.bf16.msra.mxu0 %v917
        %1271 = vmatprep.mubr.bf16.mxu0 %v500
        %1272 = vmatmul.mubr.bf16.gmra.mrb[0].mxu0 %v499
        %v1273 = vpop.f32.mrb[0].mxu0
        %v1274 = vadd.f32 %v985, %v1273
        %v1275 = vpop.f32.mrb[0].mxu0
        %v1276 = vpop.f32.mrb[0].mxu0
        %v1277 = vadd.f32 %v988, %v1276
        %v1278 = vpop.f32.mrb[0].mxu0
        %1279 = vmatprep.mubr.bf16.mxu0 %v504
        %1280 = vmatmul.mubr.bf16.gmra.mrb[0].mxu0 %v503
        %v1281 = vpop.f32.mrb[0].mxu0
        %v1282 = vadd.f32 %v993, %v1281
        %v1283 = vpop.f32.mrb[0].mxu0
        %v1284 = vpop.f32.mrb[0].mxu0
        %v1285 = vadd.f32 %v996, %v1284
        %v1286 = vpop.f32.mrb[0].mxu0
        %1287 = vmatprep.mubr.bf16.mxu0 %v508
        %1288 = vmatmul.mubr.bf16.gmra.mrb[0].mxu0 %v507
        %v1289 = vpop.f32.mrb[0].mxu0
        %v1290 = vadd.f32 %v1001, %v1289
        %v1291 = vpop.f32.mrb[0].mxu0
        %v1292 = vpop.f32.mrb[0].mxu0
        %v1293 = vadd.f32 %v1004, %v1292
        %v1294 = vpop.f32.mrb[0].mxu0
        %1295 = vmatprep.mubr.bf16.mxu0 %v512
        %1296 = vmatmul.mubr.bf16.gmra.mrb[0].mxu0 %v511
        %v1297 = vpop.f32.mrb[0].mxu0
        %v1298 = vadd.f32 %v1009, %v1297
        %v1299 = vpop.f32.mrb[0].mxu0
        %v1300 = vpop.f32.mrb[0].mxu0
        %v1301 = vadd.f32 %v1012, %v1300
        %v1302 = vpop.f32.mrb[0].mxu0
        %1303 = vmatprep.mubr.bf16.mxu0 %v516
        %1304 = vmatmul.mubr.bf16.gmra.mrb[0].mxu0 %v515
        %v1305 = vpop.f32.mrb[0].mxu0
        %v1306 = vadd.f32 %v1017, %v1305
        %v1307 = vpop.f32.mrb[0].mxu0
        %v1308 = vpop.f32.mrb[0].mxu0
        %v1309 = vadd.f32 %v1020, %v1308
        %v1310 = vpop.f32.mrb[0].mxu0
        %1311 = vmatprep.mubr.bf16.mxu0 %v520
        %1312 = vmatmul.mubr.bf16.gmra.mrb[0].mxu0 %v519
        %v1313 = vpop.f32.mrb[0].mxu0
        %v1314 = vadd.f32 %v1025, %v1313
        %v1315 = vpop.f32.mrb[0].mxu0
        %v1316 = vpop.f32.mrb[0].mxu0
        %v1317 = vadd.f32 %v1028, %v1316
        %v1318 = vpop.f32.mrb[0].mxu0
        %1319 = vmatprep.mubr.bf16.mxu0 %v524
        %1320 = vmatmul.mubr.bf16.gmra.mrb[0].mxu0 %v523
        %v1321 = vpop.f32.mrb[0].mxu0
        %v1322 = vadd.f32 %v1033, %v1321
        %v1323 = vpop.f32.mrb[0].mxu0
        %v1324 = vpop.f32.mrb[0].mxu0
        %v1325 = vadd.f32 %v1036, %v1324
        %v1326 = vpop.f32.mrb[0].mxu0
        %1327 = vmatprep.mubr.bf16.mxu0 %v528
        %1328 = vmatmul.mubr.bf16.gmra.mrb[0].mxu0 %v527
        %v1329 = vpop.f32.mrb[0].mxu0
        %v1330 = vadd.f32 %v1041, %v1329
        %v1331 = vpop.f32.mrb[0].mxu0
        %v1332 = vpop.f32.mrb[0].mxu0
        %v1333 = vadd.f32 %v1044, %v1332
        %v1334 = vpop.f32.mrb[0].mxu0
        %1335 = vmatprep.mubr.bf16.mxu0 %v532
        %1336 = vmatmul.mubr.bf16.gmra.mrb[0].mxu0 %v531
        %v1337 = vpop.f32.mrb[0].mxu0
        %v1338 = vadd.f32 %v1049, %v1337
        %v1339 = vpop.f32.mrb[0].mxu0
        %v1340 = vpop.f32.mrb[0].mxu0
        %v1341 = vadd.f32 %v1052, %v1340
        %v1342 = vpop.f32.mrb[0].mxu0
        %1343 = vmatprep.mubr.bf16.mxu0 %v536
        %1344 = vmatmul.mubr.bf16.gmra.mrb[0].mxu0 %v535
        %v1345 = vpop.f32.mrb[0].mxu0
        %v1346 = vadd.f32 %v1057, %v1345
        %v1347 = vpop.f32.mrb[0].mxu0
        %v1348 = vpop.f32.mrb[0].mxu0
        %v1349 = vadd.f32 %v1060, %v1348
        %v1350 = vpop.f32.mrb[0].mxu0
        %1351 = vmatprep.mubr.bf16.mxu0 %v540
        %1352 = vmatmul.mubr.bf16.gmra.mrb[0].mxu0 %v539
        %v1353 = vpop.f32.mrb[0].mxu0
        %v1354 = vadd.f32 %v1065, %v1353
        %v1355 = vpop.f32.mrb[0].mxu0
        %v1356 = vpop.f32.mrb[0].mxu0
        %v1357 = vadd.f32 %v1068, %v1356
        %v1358 = vpop.f32.mrb[0].mxu0
        %1359 = vmatprep.mubr.bf16.mxu0 %v544
        %1360 = vmatmul.mubr.bf16.gmra.mrb[0].mxu0 %v543
        %v1361 = vpop.f32.mrb[0].mxu0
        %v1362 = vadd.f32 %v1073, %v1361
        %v1363 = vpop.f32.mrb[0].mxu0
        %v1364 = vpop.f32.mrb[0].mxu0
        %v1365 = vadd.f32 %v1076, %v1364
        %v1366 = vpop.f32.mrb[0].mxu0
        %1367 = vmatprep.mubr.bf16.mxu0 %v548
        %1368 = vmatmul.mubr.bf16.gmra.mrb[0].mxu0 %v547
        %v1369 = vpop.f32.mrb[0].mxu0
        %v1370 = vadd.f32 %v1081, %v1369
        %v1371 = vpop.f32.mrb[0].mxu0
        %v1372 = vpop.f32.mrb[0].mxu0
        %v1373 = vadd.f32 %v1084, %v1372
        %v1374 = vpop.f32.mrb[0].mxu0
        %1375 = vmatprep.mubr.bf16.mxu0 %v552
        %1376 = vmatmul.mubr.bf16.gmra.mrb[0].mxu0 %v551
        %v1377 = vpop.f32.mrb[0].mxu0
        %v1378 = vadd.f32 %v1089, %v1377
        %v1379 = vpop.f32.mrb[0].mxu0
        %v1380 = vpop.f32.mrb[0].mxu0
        %v1381 = vadd.f32 %v1092, %v1380
        %v1382 = vpop.f32.mrb[0].mxu0
        %1383 = vmatprep.mubr.bf16.mxu0 %v556
        %1384 = vmatmul.mubr.bf16.gmra.mrb[0].mxu0 %v555
        %v1385 = vpop.f32.mrb[0].mxu0
        %v1386 = vadd.f32 %v1097, %v1385
        %v1387 = vpop.f32.mrb[0].mxu0
        %v1388 = vpop.f32.mrb[0].mxu0
        %v1389 = vadd.f32 %v1100, %v1388
        %v1390 = vpop.f32.mrb[0].mxu0
        %1391 = vmatprep.mubr.bf16.mxu0 %v560
        %1392 = vmatmul.mubr.bf16.gmra.mrb[0].mxu0 %v559
        %v1393 = vpop.f32.mrb[0].mxu0
        %v1394 = vadd.f32 %v1105, %v1393
        %v1395 = vpop.f32.mrb[0].mxu0
        %v1396 = vpop.f32.mrb[0].mxu0
        %v1397 = vadd.f32 %v1108, %v1396
        %v1398 = vpop.f32.mrb[0].mxu0
        %1399 = vmatprep.mubr.bf16.mxu0 %v564
        %1400 = vmatmul.mubr.bf16.gmra.mrb[0].mxu0 %v563
        %v1401 = vpop.f32.mrb[0].mxu0
        %v1402 = vadd.f32 %v1113, %v1401
        %v1403 = vpop.f32.mrb[0].mxu0
        %v1404 = vpop.f32.mrb[0].mxu0
        %v1405 = vadd.f32 %v1116, %v1404
        %v1406 = vpop.f32.mrb[0].mxu0
        %1407 = vmatprep.mubr.bf16.mxu0 %v568
        %1408 = vmatmul.mubr.bf16.gmra.mrb[0].mxu0 %v567
        %v1409 = vpop.f32.mrb[0].mxu0
        %v1410 = vadd.f32 %v1121, %v1409
        %v1411 = vpop.f32.mrb[0].mxu0
        %v1412 = vpop.f32.mrb[0].mxu0
        %v1413 = vadd.f32 %v1124, %v1412
        %v1414 = vpop.f32.mrb[0].mxu0
        %1415 = vmatprep.mubr.bf16.mxu0 %v572
        %1416 = vmatmul.mubr.bf16.gmra.mrb[0].mxu0 %v571
        %v1417 = vpop.f32.mrb[0].mxu0
        %v1418 = vadd.f32 %v1129, %v1417
        %v1419 = vpop.f32.mrb[0].mxu0
        %v1420 = vpop.f32.mrb[0].mxu0
        %v1421 = vadd.f32 %v1132, %v1420
        %v1422 = vpop.f32.mrb[0].mxu0
        %1423 = vmatprep.mubr.bf16.mxu0 %v576
        %1424 = vmatmul.mubr.bf16.gmra.mrb[0].mxu0 %v575
        %v1425 = vpop.f32.mrb[0].mxu0
        %v1426 = vadd.f32 %v1137, %v1425
        %v1427 = vpop.f32.mrb[0].mxu0
        %v1428 = vpop.f32.mrb[0].mxu0
        %v1429 = vadd.f32 %v1140, %v1428
        %v1430 = vpop.f32.mrb[0].mxu0
        %1431 = vmatprep.mubr.bf16.mxu0 %v580
        %1432 = vmatmul.mubr.bf16.gmra.mrb[0].mxu0 %v579
        %v1433 = vpop.f32.mrb[0].mxu0
        %v1434 = vadd.f32 %v1145, %v1433
        %v1435 = vpop.f32.mrb[0].mxu0
        %v1436 = vpop.f32.mrb[0].mxu0
        %v1437 = vadd.f32 %v1148, %v1436
        %v1438 = vpop.f32.mrb[0].mxu0
        %1439 = vmatprep.mubr.bf16.mxu0 %v584
        %1440 = vmatmul.mubr.bf16.gmra.mrb[0].mxu0 %v583
        %v1441 = vpop.f32.mrb[0].mxu0
        %v1442 = vadd.f32 %v1153, %v1441
        %v1443 = vpop.f32.mrb[0].mxu0
        %v1444 = vpop.f32.mrb[0].mxu0
        %v1445 = vadd.f32 %v1156, %v1444
        %v1446 = vpop.f32.mrb[0].mxu0
        %1447 = vmatprep.mubr.bf16.mxu0 %v588
        %1448 = vmatmul.mubr.bf16.gmra.mrb[0].mxu0 %v587
        %v1449 = vpop.f32.mrb[0].mxu0
        %v1450 = vadd.f32 %v1161, %v1449
        %v1451 = vpop.f32.mrb[0].mxu0
        %v1452 = vpop.f32.mrb[0].mxu0
        %v1453 = vadd.f32 %v1164, %v1452
        %v1454 = vpop.f32.mrb[0].mxu0
        %1455 = vmatprep.mubr.bf16.mxu0 %v592
        %1456 = vmatmul.mubr.bf16.gmra.mrb[0].mxu0 %v591
        %v1457 = vpop.f32.mrb[0].mxu0
        %v1458 = vadd.f32 %v1169, %v1457
        %v1459 = vpop.f32.mrb[0].mxu0
        %v1460 = vpop.f32.mrb[0].mxu0
        %v1461 = vadd.f32 %v1172, %v1460
        %v1462 = vpop.f32.mrb[0].mxu0
        %1463 = vmatprep.mubr.bf16.mxu0 %v596
        %1464 = vmatmul.mubr.bf16.gmra.mrb[0].mxu0 %v595
        %v1465 = vpop.f32.mrb[0].mxu0
        %v1466 = vadd.f32 %v1177, %v1465
        %v1467 = vpop.f32.mrb[0].mxu0
        %v1468 = vpop.f32.mrb[0].mxu0
        %v1469 = vadd.f32 %v1180, %v1468
        %v1470 = vpop.f32.mrb[0].mxu0
        %1471 = vmatprep.mubr.bf16.mxu0 %v600
        %1472 = vmatmul.mubr.bf16.gmra.mrb[0].mxu0 %v599
        %v1473 = vpop.f32.mrb[0].mxu0
        %v1474 = vadd.f32 %v1185, %v1473
        %v1475 = vpop.f32.mrb[0].mxu0
        %v1476 = vpop.f32.mrb[0].mxu0
        %v1477 = vadd.f32 %v1188, %v1476
        %v1478 = vpop.f32.mrb[0].mxu0
        %1479 = vmatprep.mubr.bf16.mxu0 %v604
        %1480 = vmatmul.mubr.bf16.gmra.mrb[0].mxu0 %v603
        %v1481 = vpop.f32.mrb[0].mxu0
        %v1482 = vadd.f32 %v1193, %v1481
        %v1483 = vpop.f32.mrb[0].mxu0
        %v1484 = vpop.f32.mrb[0].mxu0
        %v1485 = vadd.f32 %v1196, %v1484
        %v1486 = vpop.f32.mrb[0].mxu0
        %1487 = vmatprep.mubr.bf16.mxu0 %v608
        %1488 = vmatmul.mubr.bf16.gmra.mrb[0].mxu0 %v607
        %v1489 = vpop.f32.mrb[0].mxu0
        %v1490 = vadd.f32 %v1201, %v1489
        %v1491 = vpop.f32.mrb[0].mxu0
        %v1492 = vpop.f32.mrb[0].mxu0
        %v1493 = vadd.f32 %v1204, %v1492
        %v1494 = vpop.f32.mrb[0].mxu0
        %1495 = vmatprep.mubr.bf16.mxu0 %v612
        %1496 = vmatmul.mubr.bf16.gmra.mrb[0].mxu0 %v611
        %v1497 = vpop.f32.mrb[0].mxu0
        %v1498 = vadd.f32 %v1209, %v1497
        %v1499 = vpop.f32.mrb[0].mxu0
        %v1500 = vpop.f32.mrb[0].mxu0
        %v1501 = vadd.f32 %v1212, %v1500
        %v1502 = vpop.f32.mrb[0].mxu0
        %1503 = vmatprep.mubr.bf16.mxu0 %v616
        %1504 = vmatmul.mubr.bf16.gmra.mrb[0].mxu0 %v615
        %v1505 = vpop.f32.mrb[0].mxu0
        %v1506 = vadd.f32 %v1217, %v1505
        %v1507 = vpop.f32.mrb[0].mxu0
        %v1508 = vpop.f32.mrb[0].mxu0
        %v1509 = vadd.f32 %v1220, %v1508
        %v1510 = vpop.f32.mrb[0].mxu0
        %1511 = vmatprep.mubr.bf16.mxu0 %v620
        %1512 = vmatmul.mubr.bf16.gmra.mrb[0].mxu0 %v619
        %v1513 = vpop.f32.mrb[0].mxu0
        %v1514 = vadd.f32 %v1225, %v1513
        %v1515 = vpop.f32.mrb[0].mxu0
        %v1516 = vpop.f32.mrb[0].mxu0
        %v1517 = vadd.f32 %v1228, %v1516
        %v1518 = vpop.f32.mrb[0].mxu0
        %1519 = vmatprep.mubr.bf16.mxu0 %v624
        %1520 = vmatmul.mubr.bf16.gmra.mrb[0].mxu0 %v623
        %v1521 = vpop.f32.mrb[0].mxu0
        %v1522 = vadd.f32 %v1233, %v1521
        %v1523 = vpop.f32.mrb[0].mxu0
        %v1524 = vpop.f32.mrb[0].mxu0
        %v1525 = vadd.f32 %v1236, %v1524
        %v1526 = vpop.f32.mrb[0].mxu0
        %1527 = vdwg.mxu0
        %v1528 = vadd.f32 %v625, %v1274
        %v1529 = vadd.f32 %v626, %v1277
        %v1530 = vadd.f32 %v627, %v1282
        %v1531 = vadd.f32 %v628, %v1285
        %v1532 = vadd.f32 %v629, %v1290
        %v1533 = vadd.f32 %v630, %v1293
        %v1534 = vadd.f32 %v631, %v1298
        %v1535 = vadd.f32 %v632, %v1301
        %v1536 = vadd.f32 %v633, %v1306
        %v1537 = vadd.f32 %v634, %v1309
        %v1538 = vadd.f32 %v635, %v1314
        %v1539 = vadd.f32 %v636, %v1317
        %v1540 = vadd.f32 %v637, %v1322
        %v1541 = vadd.f32 %v638, %v1325
        %v1542 = vadd.f32 %v639, %v1330
        %v1543 = vadd.f32 %v640, %v1333
        %v1544 = vadd.f32 %v641, %v1338
        %v1545 = vadd.f32 %v642, %v1341
        %v1546 = vadd.f32 %v643, %v1346
        %v1547 = vadd.f32 %v644, %v1349
        %v1548 = vadd.f32 %v645, %v1354
        %v1549 = vadd.f32 %v646, %v1357
        %v1550 = vadd.f32 %v647, %v1362
        %v1551 = vadd.f32 %v648, %v1365
        %v1552 = vadd.f32 %v649, %v1370
        %v1553 = vadd.f32 %v650, %v1373
        %v1554 = vadd.f32 %v651, %v1378
        %v1555 = vadd.f32 %v652, %v1381
        %v1556 = vadd.f32 %v653, %v1386
        %v1557 = vadd.f32 %v654, %v1389
        %v1558 = vadd.f32 %v655, %v1394
        %v1559 = vadd.f32 %v656, %v1397
        %v1560 = vadd.f32 %v657, %v1402
        %v1561 = vadd.f32 %v658, %v1405
        %v1562 = vadd.f32 %v659, %v1410
        %v1563 = vadd.f32 %v660, %v1413
        %v1564 = vadd.f32 %v661, %v1418
        %v1565 = vadd.f32 %v662, %v1421
        %v1566 = vadd.f32 %v663, %v1426
        %v1567 = vadd.f32 %v664, %v1429
        %v1568 = vadd.f32 %v665, %v1434
        %v1569 = vadd.f32 %v666, %v1437
        %v1570 = vadd.f32 %v667, %v1442
        %v1571 = vadd.f32 %v668, %v1445
        %v1572 = vadd.f32 %v669, %v1450
        %v1573 = vadd.f32 %v670, %v1453
        %v1574 = vadd.f32 %v671, %v1458
        %v1575 = vadd.f32 %v672, %v1461
        %v1576 = vadd.f32 %v673, %v1466
        %v1577 = vadd.f32 %v674, %v1469
        %v1578 = vadd.f32 %v675, %v1474
        %v1579 = vadd.f32 %v676, %v1477
        %v1580 = vadd.f32 %v677, %v1482
        %v1581 = vadd.f32 %v678, %v1485
        %v1582 = vadd.f32 %v679, %v1490
        %v1583 = vadd.f32 %v680, %v1493
        %v1584 = vadd.f32 %v681, %v1498
        %v1585 = vadd.f32 %v682, %v1501
        %v1586 = vadd.f32 %v683, %v1506
        %v1587 = vadd.f32 %v684, %v1509
        %v1588 = vadd.f32 %v685, %v1514
        %v1589 = vadd.f32 %v686, %v1517
        %v1590 = vadd.f32 %v687, %v1522
        %v1591 = vadd.f32 %v688, %v1525
        %1592 = vst [vmem:[#allocation2] sm:$0xff] %v1528
        %1593 = vst [vmem:[#allocation2 + $0x8] sm:$0xff] %v1529
        %1594 = vst [vmem:[#allocation2 + $0x10] sm:$0xff] %v1530
        %1595 = vst [vmem:[#allocation2 + $0x18] sm:$0xff] %v1531
        %1596 = vst [vmem:[#allocation2 + $0x20] sm:$0xff] %v1532
        %1597 = vst [vmem:[#allocation2 + $0x28] sm:$0xff] %v1533
        %1598 = vst [vmem:[#allocation2 + $0x30] sm:$0xff] %v1534
        %1599 = vst [vmem:[#allocation2 + $0x38] sm:$0xff] %v1535
        %1600 = vst [vmem:[#allocation2 + $0x40] sm:$0xff] %v1536
        %1601 = vst [vmem:[#allocation2 + $0x48] sm:$0xff] %v1537
        %1602 = vst [vmem:[#allocation2 + $0x50] sm:$0xff] %v1538
        %1603 = vst [vmem:[#allocation2 + $0x58] sm:$0xff] %v1539
        %1604 = vst [vmem:[#allocation2 + $0x60] sm:$0xff] %v1540
        %1605 = vst [vmem:[#allocation2 + $0x68] sm:$0xff] %v1541
        %1606 = vst [vmem:[#allocation2 + $0x70] sm:$0xff] %v1542
        %1607 = vst [vmem:[#allocation2 + $0x78] sm:$0xff] %v1543
        %1608 = vst [vmem:[#allocation2 + $0x80] sm:$0xff] %v1544
        %1609 = vst [vmem:[#allocation2 + $0x88] sm:$0xff] %v1545
        %1610 = vst [vmem:[#allocation2 + $0x90] sm:$0xff] %v1546
        %1611 = vst [vmem:[#allocation2 + $0x98] sm:$0xff] %v1547
        %1612 = vst [vmem:[#allocation2 + $0xa0] sm:$0xff] %v1548
        %1613 = vst [vmem:[#allocation2 + $0xa8] sm:$0xff] %v1549
        %1614 = vst [vmem:[#allocation2 + $0xb0] sm:$0xff] %v1550
        %1615 = vst [vmem:[#allocation2 + $0xb8] sm:$0xff] %v1551
        %1616 = vst [vmem:[#allocation2 + $0xc0] sm:$0xff] %v1552
        %1617 = vst [vmem:[#allocation2 + $0xc8] sm:$0xff] %v1553
        %1618 = vst [vmem:[#allocation2 + $0xd0] sm:$0xff] %v1554
        %1619 = vst [vmem:[#allocation2 + $0xd8] sm:$0xff] %v1555
        %1620 = vst [vmem:[#allocation2 + $0xe0] sm:$0xff] %v1556
        %1621 = vst [vmem:[#allocation2 + $0xe8] sm:$0xff] %v1557
        %1622 = vst [vmem:[#allocation2 + $0xf0] sm:$0xff] %v1558
        %1623 = vst [vmem:[#allocation2 + $0xf8] sm:$0xff] %v1559
        %1624 = vst [vmem:[#allocation2 + $0x100] sm:$0xff] %v1560
        %1625 = vst [vmem:[#allocation2 + $0x108] sm:$0xff] %v1561
        %1626 = vst [vmem:[#allocation2 + $0x110] sm:$0xff] %v1562
        %1627 = vst [vmem:[#allocation2 + $0x118] sm:$0xff] %v1563
        %1628 = vst [vmem:[#allocation2 + $0x120] sm:$0xff] %v1564
        %1629 = vst [vmem:[#allocation2 + $0x128] sm:$0xff] %v1565
        %1630 = vst [vmem:[#allocation2 + $0x130] sm:$0xff] %v1566
        %1631 = vst [vmem:[#allocation2 + $0x138] sm:$0xff] %v1567
        %1632 = vst [vmem:[#allocation2 + $0x140] sm:$0xff] %v1568
        %1633 = vst [vmem:[#allocation2 + $0x148] sm:$0xff] %v1569
        %1634 = vst [vmem:[#allocation2 + $0x150] sm:$0xff] %v1570
        %1635 = vst [vmem:[#allocation2 + $0x158] sm:$0xff] %v1571
        %1636 = vst [vmem:[#allocation2 + $0x160] sm:$0xff] %v1572
        %1637 = vst [vmem:[#allocation2 + $0x168] sm:$0xff] %v1573
        %1638 = vst [vmem:[#allocation2 + $0x170] sm:$0xff] %v1574
        %1639 = vst [vmem:[#allocation2 + $0x178] sm:$0xff] %v1575
        %1640 = vst [vmem:[#allocation2 + $0x180] sm:$0xff] %v1576
        %1641 = vst [vmem:[#allocation2 + $0x188] sm:$0xff] %v1577
        %1642 = vst [vmem:[#allocation2 + $0x190] sm:$0xff] %v1578
        %1643 = vst [vmem:[#allocation2 + $0x198] sm:$0xff] %v1579
        %1644 = vst [vmem:[#allocation2 + $0x1a0] sm:$0xff] %v1580
        %1645 = vst [vmem:[#allocation2 + $0x1a8] sm:$0xff] %v1581
        %1646 = vst [vmem:[#allocation2 + $0x1b0] sm:$0xff] %v1582
        %1647 = vst [vmem:[#allocation2 + $0x1b8] sm:$0xff] %v1583
        %1648 = vst [vmem:[#allocation2 + $0x1c0] sm:$0xff] %v1584
        %1649 = vst [vmem:[#allocation2 + $0x1c8] sm:$0xff] %v1585
        %1650 = vst [vmem:[#allocation2 + $0x1d0] sm:$0xff] %v1586
        %1651 = vst [vmem:[#allocation2 + $0x1d8] sm:$0xff] %v1587
        %1652 = vst [vmem:[#allocation2 + $0x1e0] sm:$0xff] %v1588
        %1653 = vst [vmem:[#allocation2 + $0x1e8] sm:$0xff] %v1589
        %1654 = vst [vmem:[#allocation2 + $0x1f0] sm:$0xff] %v1590
        %1655 = vst [vmem:[#allocation2 + $0x1f8] sm:$0xff] %v1591
        %p1656 = scmp.eq.s32.totalorder %s20, 1
        // Predicated region
        $region64: #{gcn_forward.2} parent=54 // pred_check
          %p1657 = pneg %p1656
        $region65: #{gcn_forward.2} parent=54 // pred_check_branch
          %1659 = sbr.rel (%p1657) target = $region67
        $region66: #{gcn_forward.2} parent=54 // pred_region
          %v1660 = vld [vmem:[#allocation2] sm:$0xff]
          %v1661 = vld [vmem:[#allocation2 + $0x8] sm:$0xff]
          %v1662 = vld [vmem:[#allocation2 + $0x10] sm:$0xff]
          %v1663 = vld [vmem:[#allocation2 + $0x18] sm:$0xff]
          %v1664 = vld [vmem:[#allocation2 + $0x20] sm:$0xff]
          %v1665 = vld [vmem:[#allocation2 + $0x28] sm:$0xff]
          %v1666 = vld [vmem:[#allocation2 + $0x30] sm:$0xff]
          %v1667 = vld [vmem:[#allocation2 + $0x38] sm:$0xff]
          %v1668 = vld [vmem:[#allocation2 + $0x40] sm:$0xff]
          %v1669 = vld [vmem:[#allocation2 + $0x48] sm:$0xff]
          %v1670 = vld [vmem:[#allocation2 + $0x50] sm:$0xff]
          %v1671 = vld [vmem:[#allocation2 + $0x58] sm:$0xff]
          %v1672 = vld [vmem:[#allocation2 + $0x60] sm:$0xff]
          %v1673 = vld [vmem:[#allocation2 + $0x68] sm:$0xff]
          %v1674 = vld [vmem:[#allocation2 + $0x70] sm:$0xff]
          %v1675 = vld [vmem:[#allocation2 + $0x78] sm:$0xff]
          %v1676 = vld [vmem:[#allocation2 + $0x80] sm:$0xff]
          %v1677 = vld [vmem:[#allocation2 + $0x88] sm:$0xff]
          %v1678 = vld [vmem:[#allocation2 + $0x90] sm:$0xff]
          %v1679 = vld [vmem:[#allocation2 + $0x98] sm:$0xff]
          %v1680 = vld [vmem:[#allocation2 + $0xa0] sm:$0xff]
          %v1681 = vld [vmem:[#allocation2 + $0xa8] sm:$0xff]
          %v1682 = vld [vmem:[#allocation2 + $0xb0] sm:$0xff]
          %v1683 = vld [vmem:[#allocation2 + $0xb8] sm:$0xff]
          %v1684 = vld [vmem:[#allocation2 + $0xc0] sm:$0xff]
          %v1685 = vld [vmem:[#allocation2 + $0xc8] sm:$0xff]
          %v1686 = vld [vmem:[#allocation2 + $0xd0] sm:$0xff]
          %v1687 = vld [vmem:[#allocation2 + $0xd8] sm:$0xff]
          %v1688 = vld [vmem:[#allocation2 + $0xe0] sm:$0xff]
          %v1689 = vld [vmem:[#allocation2 + $0xe8] sm:$0xff]
          %v1690 = vld [vmem:[#allocation2 + $0xf0] sm:$0xff]
          %v1691 = vld [vmem:[#allocation2 + $0xf8] sm:$0xff]
          %v1692 = vld [vmem:[#allocation2 + $0x100] sm:$0xff]
          %v1693 = vld [vmem:[#allocation2 + $0x108] sm:$0xff]
          %v1694 = vld [vmem:[#allocation2 + $0x110] sm:$0xff]
          %v1695 = vld [vmem:[#allocation2 + $0x118] sm:$0xff]
          %v1696 = vld [vmem:[#allocation2 + $0x120] sm:$0xff]
          %v1697 = vld [vmem:[#allocation2 + $0x128] sm:$0xff]
          %v1698 = vld [vmem:[#allocation2 + $0x130] sm:$0xff]
          %v1699 = vld [vmem:[#allocation2 + $0x138] sm:$0xff]
          %v1700 = vld [vmem:[#allocation2 + $0x140] sm:$0xff]
          %v1701 = vld [vmem:[#allocation2 + $0x148] sm:$0xff]
          %v1702 = vld [vmem:[#allocation2 + $0x150] sm:$0xff]
          %v1703 = vld [vmem:[#allocation2 + $0x158] sm:$0xff]
          %v1704 = vld [vmem:[#allocation2 + $0x160] sm:$0xff]
          %v1705 = vld [vmem:[#allocation2 + $0x168] sm:$0xff]
          %v1706 = vld [vmem:[#allocation2 + $0x170] sm:$0xff]
          %v1707 = vld [vmem:[#allocation2 + $0x178] sm:$0xff]
          %v1708 = vld [vmem:[#allocation2 + $0x180] sm:$0xff]
          %v1709 = vld [vmem:[#allocation2 + $0x188] sm:$0xff]
          %v1710 = vld [vmem:[#allocation2 + $0x190] sm:$0xff]
          %v1711 = vld [vmem:[#allocation2 + $0x198] sm:$0xff]
          %v1712 = vld [vmem:[#allocation2 + $0x1a0] sm:$0xff]
          %v1713 = vld [vmem:[#allocation2 + $0x1a8] sm:$0xff]
          %v1714 = vld [vmem:[#allocation2 + $0x1b0] sm:$0xff]
          %v1715 = vld [vmem:[#allocation2 + $0x1b8] sm:$0xff]
          %v1716 = vld [vmem:[#allocation2 + $0x1c0] sm:$0xff]
          %v1717 = vld [vmem:[#allocation2 + $0x1c8] sm:$0xff]
          %v1718 = vld [vmem:[#allocation2 + $0x1d0] sm:$0xff]
          %v1719 = vld [vmem:[#allocation2 + $0x1d8] sm:$0xff]
          %v1720 = vld [vmem:[#allocation2 + $0x1e0] sm:$0xff]
          %v1721 = vld [vmem:[#allocation2 + $0x1e8] sm:$0xff]
          %v1722 = vld [vmem:[#allocation2 + $0x1f0] sm:$0xff]
          %v1723 = vld [vmem:[#allocation2 + $0x1f8] sm:$0xff]
          %v1724 = vld [vmem:[%s2] sm:$0x1]
          %v1726 = vlaneseq
          %v1727 = vshrl.u32 %v1726, 7
          %v1728 = vsub.s32 0, %v1727
          %v1729 = vrot.slane %v1724, %v1728
          %v1731 = vadd.f32 %v1660, %v1729
          %v1732 = vadd.f32 %v1661, %v1729
          %v1733 = vadd.f32 %v1662, %v1729
          %v1734 = vadd.f32 %v1663, %v1729
          %v1735 = vadd.f32 %v1664, %v1729
          %v1736 = vadd.f32 %v1665, %v1729
          %v1737 = vadd.f32 %v1666, %v1729
          %v1738 = vadd.f32 %v1667, %v1729
          %v1739 = vadd.f32 %v1668, %v1729
          %v1740 = vadd.f32 %v1669, %v1729
          %v1741 = vadd.f32 %v1670, %v1729
          %v1742 = vadd.f32 %v1671, %v1729
          %v1743 = vadd.f32 %v1672, %v1729
          %v1744 = vadd.f32 %v1673, %v1729
          %v1745 = vadd.f32 %v1674, %v1729
          %v1746 = vadd.f32 %v1675, %v1729
          %v1747 = vadd.f32 %v1676, %v1729
          %v1748 = vadd.f32 %v1677, %v1729
          %v1749 = vadd.f32 %v1678, %v1729
          %v1750 = vadd.f32 %v1679, %v1729
          %v1751 = vadd.f32 %v1680, %v1729
          %v1752 = vadd.f32 %v1681, %v1729
          %v1753 = vadd.f32 %v1682, %v1729
          %v1754 = vadd.f32 %v1683, %v1729
          %v1755 = vadd.f32 %v1684, %v1729
          %v1756 = vadd.f32 %v1685, %v1729
          %v1757 = vadd.f32 %v1686, %v1729
          %v1758 = vadd.f32 %v1687, %v1729
          %v1759 = vadd.f32 %v1688, %v1729
          %v1760 = vadd.f32 %v1689, %v1729
          %v1761 = vadd.f32 %v1690, %v1729
          %v1762 = vadd.f32 %v1691, %v1729
          %v1763 = vadd.f32 %v1692, %v1729
          %v1764 = vadd.f32 %v1693, %v1729
          %v1765 = vadd.f32 %v1694, %v1729
          %v1766 = vadd.f32 %v1695, %v1729
          %v1767 = vadd.f32 %v1696, %v1729
          %v1768 = vadd.f32 %v1697, %v1729
          %v1769 = vadd.f32 %v1698, %v1729
          %v1770 = vadd.f32 %v1699, %v1729
          %v1771 = vadd.f32 %v1700, %v1729
          %v1772 = vadd.f32 %v1701, %v1729
          %v1773 = vadd.f32 %v1702, %v1729
          %v1774 = vadd.f32 %v1703, %v1729
          %v1775 = vadd.f32 %v1704, %v1729
          %v1776 = vadd.f32 %v1705, %v1729
          %v1777 = vadd.f32 %v1706, %v1729
          %v1778 = vadd.f32 %v1707, %v1729
          %v1779 = vadd.f32 %v1708, %v1729
          %v1780 = vadd.f32 %v1709, %v1729
          %v1781 = vadd.f32 %v1710, %v1729
          %v1782 = vadd.f32 %v1711, %v1729
          %v1783 = vadd.f32 %v1712, %v1729
          %v1784 = vadd.f32 %v1713, %v1729
          %v1785 = vadd.f32 %v1714, %v1729
          %v1786 = vadd.f32 %v1715, %v1729
          %v1787 = vadd.f32 %v1716, %v1729
          %v1788 = vadd.f32 %v1717, %v1729
          %v1789 = vadd.f32 %v1718, %v1729
          %v1790 = vadd.f32 %v1719, %v1729
          %v1791 = vadd.f32 %v1720, %v1729
          %v1792 = vadd.f32 %v1721, %v1729
          %v1793 = vadd.f32 %v1722, %v1729
          %v1794 = vadd.f32 %v1723, %v1729
          %v1795 = vmax.f32 %v1731, 0.0
          %v1796 = vmax.f32 %v1732, 0.0
          %v1797 = vmax.f32 %v1733, 0.0
          %v1798 = vmax.f32 %v1734, 0.0
          %v1799 = vmax.f32 %v1735, 0.0
          %v1800 = vmax.f32 %v1736, 0.0
          %v1801 = vmax.f32 %v1737, 0.0
          %v1802 = vmax.f32 %v1738, 0.0
          %v1803 = vmax.f32 %v1739, 0.0
          %v1804 = vmax.f32 %v1740, 0.0
          %v1805 = vmax.f32 %v1741, 0.0
          %v1806 = vmax.f32 %v1742, 0.0
          %v1807 = vmax.f32 %v1743, 0.0
          %v1808 = vmax.f32 %v1744, 0.0
          %v1809 = vmax.f32 %v1745, 0.0
          %v1810 = vmax.f32 %v1746, 0.0
          %v1811 = vmax.f32 %v1747, 0.0
          %v1812 = vmax.f32 %v1748, 0.0
          %v1813 = vmax.f32 %v1749, 0.0
          %v1814 = vmax.f32 %v1750, 0.0
          %v1815 = vmax.f32 %v1751, 0.0
          %v1816 = vmax.f32 %v1752, 0.0
          %v1817 = vmax.f32 %v1753, 0.0
          %v1818 = vmax.f32 %v1754, 0.0
          %v1819 = vmax.f32 %v1755, 0.0
          %v1820 = vmax.f32 %v1756, 0.0
          %v1821 = vmax.f32 %v1757, 0.0
          %v1822 = vmax.f32 %v1758, 0.0
          %v1823 = vmax.f32 %v1759, 0.0
          %v1824 = vmax.f32 %v1760, 0.0
          %v1825 = vmax.f32 %v1761, 0.0
          %v1826 = vmax.f32 %v1762, 0.0
          %v1827 = vmax.f32 %v1763, 0.0
          %v1828 = vmax.f32 %v1764, 0.0
          %v1829 = vmax.f32 %v1765, 0.0
          %v1830 = vmax.f32 %v1766, 0.0
          %v1831 = vmax.f32 %v1767, 0.0
          %v1832 = vmax.f32 %v1768, 0.0
          %v1833 = vmax.f32 %v1769, 0.0
          %v1834 = vmax.f32 %v1770, 0.0
          %v1835 = vmax.f32 %v1771, 0.0
          %v1836 = vmax.f32 %v1772, 0.0
          %v1837 = vmax.f32 %v1773, 0.0
          %v1838 = vmax.f32 %v1774, 0.0
          %v1839 = vmax.f32 %v1775, 0.0
          %v1840 = vmax.f32 %v1776, 0.0
          %v1841 = vmax.f32 %v1777, 0.0
          %v1842 = vmax.f32 %v1778, 0.0
          %v1843 = vmax.f32 %v1779, 0.0
          %v1844 = vmax.f32 %v1780, 0.0
          %v1845 = vmax.f32 %v1781, 0.0
          %v1846 = vmax.f32 %v1782, 0.0
          %v1847 = vmax.f32 %v1783, 0.0
          %v1848 = vmax.f32 %v1784, 0.0
          %v1849 = vmax.f32 %v1785, 0.0
          %v1850 = vmax.f32 %v1786, 0.0
          %v1851 = vmax.f32 %v1787, 0.0
          %v1852 = vmax.f32 %v1788, 0.0
          %v1853 = vmax.f32 %v1789, 0.0
          %v1854 = vmax.f32 %v1790, 0.0
          %v1855 = vmax.f32 %v1791, 0.0
          %v1856 = vmax.f32 %v1792, 0.0
          %v1857 = vmax.f32 %v1793, 0.0
          %v1858 = vmax.f32 %v1794, 0.0
          %v1859 = vld [vmem:[%s3] sm:$0xff]
          %v1860 = vld [vmem:[%s3 + $0x8] sm:$0xff]
          %v1861 = vld [vmem:[%s3 + $0x10] sm:$0xff]
          %v1862 = vld [vmem:[%s3 + $0x18] sm:$0xff]
          %v1863 = vld [vmem:[%s3 + $0x20] sm:$0xff]
          %v1864 = vld [vmem:[%s3 + $0x28] sm:$0xff]
          %v1865 = vld [vmem:[%s3 + $0x30] sm:$0xff]
          %v1866 = vld [vmem:[%s3 + $0x38] sm:$0xff]
          %v1867 = vld [vmem:[%s3 + $0x40] sm:$0xff]
          %v1868 = vld [vmem:[%s3 + $0x48] sm:$0xff]
          %v1869 = vld [vmem:[%s3 + $0x50] sm:$0xff]
          %v1870 = vld [vmem:[%s3 + $0x58] sm:$0xff]
          %v1871 = vld [vmem:[%s3 + $0x60] sm:$0xff]
          %v1872 = vld [vmem:[%s3 + $0x68] sm:$0xff]
          %v1873 = vld [vmem:[%s3 + $0x70] sm:$0xff]
          %v1874 = vld [vmem:[%s3 + $0x78] sm:$0xff]
          %1875 = vmatprep.subr.mxu0 0.0
          %1876 = vmatpush1.msra.mxu0 %v1859
          %1877 = vmatprep.subr.mxu0 0.0
          %1878 = vmatpush1.msra.mxu0 %v1860
          %1879 = vmatprep.subr.mxu0 0.0
          %1880 = vmatpush1.msra.mxu0 %v1861
          %1881 = vmatprep.subr.mxu0 0.0
          %1882 = vmatpush1.msra.mxu0 %v1862
          %1883 = vmatprep.subr.mxu0 0.0
          %1884 = vmatpush1.msra.mxu0 %v1863
          %1885 = vmatprep.subr.mxu0 0.0
          %1886 = vmatpush1.msra.mxu0 %v1864
          %1887 = vmatprep.subr.mxu0 0.0
          %1888 = vmatpush1.msra.mxu0 %v1865
          %1889 = vmatprep.subr.mxu0 0.0
          %1890 = vmatpush1.msra.mxu0 %v1866
          %1891 = vmatprep.subr.mxu0 0.0
          %1892 = vmatpush1.msra.mxu0 %v1867
          %1893 = vmatprep.subr.mxu0 0.0
          %1894 = vmatpush1.msra.mxu0 %v1868
          %1895 = vmatprep.subr.mxu0 0.0
          %1896 = vmatpush1.msra.mxu0 %v1869
          %1897 = vmatprep.subr.mxu0 0.0
          %1898 = vmatpush1.msra.mxu0 %v1870
          %1899 = vmatprep.subr.mxu0 0.0
          %1900 = vmatpush1.msra.mxu0 %v1871
          %1901 = vmatprep.subr.mxu0 0.0
          %1902 = vmatpush1.msra.mxu0 %v1872
          %1903 = vmatprep.subr.mxu0 0.0
          %1904 = vmatpush1.msra.mxu0 %v1873
          %1905 = vmatprep.subr.mxu0 0.0
          %1906 = vmatpush1.msra.mxu0 %v1874
          %1907 = vmatprep.subr.mxu0 0.0
          %1908 = vmatpush1.msra.mxu0 0.0
          %1909 = vmatprep.subr.mxu0 0.0
          %1910 = vmatpush1.msra.mxu0 0.0
          %1911 = vmatprep.subr.mxu0 0.0
          %1912 = vmatpush1.msra.mxu0 0.0
          %1913 = vmatprep.subr.mxu0 0.0
          %1914 = vmatpush1.msra.mxu0 0.0
          %1915 = vmatprep.subr.mxu0 0.0
          %1916 = vmatpush1.msra.mxu0 0.0
          %1917 = vmatprep.subr.mxu0 0.0
          %1918 = vmatpush1.msra.mxu0 0.0
          %1919 = vmatprep.subr.mxu0 0.0
          %1920 = vmatpush1.msra.mxu0 0.0
          %1921 = vmatprep.subr.mxu0 0.0
          %1922 = vmatpush1.msra.mxu0 0.0
          %1923 = vmatprep.subr.mxu0 0.0
          %1924 = vmatpush1.msra.mxu0 0.0
          %1925 = vmatprep.subr.mxu0 0.0
          %1926 = vmatpush1.msra.mxu0 0.0
          %1927 = vmatprep.subr.mxu0 0.0
          %1928 = vmatpush1.msra.mxu0 0.0
          %1929 = vmatprep.subr.mxu0 0.0
          %1930 = vmatpush1.msra.mxu0 0.0
          %1931 = vmatprep.subr.mxu0 0.0
          %1932 = vmatpush1.msra.mxu0 0.0
          %1933 = vmatprep.subr.mxu0 0.0
          %1934 = vmatpush1.msra.mxu0 0.0
          %1935 = vmatprep.subr.mxu0 0.0
          %1936 = vmatpush1.msra.mxu0 0.0
          %1937 = vmatprep.subr.mxu0 0.0
          %1938 = vmatpush1.msra.mxu0 0.0
          %1939 = vmatprep.mubr.f32.mxu0 0.0
          %1940 = vmatmul.mubr.f32.gmra.mrb[0].mxu0 %v1795
          %v1941 = vpop.f32.mrb[0].mxu0
          %v1942 = vadd.f32 0.0, %v1941
          %v1943 = vpop.f32.mrb[0].mxu0
          %1944 = vmatprep.mubr.f32.mxu0 0.0
          %1945 = vmatmul.mubr.f32.gmra.mrb[0].mxu0 %v1796
          %v1946 = vpop.f32.mrb[0].mxu0
          %v1947 = vadd.f32 0.0, %v1946
          %v1948 = vpop.f32.mrb[0].mxu0
          %1949 = vmatprep.mubr.f32.mxu0 0.0
          %1950 = vmatmul.mubr.f32.gmra.mrb[0].mxu0 %v1797
          %v1951 = vpop.f32.mrb[0].mxu0
          %v1952 = vadd.f32 0.0, %v1951
          %v1953 = vpop.f32.mrb[0].mxu0
          %1954 = vmatprep.mubr.f32.mxu0 0.0
          %1955 = vmatmul.mubr.f32.gmra.mrb[0].mxu0 %v1798
          %v1956 = vpop.f32.mrb[0].mxu0
          %v1957 = vadd.f32 0.0, %v1956
          %v1958 = vpop.f32.mrb[0].mxu0
          %1959 = vmatprep.mubr.f32.mxu0 0.0
          %1960 = vmatmul.mubr.f32.gmra.mrb[0].mxu0 %v1799
          %v1961 = vpop.f32.mrb[0].mxu0
          %v1962 = vadd.f32 0.0, %v1961
          %v1963 = vpop.f32.mrb[0].mxu0
          %1964 = vmatprep.mubr.f32.mxu0 0.0
          %1965 = vmatmul.mubr.f32.gmra.mrb[0].mxu0 %v1800
          %v1966 = vpop.f32.mrb[0].mxu0
          %v1967 = vadd.f32 0.0, %v1966
          %v1968 = vpop.f32.mrb[0].mxu0
          %1969 = vmatprep.mubr.f32.mxu0 0.0
          %1970 = vmatmul.mubr.f32.gmra.mrb[0].mxu0 %v1801
          %v1971 = vpop.f32.mrb[0].mxu0
          %v1972 = vadd.f32 0.0, %v1971
          %v1973 = vpop.f32.mrb[0].mxu0
          %1974 = vmatprep.mubr.f32.mxu0 0.0
          %1975 = vmatmul.mubr.f32.gmra.mrb[0].mxu0 %v1802
          %v1976 = vpop.f32.mrb[0].mxu0
          %v1977 = vadd.f32 0.0, %v1976
          %v1978 = vpop.f32.mrb[0].mxu0
          %1979 = vmatprep.mubr.f32.mxu0 0.0
          %1980 = vmatmul.mubr.f32.gmra.mrb[0].mxu0 %v1803
          %v1981 = vpop.f32.mrb[0].mxu0
          %v1982 = vadd.f32 0.0, %v1981
          %v1983 = vpop.f32.mrb[0].mxu0
          %1984 = vmatprep.mubr.f32.mxu0 0.0
          %1985 = vmatmul.mubr.f32.gmra.mrb[0].mxu0 %v1804
          %v1986 = vpop.f32.mrb[0].mxu0
          %v1987 = vadd.f32 0.0, %v1986
          %v1988 = vpop.f32.mrb[0].mxu0
          %1989 = vmatprep.mubr.f32.mxu0 0.0
          %1990 = vmatmul.mubr.f32.gmra.mrb[0].mxu0 %v1805
          %v1991 = vpop.f32.mrb[0].mxu0
          %v1992 = vadd.f32 0.0, %v1991
          %v1993 = vpop.f32.mrb[0].mxu0
          %1994 = vmatprep.mubr.f32.mxu0 0.0
          %1995 = vmatmul.mubr.f32.gmra.mrb[0].mxu0 %v1806
          %v1996 = vpop.f32.mrb[0].mxu0
          %v1997 = vadd.f32 0.0, %v1996
          %v1998 = vpop.f32.mrb[0].mxu0
          %1999 = vmatprep.mubr.f32.mxu0 0.0
          %2000 = vmatmul.mubr.f32.gmra.mrb[0].mxu0 %v1807
          %v2001 = vpop.f32.mrb[0].mxu0
          %v2002 = vadd.f32 0.0, %v2001
          %v2003 = vpop.f32.mrb[0].mxu0
          %2004 = vmatprep.mubr.f32.mxu0 0.0
          %2005 = vmatmul.mubr.f32.gmra.mrb[0].mxu0 %v1808
          %v2006 = vpop.f32.mrb[0].mxu0
          %v2007 = vadd.f32 0.0, %v2006
          %v2008 = vpop.f32.mrb[0].mxu0
          %2009 = vmatprep.mubr.f32.mxu0 0.0
          %2010 = vmatmul.mubr.f32.gmra.mrb[0].mxu0 %v1809
          %v2011 = vpop.f32.mrb[0].mxu0
          %v2012 = vadd.f32 0.0, %v2011
          %v2013 = vpop.f32.mrb[0].mxu0
          %2014 = vmatprep.mubr.f32.mxu0 0.0
          %2015 = vmatmul.mubr.f32.gmra.mrb[0].mxu0 %v1810
          %v2016 = vpop.f32.mrb[0].mxu0
          %v2017 = vadd.f32 0.0, %v2016
          %v2018 = vpop.f32.mrb[0].mxu0
          %2019 = vmatprep.mubr.f32.mxu0 0.0
          %2020 = vmatmul.mubr.f32.gmra.mrb[0].mxu0 %v1811
          %v2021 = vpop.f32.mrb[0].mxu0
          %v2022 = vadd.f32 0.0, %v2021
          %v2023 = vpop.f32.mrb[0].mxu0
          %2024 = vmatprep.mubr.f32.mxu0 0.0
          %2025 = vmatmul.mubr.f32.gmra.mrb[0].mxu0 %v1812
          %v2026 = vpop.f32.mrb[0].mxu0
          %v2027 = vadd.f32 0.0, %v2026
          %v2028 = vpop.f32.mrb[0].mxu0
          %2029 = vmatprep.mubr.f32.mxu0 0.0
          %2030 = vmatmul.mubr.f32.gmra.mrb[0].mxu0 %v1813
          %v2031 = vpop.f32.mrb[0].mxu0
          %v2032 = vadd.f32 0.0, %v2031
          %v2033 = vpop.f32.mrb[0].mxu0
          %2034 = vmatprep.mubr.f32.mxu0 0.0
          %2035 = vmatmul.mubr.f32.gmra.mrb[0].mxu0 %v1814
          %v2036 = vpop.f32.mrb[0].mxu0
          %v2037 = vadd.f32 0.0, %v2036
          %v2038 = vpop.f32.mrb[0].mxu0
          %2039 = vmatprep.mubr.f32.mxu0 0.0
          %2040 = vmatmul.mubr.f32.gmra.mrb[0].mxu0 %v1815
          %v2041 = vpop.f32.mrb[0].mxu0
          %v2042 = vadd.f32 0.0, %v2041
          %v2043 = vpop.f32.mrb[0].mxu0
          %2044 = vmatprep.mubr.f32.mxu0 0.0
          %2045 = vmatmul.mubr.f32.gmra.mrb[0].mxu0 %v1816
          %v2046 = vpop.f32.mrb[0].mxu0
          %v2047 = vadd.f32 0.0, %v2046
          %v2048 = vpop.f32.mrb[0].mxu0
          %2049 = vmatprep.mubr.f32.mxu0 0.0
          %2050 = vmatmul.mubr.f32.gmra.mrb[0].mxu0 %v1817
          %v2051 = vpop.f32.mrb[0].mxu0
          %v2052 = vadd.f32 0.0, %v2051
          %v2053 = vpop.f32.mrb[0].mxu0
          %2054 = vmatprep.mubr.f32.mxu0 0.0
          %2055 = vmatmul.mubr.f32.gmra.mrb[0].mxu0 %v1818
          %v2056 = vpop.f32.mrb[0].mxu0
          %v2057 = vadd.f32 0.0, %v2056
          %v2058 = vpop.f32.mrb[0].mxu0
          %2059 = vmatprep.mubr.f32.mxu0 0.0
          %2060 = vmatmul.mubr.f32.gmra.mrb[0].mxu0 %v1819
          %v2061 = vpop.f32.mrb[0].mxu0
          %v2062 = vadd.f32 0.0, %v2061
          %v2063 = vpop.f32.mrb[0].mxu0
          %2064 = vmatprep.mubr.f32.mxu0 0.0
          %2065 = vmatmul.mubr.f32.gmra.mrb[0].mxu0 %v1820
          %v2066 = vpop.f32.mrb[0].mxu0
          %v2067 = vadd.f32 0.0, %v2066
          %v2068 = vpop.f32.mrb[0].mxu0
          %2069 = vmatprep.mubr.f32.mxu0 0.0
          %2070 = vmatmul.mubr.f32.gmra.mrb[0].mxu0 %v1821
          %v2071 = vpop.f32.mrb[0].mxu0
          %v2072 = vadd.f32 0.0, %v2071
          %v2073 = vpop.f32.mrb[0].mxu0
          %2074 = vmatprep.mubr.f32.mxu0 0.0
          %2075 = vmatmul.mubr.f32.gmra.mrb[0].mxu0 %v1822
          %v2076 = vpop.f32.mrb[0].mxu0
          %v2077 = vadd.f32 0.0, %v2076
          %v2078 = vpop.f32.mrb[0].mxu0
          %2079 = vmatprep.mubr.f32.mxu0 0.0
          %2080 = vmatmul.mubr.f32.gmra.mrb[0].mxu0 %v1823
          %v2081 = vpop.f32.mrb[0].mxu0
          %v2082 = vadd.f32 0.0, %v2081
          %v2083 = vpop.f32.mrb[0].mxu0
          %2084 = vmatprep.mubr.f32.mxu0 0.0
          %2085 = vmatmul.mubr.f32.gmra.mrb[0].mxu0 %v1824
          %v2086 = vpop.f32.mrb[0].mxu0
          %v2087 = vadd.f32 0.0, %v2086
          %v2088 = vpop.f32.mrb[0].mxu0
          %2089 = vmatprep.mubr.f32.mxu0 0.0
          %2090 = vmatmul.mubr.f32.gmra.mrb[0].mxu0 %v1825
          %v2091 = vpop.f32.mrb[0].mxu0
          %v2092 = vadd.f32 0.0, %v2091
          %v2093 = vpop.f32.mrb[0].mxu0
          %2094 = vmatprep.mubr.f32.mxu0 0.0
          %2095 = vmatmul.mubr.f32.gmra.mrb[0].mxu0 %v1826
          %v2096 = vpop.f32.mrb[0].mxu0
          %v2097 = vadd.f32 0.0, %v2096
          %v2098 = vpop.f32.mrb[0].mxu0
          %2099 = vmatprep.mubr.f32.mxu0 0.0
          %2100 = vmatmul.mubr.f32.gmra.mrb[0].mxu0 %v1827
          %v2101 = vpop.f32.mrb[0].mxu0
          %v2102 = vadd.f32 0.0, %v2101
          %v2103 = vpop.f32.mrb[0].mxu0
          %2104 = vmatprep.mubr.f32.mxu0 0.0
          %2105 = vmatmul.mubr.f32.gmra.mrb[0].mxu0 %v1828
          %v2106 = vpop.f32.mrb[0].mxu0
          %v2107 = vadd.f32 0.0, %v2106
          %v2108 = vpop.f32.mrb[0].mxu0
          %2109 = vmatprep.mubr.f32.mxu0 0.0
          %2110 = vmatmul.mubr.f32.gmra.mrb[0].mxu0 %v1829
          %v2111 = vpop.f32.mrb[0].mxu0
          %v2112 = vadd.f32 0.0, %v2111
          %v2113 = vpop.f32.mrb[0].mxu0
          %2114 = vmatprep.mubr.f32.mxu0 0.0
          %2115 = vmatmul.mubr.f32.gmra.mrb[0].mxu0 %v1830
          %v2116 = vpop.f32.mrb[0].mxu0
          %v2117 = vadd.f32 0.0, %v2116
          %v2118 = vpop.f32.mrb[0].mxu0
          %2119 = vmatprep.mubr.f32.mxu0 0.0
          %2120 = vmatmul.mubr.f32.gmra.mrb[0].mxu0 %v1831
          %v2121 = vpop.f32.mrb[0].mxu0
          %v2122 = vadd.f32 0.0, %v2121
          %v2123 = vpop.f32.mrb[0].mxu0
          %2124 = vmatprep.mubr.f32.mxu0 0.0
          %2125 = vmatmul.mubr.f32.gmra.mrb[0].mxu0 %v1832
          %v2126 = vpop.f32.mrb[0].mxu0
          %v2127 = vadd.f32 0.0, %v2126
          %v2128 = vpop.f32.mrb[0].mxu0
          %2129 = vmatprep.mubr.f32.mxu0 0.0
          %2130 = vmatmul.mubr.f32.gmra.mrb[0].mxu0 %v1833
          %v2131 = vpop.f32.mrb[0].mxu0
          %v2132 = vadd.f32 0.0, %v2131
          %v2133 = vpop.f32.mrb[0].mxu0
          %2134 = vmatprep.mubr.f32.mxu0 0.0
          %2135 = vmatmul.mubr.f32.gmra.mrb[0].mxu0 %v1834
          %v2136 = vpop.f32.mrb[0].mxu0
          %v2137 = vadd.f32 0.0, %v2136
          %v2138 = vpop.f32.mrb[0].mxu0
          %2139 = vmatprep.mubr.f32.mxu0 0.0
          %2140 = vmatmul.mubr.f32.gmra.mrb[0].mxu0 %v1835
          %v2141 = vpop.f32.mrb[0].mxu0
          %v2142 = vadd.f32 0.0, %v2141
          %v2143 = vpop.f32.mrb[0].mxu0
          %2144 = vmatprep.mubr.f32.mxu0 0.0
          %2145 = vmatmul.mubr.f32.gmra.mrb[0].mxu0 %v1836
          %v2146 = vpop.f32.mrb[0].mxu0
          %v2147 = vadd.f32 0.0, %v2146
          %v2148 = vpop.f32.mrb[0].mxu0
          %2149 = vmatprep.mubr.f32.mxu0 0.0
          %2150 = vmatmul.mubr.f32.gmra.mrb[0].mxu0 %v1837
          %v2151 = vpop.f32.mrb[0].mxu0
          %v2152 = vadd.f32 0.0, %v2151
          %v2153 = vpop.f32.mrb[0].mxu0
          %2154 = vmatprep.mubr.f32.mxu0 0.0
          %2155 = vmatmul.mubr.f32.gmra.mrb[0].mxu0 %v1838
          %v2156 = vpop.f32.mrb[0].mxu0
          %v2157 = vadd.f32 0.0, %v2156
          %v2158 = vpop.f32.mrb[0].mxu0
          %2159 = vmatprep.mubr.f32.mxu0 0.0
          %2160 = vmatmul.mubr.f32.gmra.mrb[0].mxu0 %v1839
          %v2161 = vpop.f32.mrb[0].mxu0
          %v2162 = vadd.f32 0.0, %v2161
          %v2163 = vpop.f32.mrb[0].mxu0
          %2164 = vmatprep.mubr.f32.mxu0 0.0
          %2165 = vmatmul.mubr.f32.gmra.mrb[0].mxu0 %v1840
          %v2166 = vpop.f32.mrb[0].mxu0
          %v2167 = vadd.f32 0.0, %v2166
          %v2168 = vpop.f32.mrb[0].mxu0
          %2169 = vmatprep.mubr.f32.mxu0 0.0
          %2170 = vmatmul.mubr.f32.gmra.mrb[0].mxu0 %v1841
          %v2171 = vpop.f32.mrb[0].mxu0
          %v2172 = vadd.f32 0.0, %v2171
          %v2173 = vpop.f32.mrb[0].mxu0
          %2174 = vmatprep.mubr.f32.mxu0 0.0
          %2175 = vmatmul.mubr.f32.gmra.mrb[0].mxu0 %v1842
          %v2176 = vpop.f32.mrb[0].mxu0
          %v2177 = vadd.f32 0.0, %v2176
          %v2178 = vpop.f32.mrb[0].mxu0
          %2179 = vmatprep.mubr.f32.mxu0 0.0
          %2180 = vmatmul.mubr.f32.gmra.mrb[0].mxu0 %v1843
          %v2181 = vpop.f32.mrb[0].mxu0
          %v2182 = vadd.f32 0.0, %v2181
          %v2183 = vpop.f32.mrb[0].mxu0
          %2184 = vmatprep.mubr.f32.mxu0 0.0
          %2185 = vmatmul.mubr.f32.gmra.mrb[0].mxu0 %v1844
          %v2186 = vpop.f32.mrb[0].mxu0
          %v2187 = vadd.f32 0.0, %v2186
          %v2188 = vpop.f32.mrb[0].mxu0
          %2189 = vmatprep.mubr.f32.mxu0 0.0
          %2190 = vmatmul.mubr.f32.gmra.mrb[0].mxu0 %v1845
          %v2191 = vpop.f32.mrb[0].mxu0
          %v2192 = vadd.f32 0.0, %v2191
          %v2193 = vpop.f32.mrb[0].mxu0
          %2194 = vmatprep.mubr.f32.mxu0 0.0
          %2195 = vmatmul.mubr.f32.gmra.mrb[0].mxu0 %v1846
          %v2196 = vpop.f32.mrb[0].mxu0
          %v2197 = vadd.f32 0.0, %v2196
          %v2198 = vpop.f32.mrb[0].mxu0
          %2199 = vmatprep.mubr.f32.mxu0 0.0
          %2200 = vmatmul.mubr.f32.gmra.mrb[0].mxu0 %v1847
          %v2201 = vpop.f32.mrb[0].mxu0
          %v2202 = vadd.f32 0.0, %v2201
          %v2203 = vpop.f32.mrb[0].mxu0
          %2204 = vmatprep.mubr.f32.mxu0 0.0
          %2205 = vmatmul.mubr.f32.gmra.mrb[0].mxu0 %v1848
          %v2206 = vpop.f32.mrb[0].mxu0
          %v2207 = vadd.f32 0.0, %v2206
          %v2208 = vpop.f32.mrb[0].mxu0
          %2209 = vmatprep.mubr.f32.mxu0 0.0
          %2210 = vmatmul.mubr.f32.gmra.mrb[0].mxu0 %v1849
          %v2211 = vpop.f32.mrb[0].mxu0
          %v2212 = vadd.f32 0.0, %v2211
          %v2213 = vpop.f32.mrb[0].mxu0
          %2214 = vmatprep.mubr.f32.mxu0 0.0
          %2215 = vmatmul.mubr.f32.gmra.mrb[0].mxu0 %v1850
          %v2216 = vpop.f32.mrb[0].mxu0
          %v2217 = vadd.f32 0.0, %v2216
          %v2218 = vpop.f32.mrb[0].mxu0
          %2219 = vmatprep.mubr.f32.mxu0 0.0
          %2220 = vmatmul.mubr.f32.gmra.mrb[0].mxu0 %v1851
          %v2221 = vpop.f32.mrb[0].mxu0
          %v2222 = vadd.f32 0.0, %v2221
          %v2223 = vpop.f32.mrb[0].mxu0
          %2224 = vmatprep.mubr.f32.mxu0 0.0
          %2225 = vmatmul.mubr.f32.gmra.mrb[0].mxu0 %v1852
          %v2226 = vpop.f32.mrb[0].mxu0
          %v2227 = vadd.f32 0.0, %v2226
          %v2228 = vpop.f32.mrb[0].mxu0
          %2229 = vmatprep.mubr.f32.mxu0 0.0
          %2230 = vmatmul.mubr.f32.gmra.mrb[0].mxu0 %v1853
          %v2231 = vpop.f32.mrb[0].mxu0
          %v2232 = vadd.f32 0.0, %v2231
          %v2233 = vpop.f32.mrb[0].mxu0
          %2234 = vmatprep.mubr.f32.mxu0 0.0
          %2235 = vmatmul.mubr.f32.gmra.mrb[0].mxu0 %v1854
          %v2236 = vpop.f32.mrb[0].mxu0
          %v2237 = vadd.f32 0.0, %v2236
          %v2238 = vpop.f32.mrb[0].mxu0
          %2239 = vmatprep.mubr.f32.mxu0 0.0
          %2240 = vmatmul.mubr.f32.gmra.mrb[0].mxu0 %v1855
          %v2241 = vpop.f32.mrb[0].mxu0
          %v2242 = vadd.f32 0.0, %v2241
          %v2243 = vpop.f32.mrb[0].mxu0
          %2244 = vmatprep.mubr.f32.mxu0 0.0
          %2245 = vmatmul.mubr.f32.gmra.mrb[0].mxu0 %v1856
          %v2246 = vpop.f32.mrb[0].mxu0
          %v2247 = vadd.f32 0.0, %v2246
          %v2248 = vpop.f32.mrb[0].mxu0
          %2249 = vmatprep.mubr.f32.mxu0 0.0
          %2250 = vmatmul.mubr.f32.gmra.mrb[0].mxu0 %v1857
          %v2251 = vpop.f32.mrb[0].mxu0
          %v2252 = vadd.f32 0.0, %v2251
          %v2253 = vpop.f32.mrb[0].mxu0
          %2254 = vmatprep.mubr.f32.mxu0 0.0
          %2255 = vmatmul.mubr.f32.gmra.mrb[0].mxu0 %v1858
          %v2256 = vpop.f32.mrb[0].mxu0
          %v2257 = vadd.f32 0.0, %v2256
          %v2258 = vpop.f32.mrb[0].mxu0
          %2259 = vdwg.mxu0
          %v2260 = vpack.c.bf16 %v1947, %v1942
          %v2261 = vpack.c.bf16 %v1957, %v1952
          %v2262 = vpack.c.bf16 %v1967, %v1962
          %v2263 = vpack.c.bf16 %v1977, %v1972
          %v2264 = vpack.c.bf16 %v1987, %v1982
          %v2265 = vpack.c.bf16 %v1997, %v1992
          %v2266 = vpack.c.bf16 %v2007, %v2002
          %v2267 = vpack.c.bf16 %v2017, %v2012
          %v2268 = vpack.c.bf16 %v2027, %v2022
          %v2269 = vpack.c.bf16 %v2037, %v2032
          %v2270 = vpack.c.bf16 %v2047, %v2042
          %v2271 = vpack.c.bf16 %v2057, %v2052
          %v2272 = vpack.c.bf16 %v2067, %v2062
          %v2273 = vpack.c.bf16 %v2077, %v2072
          %v2274 = vpack.c.bf16 %v2087, %v2082
          %v2275 = vpack.c.bf16 %v2097, %v2092
          %v2276 = vpack.c.bf16 %v2107, %v2102
          %v2277 = vpack.c.bf16 %v2117, %v2112
          %v2278 = vpack.c.bf16 %v2127, %v2122
          %v2279 = vpack.c.bf16 %v2137, %v2132
          %v2280 = vpack.c.bf16 %v2147, %v2142
          %v2281 = vpack.c.bf16 %v2157, %v2152
          %v2282 = vpack.c.bf16 %v2167, %v2162
          %v2283 = vpack.c.bf16 %v2177, %v2172
          %v2284 = vpack.c.bf16 %v2187, %v2182
          %v2285 = vpack.c.bf16 %v2197, %v2192
          %v2286 = vpack.c.bf16 %v2207, %v2202
          %v2287 = vpack.c.bf16 %v2217, %v2212
          %v2288 = vpack.c.bf16 %v2227, %v2222
          %v2289 = vpack.c.bf16 %v2237, %v2232
          %v2290 = vpack.c.bf16 %v2247, %v2242
          %v2291 = vpack.c.bf16 %v2257, %v2252
          %v2324 = vunpack.c.l.b16 %v2260
          %v2325 = vunpack.c.h.b16 %v2260
          %v2326 = vunpack.c.l.b16 %v2261
          %v2327 = vunpack.c.h.b16 %v2261
          %v2328 = vunpack.c.l.b16 %v2262
          %v2329 = vunpack.c.h.b16 %v2262
          %v2330 = vunpack.c.l.b16 %v2263
          %v2331 = vunpack.c.h.b16 %v2263
          %v2332 = vunpack.c.l.b16 %v2264
          %v2333 = vunpack.c.h.b16 %v2264
          %v2334 = vunpack.c.l.b16 %v2265
          %v2335 = vunpack.c.h.b16 %v2265
          %v2336 = vunpack.c.l.b16 %v2266
          %v2337 = vunpack.c.h.b16 %v2266
          %v2338 = vunpack.c.l.b16 %v2267
          %v2339 = vunpack.c.h.b16 %v2267
          %v2340 = vunpack.c.l.b16 %v2268
          %v2341 = vunpack.c.h.b16 %v2268
          %v2342 = vunpack.c.l.b16 %v2269
          %v2343 = vunpack.c.h.b16 %v2269
          %v2344 = vunpack.c.l.b16 %v2270
          %v2345 = vunpack.c.h.b16 %v2270
          %v2346 = vunpack.c.l.b16 %v2271
          %v2347 = vunpack.c.h.b16 %v2271
          %v2348 = vunpack.c.l.b16 %v2272
          %v2349 = vunpack.c.h.b16 %v2272
          %v2350 = vunpack.c.l.b16 %v2273
          %v2351 = vunpack.c.h.b16 %v2273
          %v2352 = vunpack.c.l.b16 %v2274
          %v2353 = vunpack.c.h.b16 %v2274
          %v2354 = vunpack.c.l.b16 %v2275
          %v2355 = vunpack.c.h.b16 %v2275
          %v2356 = vunpack.c.l.b16 %v2276
          %v2357 = vunpack.c.h.b16 %v2276
          %v2358 = vunpack.c.l.b16 %v2277
          %v2359 = vunpack.c.h.b16 %v2277
          %v2360 = vunpack.c.l.b16 %v2278
          %v2361 = vunpack.c.h.b16 %v2278
          %v2362 = vunpack.c.l.b16 %v2279
          %v2363 = vunpack.c.h.b16 %v2279
          %v2364 = vunpack.c.l.b16 %v2280
          %v2365 = vunpack.c.h.b16 %v2280
          %v2366 = vunpack.c.l.b16 %v2281
          %v2367 = vunpack.c.h.b16 %v2281
          %v2368 = vunpack.c.l.b16 %v2282
          %v2369 = vunpack.c.h.b16 %v2282
          %v2370 = vunpack.c.l.b16 %v2283
          %v2371 = vunpack.c.h.b16 %v2283
          %v2372 = vunpack.c.l.b16 %v2284
          %v2373 = vunpack.c.h.b16 %v2284
          %v2374 = vunpack.c.l.b16 %v2285
          %v2375 = vunpack.c.h.b16 %v2285
          %v2376 = vunpack.c.l.b16 %v2286
          %v2377 = vunpack.c.h.b16 %v2286
          %v2378 = vunpack.c.l.b16 %v2287
          %v2379 = vunpack.c.h.b16 %v2287
          %v2380 = vunpack.c.l.b16 %v2288
          %v2381 = vunpack.c.h.b16 %v2288
          %v2382 = vunpack.c.l.b16 %v2289
          %v2383 = vunpack.c.h.b16 %v2289
          %v2384 = vunpack.c.l.b16 %v2290
          %v2385 = vunpack.c.h.b16 %v2290
          %v2386 = vunpack.c.l.b16 %v2291
          %v2387 = vunpack.c.h.b16 %v2291
          %v2388 = vpack.c.b16 %v2324, %v2324
          %v2389 = vpack.c.b16 %v2325, %v2325
          %v2390 = vpack.c.b16 %v2326, %v2326
          %v2391 = vpack.c.b16 %v2327, %v2327
          %v2392 = vpack.c.b16 %v2328, %v2328
          %v2393 = vpack.c.b16 %v2329, %v2329
          %v2394 = vpack.c.b16 %v2330, %v2330
          %v2395 = vpack.c.b16 %v2331, %v2331
          %v2396 = vpack.c.b16 %v2332, %v2332
          %v2397 = vpack.c.b16 %v2333, %v2333
          %v2398 = vpack.c.b16 %v2334, %v2334
          %v2399 = vpack.c.b16 %v2335, %v2335
          %v2400 = vpack.c.b16 %v2336, %v2336
          %v2401 = vpack.c.b16 %v2337, %v2337
          %v2402 = vpack.c.b16 %v2338, %v2338
          %v2403 = vpack.c.b16 %v2339, %v2339
          %v2404 = vpack.c.b16 %v2340, %v2340
          %v2405 = vpack.c.b16 %v2341, %v2341
          %v2406 = vpack.c.b16 %v2342, %v2342
          %v2407 = vpack.c.b16 %v2343, %v2343
          %v2408 = vpack.c.b16 %v2344, %v2344
          %v2409 = vpack.c.b16 %v2345, %v2345
          %v2410 = vpack.c.b16 %v2346, %v2346
          %v2411 = vpack.c.b16 %v2347, %v2347
          %v2412 = vpack.c.b16 %v2348, %v2348
          %v2413 = vpack.c.b16 %v2349, %v2349
          %v2414 = vpack.c.b16 %v2350, %v2350
          %v2415 = vpack.c.b16 %v2351, %v2351
          %v2416 = vpack.c.b16 %v2352, %v2352
          %v2417 = vpack.c.b16 %v2353, %v2353
          %v2418 = vpack.c.b16 %v2354, %v2354
          %v2419 = vpack.c.b16 %v2355, %v2355
          %v2420 = vpack.c.b16 %v2356, %v2356
          %v2421 = vpack.c.b16 %v2357, %v2357
          %v2422 = vpack.c.b16 %v2358, %v2358
          %v2423 = vpack.c.b16 %v2359, %v2359
          %v2424 = vpack.c.b16 %v2360, %v2360
          %v2425 = vpack.c.b16 %v2361, %v2361
          %v2426 = vpack.c.b16 %v2362, %v2362
          %v2427 = vpack.c.b16 %v2363, %v2363
          %v2428 = vpack.c.b16 %v2364, %v2364
          %v2429 = vpack.c.b16 %v2365, %v2365
          %v2430 = vpack.c.b16 %v2366, %v2366
          %v2431 = vpack.c.b16 %v2367, %v2367
          %v2432 = vpack.c.b16 %v2368, %v2368
          %v2433 = vpack.c.b16 %v2369, %v2369
          %v2434 = vpack.c.b16 %v2370, %v2370
          %v2435 = vpack.c.b16 %v2371, %v2371
          %v2436 = vpack.c.b16 %v2372, %v2372
          %v2437 = vpack.c.b16 %v2373, %v2373
          %v2438 = vpack.c.b16 %v2374, %v2374
          %v2439 = vpack.c.b16 %v2375, %v2375
          %v2440 = vpack.c.b16 %v2376, %v2376
          %v2441 = vpack.c.b16 %v2377, %v2377
          %v2442 = vpack.c.b16 %v2378, %v2378
          %v2443 = vpack.c.b16 %v2379, %v2379
          %v2444 = vpack.c.b16 %v2380, %v2380
          %v2445 = vpack.c.b16 %v2381, %v2381
          %v2446 = vpack.c.b16 %v2382, %v2382
          %v2447 = vpack.c.b16 %v2383, %v2383
          %v2448 = vpack.c.b16 %v2384, %v2384
          %v2449 = vpack.c.b16 %v2385, %v2385
          %v2450 = vpack.c.b16 %v2386, %v2386
          %v2451 = vpack.c.b16 %v2387, %v2387
          %2516 = vst [vmem:[%s362] sm:$0xf] %v2388
          %2517 = vst [vmem:[%s362 + $0x4] sm:$0xf] %v2389
          %2518 = vst [vmem:[%s362 + $0x8] sm:$0xf] %v2390
          %2519 = vst [vmem:[%s362 + $0xc] sm:$0xf] %v2391
          %2520 = vst [vmem:[%s362 + $0x10] sm:$0xf] %v2392
          %2521 = vst [vmem:[%s362 + $0x14] sm:$0xf] %v2393
          %2522 = vst [vmem:[%s362 + $0x18] sm:$0xf] %v2394
          %2523 = vst [vmem:[%s362 + $0x1c] sm:$0xf] %v2395
          %2524 = vst [vmem:[%s362 + $0x20] sm:$0xf] %v2396
          %2525 = vst [vmem:[%s362 + $0x24] sm:$0xf] %v2397
          %2526 = vst [vmem:[%s362 + $0x28] sm:$0xf] %v2398
          %2527 = vst [vmem:[%s362 + $0x2c] sm:$0xf] %v2399
          %2528 = vst [vmem:[%s362 + $0x30] sm:$0xf] %v2400
          %2529 = vst [vmem:[%s362 + $0x34] sm:$0xf] %v2401
          %2530 = vst [vmem:[%s362 + $0x38] sm:$0xf] %v2402
          %2531 = vst [vmem:[%s362 + $0x3c] sm:$0xf] %v2403
          %2532 = vst [vmem:[%s362 + $0x40] sm:$0xf] %v2404
          %2533 = vst [vmem:[%s362 + $0x44] sm:$0xf] %v2405
          %2534 = vst [vmem:[%s362 + $0x48] sm:$0xf] %v2406
          %2535 = vst [vmem:[%s362 + $0x4c] sm:$0xf] %v2407
          %2536 = vst [vmem:[%s362 + $0x50] sm:$0xf] %v2408
          %2537 = vst [vmem:[%s362 + $0x54] sm:$0xf] %v2409
          %2538 = vst [vmem:[%s362 + $0x58] sm:$0xf] %v2410
          %2539 = vst [vmem:[%s362 + $0x5c] sm:$0xf] %v2411
          %2540 = vst [vmem:[%s362 + $0x60] sm:$0xf] %v2412
          %2541 = vst [vmem:[%s362 + $0x64] sm:$0xf] %v2413
          %2542 = vst [vmem:[%s362 + $0x68] sm:$0xf] %v2414
          %2543 = vst [vmem:[%s362 + $0x6c] sm:$0xf] %v2415
          %2544 = vst [vmem:[%s362 + $0x70] sm:$0xf] %v2416
          %2545 = vst [vmem:[%s362 + $0x74] sm:$0xf] %v2417
          %2546 = vst [vmem:[%s362 + $0x78] sm:$0xf] %v2418
          %2547 = vst [vmem:[%s362 + $0x7c] sm:$0xf] %v2419
          %2548 = vst [vmem:[%s362 + $0x80] sm:$0xf] %v2420
          %2549 = vst [vmem:[%s362 + $0x84] sm:$0xf] %v2421
          %2550 = vst [vmem:[%s362 + $0x88] sm:$0xf] %v2422
          %2551 = vst [vmem:[%s362 + $0x8c] sm:$0xf] %v2423
          %2552 = vst [vmem:[%s362 + $0x90] sm:$0xf] %v2424
          %2553 = vst [vmem:[%s362 + $0x94] sm:$0xf] %v2425
          %2554 = vst [vmem:[%s362 + $0x98] sm:$0xf] %v2426
          %2555 = vst [vmem:[%s362 + $0x9c] sm:$0xf] %v2427
          %2556 = vst [vmem:[%s362 + $0xa0] sm:$0xf] %v2428
          %2557 = vst [vmem:[%s362 + $0xa4] sm:$0xf] %v2429
          %2558 = vst [vmem:[%s362 + $0xa8] sm:$0xf] %v2430
          %2559 = vst [vmem:[%s362 + $0xac] sm:$0xf] %v2431
          %2560 = vst [vmem:[%s362 + $0xb0] sm:$0xf] %v2432
          %2561 = vst [vmem:[%s362 + $0xb4] sm:$0xf] %v2433
          %2562 = vst [vmem:[%s362 + $0xb8] sm:$0xf] %v2434
          %2563 = vst [vmem:[%s362 + $0xbc] sm:$0xf] %v2435
          %2564 = vst [vmem:[%s362 + $0xc0] sm:$0xf] %v2436
          %2565 = vst [vmem:[%s362 + $0xc4] sm:$0xf] %v2437
          %2566 = vst [vmem:[%s362 + $0xc8] sm:$0xf] %v2438
          %2567 = vst [vmem:[%s362 + $0xcc] sm:$0xf] %v2439
          %2568 = vst [vmem:[%s362 + $0xd0] sm:$0xf] %v2440
          %2569 = vst [vmem:[%s362 + $0xd4] sm:$0xf] %v2441
          %2570 = vst [vmem:[%s362 + $0xd8] sm:$0xf] %v2442
          %2571 = vst [vmem:[%s362 + $0xdc] sm:$0xf] %v2443
          %2572 = vst [vmem:[%s362 + $0xe0] sm:$0xf] %v2444
          %2573 = vst [vmem:[%s362 + $0xe4] sm:$0xf] %v2445
          %2574 = vst [vmem:[%s362 + $0xe8] sm:$0xf] %v2446
          %2575 = vst [vmem:[%s362 + $0xec] sm:$0xf] %v2447
          %2576 = vst [vmem:[%s362 + $0xf0] sm:$0xf] %v2448
          %2577 = vst [vmem:[%s362 + $0xf4] sm:$0xf] %v2449
          %2578 = vst [vmem:[%s362 + $0xf8] sm:$0xf] %v2450
          %2579 = vst [vmem:[%s362 + $0xfc] sm:$0xf] %v2451
        $region67: #{gcn_forward.2} parent=54 // pred_fallthru
          _
        %s2580 = smul.u32 64, %s19
        %p2581 = scmp.lt.s32.totalorder %s2580, 127
        %s2582 = scalar_select %p2581, %s2580, 127
        %s2583 = smul.addr %s2582, 4
        %s2584 = scalar_lea.vmem %s4, %s2583
        // Predicated region
        $region68: #{gcn_forward.2} parent=54 // pred_check
          %p2585 = pneg %p136
        $region69: #{gcn_forward.2} parent=54 // pred_check_branch
          %2587 = sbr.rel (%p2585) target = $region71
        $region70: #{gcn_forward.2} parent=54 // pred_region
          %s2588 = smul.u32 64, %s19
        $region71: #{gcn_forward.2} parent=54 // pred_fallthru
          _
      $region55: #{gcn_forward.2} parent=5 // pred_fallthru
        _
      %p2589 = scmp.le.s32.totalorder 2, %s10
      // Predicated region
      $region72: #{gcn_forward.2} parent=5 // pred_check
        %p2590 = pneg %p2589
      $region73: #{gcn_forward.2} parent=5 // pred_check_branch
        %2592 = sbr.rel (%p2590) target = $region75
      $region74: #{gcn_forward.2} parent=5 // pred_region
        %s2593 = ssub.s32 %s10, 2
        // Predicated region
        $region76: #{gcn_forward.2} parent=74 // pred_check
          %p2594 = pneg %p142
        $region77: #{gcn_forward.2} parent=74 // pred_check_branch
          %2596 = sbr.rel (%p2594) target = $region79
        $region78: #{gcn_forward.2} parent=74 // pred_region
          %s2597 = smul.u32 64, %s21
          %p2598 = scmp.lt.s32.totalorder %s2597, 127
          %s2599 = scalar_select %p2598, %s2597, 127
          %s2600 = smul.addr %s2599, 4
          %s2601 = scalar_lea.vmem %s4, %s2600
        $region79: #{gcn_forward.2} parent=74 // pred_fallthru
          _
      $region75: #{gcn_forward.2} parent=5 // pred_fallthru
        _
    $region6: #{gcn_forward.2} parent=1 // loop_footer
      %s14 = sadd.s32 1, %s10
    $region7: #{gcn_forward.2} parent=1 // loop_footer_branch
      %9 = sbr.rel target = $region3
    $region8: #{gcn_forward.2} parent=1 // loop_exit
      _

</llo_original>
